<compile_context>
chip_gen: v5e
topology: v5e:2x2
jax: 0.10.0
libtpu: 0.0.40
codegen_flags: <defaults>
</compile_context>

<pallas_src>
import functools

import jax
import jax.numpy as jnp
from jax import lax
from jax.experimental import pallas as pl
from jax.experimental.pallas import tpu as pltpu


# Set to jnp.bfloat16 on v6e/v7x for higher MXU throughput and half-width tap
# vregs (f32 accumulation is kept via preferred_element_type).  Default f32
# keeps parity with the f32 torch reference and is right for v5e (no bf16 VPU).
_MXU_DTYPE = jnp.float32


# ---------------------------------------------------------------------------
# In-kernel helpers
# ---------------------------------------------------------------------------
def _make_boundary_masks(H, W, L):
    """Per-lane validity masks for the 3x3 'same' padding.

    Lane o holds image n = o // (H*W), offset off = o % (H*W), col = o % W.
    Built once per kernel invocation and shared by every conv in the kernel.
    """
    o = lax.broadcasted_iota(jnp.int32, (1, L), 1)
    off = o % (H * W)
    col = o % W
    return {
        "not_row0": off >= W,            # valid source for ky == 0 taps
        "not_rowL": off < (H * W - W),   # valid source for ky == 2 taps
        "not_col0": col != 0,            # valid source for kx == 0 taps
        "not_colL": col != (W - 1),      # valid source for kx == 2 taps
    }


def _lane_shift(x, s, L):
    """Return t with t[:, o] = x[:, o + s] (wrapped lanes are masked by caller)."""
    if s == 0:
        return x
    if L % 128 == 0:
        # XLU lane rotation (jnp.roll semantics): out[i] = in[(i - shift) % L],
        # so shift = -s gives out[o] = in[o + s].
        return pltpu.roll(x, shift=(-s) % L, axis=1)
    # Fallback for lane counts not a multiple of 128 (tiny demo deepest level).
    Cin = x.shape[0]
    if s > 0:
        return jnp.concatenate([x[:, s:], jnp.zeros((Cin, s), x.dtype)], axis=1)
    return jnp.concatenate([jnp.zeros((Cin, -s), x.dtype), x[:, :L + s]], axis=1)


def _conv2d_core(x, w, b, alpha, masks, *, K, W, apply_prelu):
    """x: (Cin, L) f32.  w: (Cout, K*K*Cin).  b: (Cout, 1).  alpha: scalar.

    Returns (Cout, L) f32 = "same"-padded KxK conv + bias (+ PReLU), with L the
    batch-concatenated flattened spatial axis.
    """
    Cin, L = x.shape
    if K == 1:
        patches = x
    else:  # K == 3, pad = 1
        taps = []
        for ky in range(3):
            for kx in range(3):
                s = (ky - 1) * W + (kx - 1)
                t = _lane_shift(x, s, L)
                m = None
                if ky == 0:
                    m = masks["not_row0"]
                elif ky == 2:
                    m = masks["not_rowL"]
                if kx == 0:
                    cm = masks["not_col0"]
                    m = cm if m is None else jnp.logical_and(m, cm)
                elif kx == 2:
                    cm = masks["not_colL"]
                    m = cm if m is None else jnp.logical_and(m, cm)
                if m is not None:
                    t = jnp.where(m, t, 0.0)
                taps.append(t)
        patches = jnp.concatenate(taps, axis=0)          # (9*Cin, L)

    acc = jnp.dot(w.astype(_MXU_DTYPE), patches.astype(_MXU_DTYPE),
                  preferred_element_type=jnp.float32)     # (Cout, L) lane-dense
    acc = acc + b                                         # (Cout, 1) lane broadcast
    if apply_prelu:
        acc = jnp.where(acc >= 0.0, acc, alpha * acc)
    return acc


# ---------------------------------------------------------------------------
# Pallas kernels
# ---------------------------------------------------------------------------
def _conv_kernel(*refs, K, H, W, apply_prelu, res_mode):
    # res_mode: "none" | "self" (residual == conv input) | "ext" (extra input)
    if res_mode == "ext":
        x_ref, w_ref, b_ref, a_ref, res_ref, o_ref = refs
    else:
        x_ref, w_ref, b_ref, a_ref, o_ref = refs
    x = x_ref[...].astype(jnp.float32)                    # (Cin, L)
    L = x.shape[1]
    masks = _make_boundary_masks(H, W, L) if K == 3 else None
    y = _conv2d_core(x, w_ref[...], b_ref[...], a_ref[0], masks,
                     K=K, W=W, apply_prelu=apply_prelu)
    if res_mode == "self":
        y = y + x                                          # fused residual add
    elif res_mode == "ext":
        y = y + res_ref[...].astype(jnp.float32)           # fused residual add
    o_ref[...] = y.astype(o_ref.dtype)


def _double_conv_kernel(x_ref, w1_ref, b1_ref, a1_ref, w2_ref, b2_ref, a2_ref,
                        o_ref, *, H, W):
    # conv3x3+PReLU -> conv3x3+PReLU -> + input (residual), one launch.
    x = x_ref[...].astype(jnp.float32)
    L = x.shape[1]
    masks = _make_boundary_masks(H, W, L)                  # shared by both convs
    t = _conv2d_core(x, w1_ref[...], b1_ref[...], a1_ref[0], masks,
                     K=3, W=W, apply_prelu=True)
    y = _conv2d_core(t, w2_ref[...], b2_ref[...], a2_ref[0], masks,
                     K=3, W=W, apply_prelu=True)
    o_ref[...] = (y + x).astype(o_ref.dtype)


def _conv1x1_cat_kernel(x1_ref, x2_ref, wa_ref, wb_ref, b_ref, o_ref):
    # 1x1 conv over the (virtual) channel-concat [x1; x2], no materialized cat.
    y = jnp.dot(wa_ref[...].astype(_MXU_DTYPE), x1_ref[...].astype(_MXU_DTYPE),
                preferred_element_type=jnp.float32)
    y = y + jnp.dot(wb_ref[...].astype(_MXU_DTYPE), x2_ref[...].astype(_MXU_DTYPE),
                    preferred_element_type=jnp.float32)
    o_ref[...] = (y + b_ref[...]).astype(o_ref.dtype)


# ---------------------------------------------------------------------------
# Wrappers (activations arrive in (C, N, H, W) layout)
# ---------------------------------------------------------------------------
def _prep_w(w, K):
    cout, cin = w.shape[0], w.shape[1]
    # torch (Cout, Cin, Ky, Kx) -> (Cout, Ky, Kx, Cin) -> (Cout, K*K*Cin)
    return jnp.transpose(w, (0, 2, 3, 1)).reshape(cout, K * K * cin).astype(jnp.float32)


def _prep_alpha(alpha):
    # Works for Python floats and traced scalars alike.
    return jnp.asarray(0.0 if alpha is None else alpha, jnp.float32).reshape(1)


def _full_spec(shape):
    return pl.BlockSpec(shape, lambda i: tuple(0 for _ in shape))


def conv_block(x, w, b, alpha=None, *, K, res=None, self_res=False):
    """Fused KxK 'same' conv + bias [+ PReLU] [+ residual].  x: (Cin, N, H, W)."""
    Cin, N, H, W_ = x.shape
    Cout = w.shape[0]
    L = N * H * W_
    res_mode = "ext" if res is not None else ("self" if self_res else "none")
    if res_mode == "self":
        assert Cout == Cin, (Cout, Cin)

    xf = x.reshape(Cin, L)                       # free row-major reshape
    wm = _prep_w(w, K)
    bv = b.reshape(Cout, 1).astype(jnp.float32)
    av = _prep_alpha(alpha)

    in_specs = [
        _full_spec((Cin, L)),
        _full_spec((Cout, K * K * Cin)),
        _full_spec((Cout, 1)),
        pl.BlockSpec(memory_space=pltpu.MemorySpace.SMEM),   # PReLU alpha scalar
    ]
    args = [xf, wm, bv, av]
    if res_mode == "ext":
        assert res.shape == (Cout, N, H, W_), res.shape
        in_specs.append(_full_spec((Cout, L)))
        args.append(res.reshape(Cout, L))

    flops = 2 * L * K * K * Cin * Cout
    bytes_accessed = 4 * (Cin * L + wm.size + bv.size
                          + Cout * L * (2 if res_mode == "ext" else 1))

    kernel = functools.partial(_conv_kernel, K=K, H=H, W=W_,
                               apply_prelu=alpha is not None, res_mode=res_mode)
    out = pl.pallas_call(
        kernel,
        out_shape=jax.ShapeDtypeStruct((Cout, L), jnp.float32),
        grid=(1,),
        in_specs=in_specs,
        out_specs=_full_spec((Cout, L)),
        compiler_params=pltpu.CompilerParams(dimension_semantics=("arbitrary",)),
        cost_estimate=pl.CostEstimate(flops=flops, transcendentals=0,
                                      bytes_accessed=bytes_accessed),
    )(*args)
    return out.reshape(Cout, N, H, W_)


def double_conv_block(x, w1, b1, a1, w2, b2, a2):
    """Fused conv3x3+PReLU -> conv3x3+PReLU -> +x.  x: (Cin, N, H, W)."""
    Cin, N, H, W_ = x.shape
    C1, C2 = w1.shape[0], w2.shape[0]
    assert C2 == Cin, (C2, Cin)
    L = N * H * W_

    xf = x.reshape(Cin, L)
    w1m, w2m = _prep_w(w1, 3), _prep_w(w2, 3)
    b1v = b1.reshape(C1, 1).astype(jnp.float32)
    b2v = b2.reshape(C2, 1).astype(jnp.float32)
    a1v, a2v = _prep_alpha(a1), _prep_alpha(a2)

    flops = 2 * L * 9 * (Cin * C1 + C1 * C2)
    bytes_accessed = 4 * (Cin * L + w1m.size + w2m.size + C2 * L)

    out = pl.pallas_call(
        functools.partial(_double_conv_kernel, H=H, W=W_),
        out_shape=jax.ShapeDtypeStruct((C2, L), jnp.float32),
        grid=(1,),
        in_specs=[
            _full_spec((Cin, L)),
            _full_spec((C1, 9 * Cin)),
            _full_spec((C1, 1)),
            pl.BlockSpec(memory_space=pltpu.MemorySpace.SMEM),
            _full_spec((C2, 9 * C1)),
            _full_spec((C2, 1)),
            pl.BlockSpec(memory_space=pltpu.MemorySpace.SMEM),
        ],
        out_specs=_full_spec((C2, L)),
        compiler_params=pltpu.CompilerParams(dimension_semantics=("arbitrary",)),
        cost_estimate=pl.CostEstimate(flops=flops, transcendentals=0,
                                      bytes_accessed=bytes_accessed),
    )(xf, w1m, b1v, a1v, w2m, b2v, a2v)
    return out.reshape(C2, N, H, W_)


def conv1x1_cat_block(x1, x2, w, b):
    """1x1 conv over channel-concat [x1; x2] without materializing the concat."""
    C1, N, H, W_ = x1.shape
    C2 = x2.shape[0]
    Cout = w.shape[0]
    assert w.shape[1] == C1 + C2, (w.shape, C1, C2)
    L = N * H * W_

    wa = w[:, :C1, 0, 0].astype(jnp.float32)
    wb = w[:, C1:, 0, 0].astype(jnp.float32)
    bv = b.reshape(Cout, 1).astype(jnp.float32)

    flops = 2 * L * (C1 + C2) * Cout
    bytes_accessed = 4 * ((C1 + C2) * L + wa.size + wb.size + Cout * L)

    out = pl.pallas_call(
        _conv1x1_cat_kernel,
        out_shape=jax.ShapeDtypeStruct((Cout, L), jnp.float32),
        grid=(1,),
        in_specs=[
            _full_spec((C1, L)),
            _full_spec((C2, L)),
            _full_spec((Cout, C1)),
            _full_spec((Cout, C2)),
            _full_spec((Cout, 1)),
        ],
        out_specs=_full_spec((Cout, L)),
        compiler_params=pltpu.CompilerParams(dimension_semantics=("arbitrary",)),
        cost_estimate=pl.CostEstimate(flops=flops, transcendentals=0,
                                      bytes_accessed=bytes_accessed),
    )(x1.reshape(C1, L), x2.reshape(C2, L), wa, wb, bv)
    return out.reshape(Cout, N, H, W_)


# ---------------------------------------------------------------------------
# DWT / IWT (Haar pixel-shuffle) — pure data movement, plain XLA, (C,N,H,W).
# ---------------------------------------------------------------------------
def dwt(x):
    c, n, h, w = x.shape
    xr = x.reshape(c, n, h // 2, 2, w // 2, 2) * 0.5
    x1 = xr[:, :, :, 0, :, 0]   # even rows, even cols
    x2 = xr[:, :, :, 1, :, 0]   # odd rows,  even cols
    x3 = xr[:, :, :, 0, :, 1]   # even rows, odd cols
    x4 = xr[:, :, :, 1, :, 1]   # odd rows,  odd cols
    return jnp.concatenate(
        [x1 + x2 + x3 + x4, -x1 - x2 + x3 + x4,
         -x1 + x2 - x3 + x4, x1 - x2 - x3 + x4], axis=0)


def iwt(x):
    c4, n, h, w = x.shape
    c = c4 // 4
    x1 = x[0 * c:1 * c] * 0.5
    x2 = x[1 * c:2 * c] * 0.5
    x3 = x[2 * c:3 * c] * 0.5
    x4 = x[3 * c:4 * c] * 0.5
    ee = x1 - x2 - x3 + x4   # out[0::2, 0::2]
    oe = x1 - x2 + x3 - x4   # out[1::2, 0::2]
    eo = x1 + x2 - x3 - x4   # out[0::2, 1::2]
    oo = x1 + x2 + x3 + x4   # out[1::2, 1::2]
    even_rows = jnp.stack([ee, eo], axis=-1).reshape(c, n, h, 2 * w)
    odd_rows = jnp.stack([oe, oo], axis=-1).reshape(c, n, h, 2 * w)
    return jnp.stack([even_rows, odd_rows], axis=-2).reshape(c, n, 2 * h, 2 * w)


# ---------------------------------------------------------------------------
# Parameter initialization (deterministic, synthetic)
# ---------------------------------------------------------------------------
_CONV_SPECS = [
    ("conv1", lambda C: (C, C, 3)),
    ("conv3", lambda C: (C, C, 3)),
    ("down5", lambda C: (2 * C, 4 * C, 3)),
    ("conv7", lambda C: (2 * C, 2 * C, 3)),
    ("down9", lambda C: (4 * C, 8 * C, 3)),
    ("conv11", lambda C: (4 * C, 4 * C, 3)),
    ("conv13", lambda C: (8 * C, 4 * C, 1)),
    ("conv15", lambda C: (2 * C, 4 * C, 1)),
    ("conv16", lambda C: (2 * C, 2 * C, 3)),
    ("conv18", lambda C: (4 * C, 2 * C, 1)),
    ("conv20", lambda C: (C, 2 * C, 1)),
    ("conv21", lambda C: (C, C, 3)),
    ("conv23", lambda C: (C, C, 3)),
    ("conv25", lambda C: (C, C, 3)),
]
_PRELU_NAMES = ["relu2", "relu4", "relu6", "relu8", "relu10", "relu12",
                "relu17", "relu22", "relu24"]


def init_params(num_chans, key):
    params = {}
    keys = jax.random.split(key, 2 * len(_CONV_SPECS))
    for i, (name, shape_fn) in enumerate(_CONV_SPECS):
        cout, cin, k = shape_fn(num_chans)
        params[name + "_w"] = 0.05 * jax.random.normal(
            keys[2 * i], (cout, cin, k, k), jnp.float32)
        params[name + "_b"] = 0.05 * jax.random.normal(
            keys[2 * i + 1], (cout,), jnp.float32)
    for name in _PRELU_NAMES:
        params[name] = jnp.float32(0.25)   # torch nn.PReLU default init
    return params


# ---------------------------------------------------------------------------
# Forward pass (mirrors _Residual_Block.forward).  Public I/O is NCHW; the
# internal layout is (C, N, H, W) so the lane axis inside kernels is N*H*W.
# ---------------------------------------------------------------------------
def residual_block_forward(x, params):
    p = params
    x = jnp.transpose(x.astype(jnp.float32), (1, 0, 2, 3))   # (C, N, H, W)
    res1 = x

    # conv1+relu2+conv3+relu4 (+res1) fused into one kernel
    out = double_conv_block(x, p["conv1_w"], p["conv1_b"], p["relu2"],
                            p["conv3_w"], p["conv3_b"], p["relu4"])
    cat1 = out

    out = conv_block(dwt(out), p["down5_w"], p["down5_b"], p["relu6"], K=3)
    out = conv_block(out, p["conv7_w"], p["conv7_b"], p["relu8"], K=3, self_res=True)
    cat2 = out

    out = conv_block(dwt(out), p["down9_w"], p["down9_b"], p["relu10"], K=3)
    out = conv_block(out, p["conv11_w"], p["conv11_b"], p["relu12"], K=3, self_res=True)

    out = iwt(conv_block(out, p["conv13_w"], p["conv13_b"], None, K=1))
    out = conv1x1_cat_block(out, cat2, p["conv15_w"], p["conv15_b"])   # no cat
    out = conv_block(out, p["conv16_w"], p["conv16_b"], p["relu17"], K=3, self_res=True)

    out = iwt(conv_block(out, p["conv18_w"], p["conv18_b"], None, K=1))
    out = conv1x1_cat_block(out, cat1, p["conv20_w"], p["conv20_b"])   # no cat

    # conv21+relu22+conv23+relu24 (+res5) fused into one kernel
    out = double_conv_block(out, p["conv21_w"], p["conv21_b"], p["relu22"],
                            p["conv23_w"], p["conv23_b"], p["relu24"])

    # conv25 with the +res1 residual fused into the epilogue
    out = conv_block(out, p["conv25_w"], p["conv25_b"], None, K=3, res=res1)
    return jnp.transpose(out, (1, 0, 2, 3))                  # back to (N, C, H, W)


# ---------------------------------------------------------------------------
# Pure-XLA reference (NCHW, lax.conv) for correctness validation in __main__.
# ---------------------------------------------------------------------------
def _ref_conv(x, w, b, K):
    pad = ((1, 1), (1, 1)) if K == 3 else ((0, 0), (0, 0))
    y = lax.conv_general_dilated(x, w, (1, 1), pad,
                                 dimension_numbers=("NCHW", "OIHW", "NCHW"),
                                 precision=lax.Precision.HIGHEST)
    return y + b.reshape(1, -1, 1, 1)


def _ref_dwt(x):
    x01 = x[:, :, 0::2, :] * 0.5
    x02 = x[:, :, 1::2, :] * 0.5
    x1, x2 = x01[:, :, :, 0::2], x02[:, :, :, 0::2]
    x3, x4 = x01[:, :, :, 1::2], x02[:, :, :, 1::2]
    return jnp.concatenate([x1 + x2 + x3 + x4, -x1 - x2 + x3 + x4,
                            -x1 + x2 - x3 + x4, x1 - x2 - x3 + x4], axis=1)


def _ref_iwt(x):
    n, c4, h, w = x.shape
    c = c4 // 4
    x1, x2 = x[:, :c] * 0.5, x[:, c:2 * c] * 0.5
    x3, x4 = x[:, 2 * c:3 * c] * 0.5, x[:, 3 * c:] * 0.5
    ee, oe = x1 - x2 - x3 + x4, x1 - x2 + x3 - x4
    eo, oo = x1 + x2 - x3 - x4, x1 + x2 + x3 + x4
    even_rows = jnp.stack([ee, eo], axis=-1).reshape(n, c, h, 2 * w)
    odd_rows = jnp.stack([oe, oo], axis=-1).reshape(n, c, h, 2 * w)
    return jnp.stack([even_rows, odd_rows], axis=-2).reshape(n, c, 2 * h, 2 * w)


def reference_forward(x, p):
    def conv(v, name, K):
        return _ref_conv(v, p[name + "_w"], p[name + "_b"], K)

    def prelu(v, name):
        return jnp.where(v >= 0, v, p[name] * v)

    x = x.astype(jnp.float32)
    res1 = x
    out = prelu(conv(x, "conv1", 3), "relu2")
    out = prelu(conv(out, "conv3", 3), "relu4") + res1
    cat1 = out
    out = prelu(conv(_ref_dwt(out), "down5", 3), "relu6")
    res2 = out
    out = prelu(conv(out, "conv7", 3), "relu8") + res2
    cat2 = out
    out = prelu(conv(_ref_dwt(out), "down9", 3), "relu10")
    res3 = out
    out = prelu(conv(out, "conv11", 3), "relu12") + res3
    out = _ref_iwt(conv(out, "conv13", 1))
    out = conv(jnp.concatenate([out, cat2], axis=1), "conv15", 1)
    res4 = out
    out = prelu(conv(out, "conv16", 3), "relu17") + res4
    out = _ref_iwt(conv(out, "conv18", 1))
    out = conv(jnp.concatenate([out, cat1], axis=1), "conv20", 1)
    res5 = out
    out = prelu(conv(out, "conv21", 3), "relu22")
    out = prelu(conv(out, "conv23", 3), "relu24") + res5
    return conv(out, "conv25", 3) + res1


# ---------------------------------------------------------------------------
if __name__ == "__main__":
    key = jax.random.PRNGKey(0)
    k_x, k_p = jax.random.split(key)

    num_chans = 4
    batch, height, width = 2, 16, 16   # spatial must be divisible by 4 (two DWTs)

    x = jax.random.normal(k_x, (batch, num_chans, height, width), jnp.float32)
    params = init_params(num_chans, k_p)

    fwd = jax.jit(residual_block_forward)
    out = jax.block_until_ready(fwd(x, params))

    assert out.shape == (batch, num_chans, height, width), out.shape
    assert bool(jnp.isfinite(out).all())

    ref = jax.block_until_ready(jax.jit(reference_forward)(x, params))
    max_err = float(jnp.max(jnp.abs(out - ref)))
    assert max_err < 5e-3, f"max abs error vs XLA reference: {max_err}"

    print("KERNEL_OK")
</pallas_src>

<mosaic_0001>
module attributes {stable_mosaic.version = 11 : i64} {
  func.func @_double_conv_kernel(%arg0: i32, %arg1: memref<4x512xf32, #tpu.memory_space<vmem>>, %arg2: memref<4x36xf32, #tpu.memory_space<vmem>>, %arg3: memref<4x1xf32, #tpu.memory_space<vmem>>, %arg4: memref<1xf32, #tpu.memory_space<smem>>, %arg5: memref<4x36xf32, #tpu.memory_space<vmem>>, %arg6: memref<4x1xf32, #tpu.memory_space<vmem>>, %arg7: memref<1xf32, #tpu.memory_space<smem>>, %arg8: memref<4x512xf32, #tpu.memory_space<vmem>>) attributes {dimension_semantics = [#tpu.dimension_semantics<arbitrary>], iteration_bounds = array<i64: 1>, scalar_prefetch = 0 : i64, scratch_operands = 0 : i64, tpu.core_type = #tpu.core_type<tc>, window_params = [{pipeline_mode = #tpu.pipeline_mode<synchronous>, transform_indices = @transform_0, window_bounds = array<i64: 4, 512>}, {pipeline_mode = #tpu.pipeline_mode<synchronous>, transform_indices = @transform_1, window_bounds = array<i64: 4, 36>}, {pipeline_mode = #tpu.pipeline_mode<synchronous>, transform_indices = @transform_2, window_bounds = array<i64: 4, 1>}, {transform_indices = @transform_3, window_bounds = array<i64: 1>}, {pipeline_mode = #tpu.pipeline_mode<synchronous>, transform_indices = @transform_4, window_bounds = array<i64: 4, 36>}, {pipeline_mode = #tpu.pipeline_mode<synchronous>, transform_indices = @transform_5, window_bounds = array<i64: 4, 1>}, {transform_indices = @transform_6, window_bounds = array<i64: 1>}, {pipeline_mode = #tpu.pipeline_mode<synchronous>, transform_indices = @transform_7, window_bounds = array<i64: 4, 512>}]} {
    %c0 = arith.constant 0 : index
    %c0_0 = arith.constant 0 : index
    %0 = vector.load %arg1[%c0, %c0_0] : memref<4x512xf32, #tpu.memory_space<vmem>>, vector<4x512xf32>
    %1 = tpu.iota {dimensions = array<i32: 1>} : vector<1x512xi32>
    %c256_i32 = arith.constant 256 : i32
    %c0_i32 = arith.constant 0 : i32
    %2 = arith.cmpi eq, %c256_i32, %c0_i32 : i32
    %c1_i32 = arith.constant 1 : i32
    %3 = arith.select %2, %c1_i32, %c256_i32 : i32
    %4 = vector.broadcast %3 : i32 to vector<1x512xi32>
    %5 = arith.remsi %1, %4 : vector<1x512xi32>
    %c0_i32_1 = arith.constant 0 : i32
    %6 = vector.broadcast %c0_i32_1 : i32 to vector<1x512xi32>
    %7 = arith.cmpi ne, %5, %6 : vector<1x512xi32>
    %c0_i32_2 = arith.constant 0 : i32
    %8 = vector.broadcast %c0_i32_2 : i32 to vector<1x512xi32>
    %9 = arith.cmpi slt, %5, %8 : vector<1x512xi32>
    %c0_i32_3 = arith.constant 0 : i32
    %10 = arith.cmpi slt, %3, %c0_i32_3 : i32
    %11 = vector.broadcast %10 : i1 to vector<1x512xi1>
    %12 = vector.broadcast %11 : vector<1x512xi1> to vector<1x512xi1>
    %13 = arith.xori %9, %12 : vector<1x512xi1>
    %14 = arith.andi %13, %7 : vector<1x512xi1>
    %15 = vector.broadcast %3 : i32 to vector<1x512xi32>
    %16 = arith.addi %5, %15 : vector<1x512xi32>
    %17 = arith.select %14, %16, %5 : vector<1x512xi1>, vector<1x512xi32>
    %c16_i32 = arith.constant 16 : i32
    %c0_i32_4 = arith.constant 0 : i32
    %18 = arith.cmpi eq, %c16_i32, %c0_i32_4 : i32
    %c1_i32_5 = arith.constant 1 : i32
    %19 = arith.select %18, %c1_i32_5, %c16_i32 : i32
    %20 = vector.broadcast %19 : i32 to vector<1x512xi32>
    %21 = arith.remsi %1, %20 : vector<1x512xi32>
    %c0_i32_6 = arith.constant 0 : i32
    %22 = vector.broadcast %c0_i32_6 : i32 to vector<1x512xi32>
    %23 = arith.cmpi ne, %21, %22 : vector<1x512xi32>
    %c0_i32_7 = arith.constant 0 : i32
    %24 = vector.broadcast %c0_i32_7 : i32 to vector<1x512xi32>
    %25 = arith.cmpi slt, %21, %24 : vector<1x512xi32>
    %c0_i32_8 = arith.constant 0 : i32
    %26 = arith.cmpi slt, %19, %c0_i32_8 : i32
    %27 = vector.broadcast %26 : i1 to vector<1x512xi1>
    %28 = vector.broadcast %27 : vector<1x512xi1> to vector<1x512xi1>
    %29 = arith.xori %25, %28 : vector<1x512xi1>
    %30 = arith.andi %29, %23 : vector<1x512xi1>
    %31 = vector.broadcast %19 : i32 to vector<1x512xi32>
    %32 = arith.addi %21, %31 : vector<1x512xi32>
    %33 = arith.select %30, %32, %21 : vector<1x512xi1>, vector<1x512xi32>
    %c16_i32_9 = arith.constant 16 : i32
    %34 = vector.broadcast %c16_i32_9 : i32 to vector<1x512xi32>
    %35 = arith.cmpi sge, %17, %34 : vector<1x512xi32>
    %c240_i32 = arith.constant 240 : i32
    %36 = vector.broadcast %c240_i32 : i32 to vector<1x512xi32>
    %37 = arith.cmpi slt, %17, %36 : vector<1x512xi32>
    %c0_i32_10 = arith.constant 0 : i32
    %38 = vector.broadcast %c0_i32_10 : i32 to vector<1x512xi32>
    %39 = arith.cmpi ne, %33, %38 : vector<1x512xi32>
    %c15_i32 = arith.constant 15 : i32
    %40 = vector.broadcast %c15_i32 : i32 to vector<1x512xi32>
    %41 = arith.cmpi ne, %33, %40 : vector<1x512xi32>
    %c0_11 = arith.constant 0 : index
    %c0_12 = arith.constant 0 : index
    %42 = vector.load %arg2[%c0_11, %c0_12] : memref<4x36xf32, #tpu.memory_space<vmem>>, vector<4x36xf32>
    %c0_13 = arith.constant 0 : index
    %c0_14 = arith.constant 0 : index
    %43 = vector.load %arg3[%c0_13, %c0_14] : memref<4x1xf32, #tpu.memory_space<vmem>>, vector<4x1xf32>
    %c0_15 = arith.constant 0 : index
    %44 = memref.load %arg4[%c0_15] : memref<1xf32, #tpu.memory_space<smem>>
    %c17_i32 = arith.constant 17 : i32
    %45 = tpu.dynamic_rotate %0 by %c17_i32 dim 1 : vector<4x512xf32>, i32 -> vector<4x512xf32>
    %46 = arith.andi %35, %39 : vector<1x512xi1>
    %cst = arith.constant 0.000000e+00 : f32
    %47 = vector.shape_cast %46 : vector<1x512xi1> to vector<1x512xi1>
    %48 = vector.broadcast %47 : vector<1x512xi1> to vector<4x512xi1>
    %49 = vector.broadcast %cst : f32 to vector<4x512xf32>
    %50 = arith.select %48, %45, %49 : vector<4x512xi1>, vector<4x512xf32>
    %c16_i32_16 = arith.constant 16 : i32
    %51 = tpu.dynamic_rotate %0 by %c16_i32_16 dim 1 : vector<4x512xf32>, i32 -> vector<4x512xf32>
    %cst_17 = arith.constant 0.000000e+00 : f32
    %52 = vector.shape_cast %35 : vector<1x512xi1> to vector<1x512xi1>
    %53 = vector.broadcast %52 : vector<1x512xi1> to vector<4x512xi1>
    %54 = vector.broadcast %cst_17 : f32 to vector<4x512xf32>
    %55 = arith.select %53, %51, %54 : vector<4x512xi1>, vector<4x512xf32>
    %c15_i32_18 = arith.constant 15 : i32
    %56 = tpu.dynamic_rotate %0 by %c15_i32_18 dim 1 : vector<4x512xf32>, i32 -> vector<4x512xf32>
    %57 = arith.andi %35, %41 : vector<1x512xi1>
    %cst_19 = arith.constant 0.000000e+00 : f32
    %58 = vector.shape_cast %57 : vector<1x512xi1> to vector<1x512xi1>
    %59 = vector.broadcast %58 : vector<1x512xi1> to vector<4x512xi1>
    %60 = vector.broadcast %cst_19 : f32 to vector<4x512xf32>
    %61 = arith.select %59, %56, %60 : vector<4x512xi1>, vector<4x512xf32>
    %c1_i32_20 = arith.constant 1 : i32
    %62 = tpu.dynamic_rotate %0 by %c1_i32_20 dim 1 : vector<4x512xf32>, i32 -> vector<4x512xf32>
    %cst_21 = arith.constant 0.000000e+00 : f32
    %63 = vector.shape_cast %39 : vector<1x512xi1> to vector<1x512xi1>
    %64 = vector.broadcast %63 : vector<1x512xi1> to vector<4x512xi1>
    %65 = vector.broadcast %cst_21 : f32 to vector<4x512xf32>
    %66 = arith.select %64, %62, %65 : vector<4x512xi1>, vector<4x512xf32>
    %c511_i32 = arith.constant 511 : i32
    %67 = tpu.dynamic_rotate %0 by %c511_i32 dim 1 : vector<4x512xf32>, i32 -> vector<4x512xf32>
    %cst_22 = arith.constant 0.000000e+00 : f32
    %68 = vector.shape_cast %41 : vector<1x512xi1> to vector<1x512xi1>
    %69 = vector.broadcast %68 : vector<1x512xi1> to vector<4x512xi1>
    %70 = vector.broadcast %cst_22 : f32 to vector<4x512xf32>
    %71 = arith.select %69, %67, %70 : vector<4x512xi1>, vector<4x512xf32>
    %c497_i32 = arith.constant 497 : i32
    %72 = tpu.dynamic_rotate %0 by %c497_i32 dim 1 : vector<4x512xf32>, i32 -> vector<4x512xf32>
    %73 = arith.andi %37, %39 : vector<1x512xi1>
    %cst_23 = arith.constant 0.000000e+00 : f32
    %74 = vector.shape_cast %73 : vector<1x512xi1> to vector<1x512xi1>
    %75 = vector.broadcast %74 : vector<1x512xi1> to vector<4x512xi1>
    %76 = vector.broadcast %cst_23 : f32 to vector<4x512xf32>
    %77 = arith.select %75, %72, %76 : vector<4x512xi1>, vector<4x512xf32>
    %c496_i32 = arith.constant 496 : i32
    %78 = tpu.dynamic_rotate %0 by %c496_i32 dim 1 : vector<4x512xf32>, i32 -> vector<4x512xf32>
    %cst_24 = arith.constant 0.000000e+00 : f32
    %79 = vector.shape_cast %37 : vector<1x512xi1> to vector<1x512xi1>
    %80 = vector.broadcast %79 : vector<1x512xi1> to vector<4x512xi1>
    %81 = vector.broadcast %cst_24 : f32 to vector<4x512xf32>
    %82 = arith.select %80, %78, %81 : vector<4x512xi1>, vector<4x512xf32>
    %c495_i32 = arith.constant 495 : i32
    %83 = tpu.dynamic_rotate %0 by %c495_i32 dim 1 : vector<4x512xf32>, i32 -> vector<4x512xf32>
    %84 = arith.andi %37, %41 : vector<1x512xi1>
    %cst_25 = arith.constant 0.000000e+00 : f32
    %85 = vector.shape_cast %84 : vector<1x512xi1> to vector<1x512xi1>
    %86 = vector.broadcast %85 : vector<1x512xi1> to vector<4x512xi1>
    %87 = vector.broadcast %cst_25 : f32 to vector<4x512xf32>
    %88 = arith.select %86, %83, %87 : vector<4x512xi1>, vector<4x512xf32>
    %89 = tpu.concatenate %50, %55, %61, %66, %0, %71, %77, %82, %88 in 0 : vector<4x512xf32>, vector<4x512xf32>, vector<4x512xf32>, vector<4x512xf32>, vector<4x512xf32>, vector<4x512xf32>, vector<4x512xf32>, vector<4x512xf32>, vector<4x512xf32> -> vector<36x512xf32>
    %cst_26 = arith.constant dense<0.000000e+00> : vector<4x512xf32>
    %90 = tpu.matmul %42, %89, %cst_26 {dimension_numbers = #tpu.dot_dimension_numbers<[1], [0], [0], [1], [0, 0, 1, 1], [], []>} : vector<4x36xf32>, vector<36x512xf32>, vector<4x512xf32> -> vector<4x512xf32>
    %91 = vector.broadcast %43 : vector<4x1xf32> to vector<4x512xf32>
    %92 = arith.addf %90, %91 : vector<4x512xf32>
    %cst_27 = arith.constant 0.000000e+00 : f32
    %93 = vector.broadcast %cst_27 : f32 to vector<4x512xf32>
    %94 = arith.cmpf oge, %92, %93 : vector<4x512xf32>
    %95 = vector.broadcast %44 : f32 to vector<4x512xf32>
    %96 = arith.mulf %95, %92 : vector<4x512xf32>
    %97 = arith.select %94, %92, %96 : vector<4x512xi1>, vector<4x512xf32>
    %c0_28 = arith.constant 0 : index
    %c0_29 = arith.constant 0 : index
    %98 = vector.load %arg5[%c0_28, %c0_29] : memref<4x36xf32, #tpu.memory_space<vmem>>, vector<4x36xf32>
    %c0_30 = arith.constant 0 : index
    %c0_31 = arith.constant 0 : index
    %99 = vector.load %arg6[%c0_30, %c0_31] : memref<4x1xf32, #tpu.memory_space<vmem>>, vector<4x1xf32>
    %c0_32 = arith.constant 0 : index
    %100 = memref.load %arg7[%c0_32] : memref<1xf32, #tpu.memory_space<smem>>
    %c17_i32_33 = arith.constant 17 : i32
    %101 = tpu.dynamic_rotate %97 by %c17_i32_33 dim 1 : vector<4x512xf32>, i32 -> vector<4x512xf32>
    %102 = arith.andi %35, %39 : vector<1x512xi1>
    %cst_34 = arith.constant 0.000000e+00 : f32
    %103 = vector.shape_cast %102 : vector<1x512xi1> to vector<1x512xi1>
    %104 = vector.broadcast %103 : vector<1x512xi1> to vector<4x512xi1>
    %105 = vector.broadcast %cst_34 : f32 to vector<4x512xf32>
    %106 = arith.select %104, %101, %105 : vector<4x512xi1>, vector<4x512xf32>
    %c16_i32_35 = arith.constant 16 : i32
    %107 = tpu.dynamic_rotate %97 by %c16_i32_35 dim 1 : vector<4x512xf32>, i32 -> vector<4x512xf32>
    %cst_36 = arith.constant 0.000000e+00 : f32
    %108 = vector.shape_cast %35 : vector<1x512xi1> to vector<1x512xi1>
    %109 = vector.broadcast %108 : vector<1x512xi1> to vector<4x512xi1>
    %110 = vector.broadcast %cst_36 : f32 to vector<4x512xf32>
    %111 = arith.select %109, %107, %110 : vector<4x512xi1>, vector<4x512xf32>
    %c15_i32_37 = arith.constant 15 : i32
    %112 = tpu.dynamic_rotate %97 by %c15_i32_37 dim 1 : vector<4x512xf32>, i32 -> vector<4x512xf32>
    %113 = arith.andi %35, %41 : vector<1x512xi1>
    %cst_38 = arith.constant 0.000000e+00 : f32
    %114 = vector.shape_cast %113 : vector<1x512xi1> to vector<1x512xi1>
    %115 = vector.broadcast %114 : vector<1x512xi1> to vector<4x512xi1>
    %116 = vector.broadcast %cst_38 : f32 to vector<4x512xf32>
    %117 = arith.select %115, %112, %116 : vector<4x512xi1>, vector<4x512xf32>
    %c1_i32_39 = arith.constant 1 : i32
    %118 = tpu.dynamic_rotate %97 by %c1_i32_39 dim 1 : vector<4x512xf32>, i32 -> vector<4x512xf32>
    %cst_40 = arith.constant 0.000000e+00 : f32
    %119 = vector.shape_cast %39 : vector<1x512xi1> to vector<1x512xi1>
    %120 = vector.broadcast %119 : vector<1x512xi1> to vector<4x512xi1>
    %121 = vector.broadcast %cst_40 : f32 to vector<4x512xf32>
    %122 = arith.select %120, %118, %121 : vector<4x512xi1>, vector<4x512xf32>
    %c511_i32_41 = arith.constant 511 : i32
    %123 = tpu.dynamic_rotate %97 by %c511_i32_41 dim 1 : vector<4x512xf32>, i32 -> vector<4x512xf32>
    %cst_42 = arith.constant 0.000000e+00 : f32
    %124 = vector.shape_cast %41 : vector<1x512xi1> to vector<1x512xi1>
    %125 = vector.broadcast %124 : vector<1x512xi1> to vector<4x512xi1>
    %126 = vector.broadcast %cst_42 : f32 to vector<4x512xf32>
    %127 = arith.select %125, %123, %126 : vector<4x512xi1>, vector<4x512xf32>
    %c497_i32_43 = arith.constant 497 : i32
    %128 = tpu.dynamic_rotate %97 by %c497_i32_43 dim 1 : vector<4x512xf32>, i32 -> vector<4x512xf32>
    %129 = arith.andi %37, %39 : vector<1x512xi1>
    %cst_44 = arith.constant 0.000000e+00 : f32
    %130 = vector.shape_cast %129 : vector<1x512xi1> to vector<1x512xi1>
    %131 = vector.broadcast %130 : vector<1x512xi1> to vector<4x512xi1>
    %132 = vector.broadcast %cst_44 : f32 to vector<4x512xf32>
    %133 = arith.select %131, %128, %132 : vector<4x512xi1>, vector<4x512xf32>
    %c496_i32_45 = arith.constant 496 : i32
    %134 = tpu.dynamic_rotate %97 by %c496_i32_45 dim 1 : vector<4x512xf32>, i32 -> vector<4x512xf32>
    %cst_46 = arith.constant 0.000000e+00 : f32
    %135 = vector.shape_cast %37 : vector<1x512xi1> to vector<1x512xi1>
    %136 = vector.broadcast %135 : vector<1x512xi1> to vector<4x512xi1>
    %137 = vector.broadcast %cst_46 : f32 to vector<4x512xf32>
    %138 = arith.select %136, %134, %137 : vector<4x512xi1>, vector<4x512xf32>
    %c495_i32_47 = arith.constant 495 : i32
    %139 = tpu.dynamic_rotate %97 by %c495_i32_47 dim 1 : vector<4x512xf32>, i32 -> vector<4x512xf32>
    %140 = arith.andi %37, %41 : vector<1x512xi1>
    %cst_48 = arith.constant 0.000000e+00 : f32
    %141 = vector.shape_cast %140 : vector<1x512xi1> to vector<1x512xi1>
    %142 = vector.broadcast %141 : vector<1x512xi1> to vector<4x512xi1>
    %143 = vector.broadcast %cst_48 : f32 to vector<4x512xf32>
    %144 = arith.select %142, %139, %143 : vector<4x512xi1>, vector<4x512xf32>
    %145 = tpu.concatenate %106, %111, %117, %122, %97, %127, %133, %138, %144 in 0 : vector<4x512xf32>, vector<4x512xf32>, vector<4x512xf32>, vector<4x512xf32>, vector<4x512xf32>, vector<4x512xf32>, vector<4x512xf32>, vector<4x512xf32>, vector<4x512xf32> -> vector<36x512xf32>
    %cst_49 = arith.constant dense<0.000000e+00> : vector<4x512xf32>
    %146 = tpu.matmul %98, %145, %cst_49 {dimension_numbers = #tpu.dot_dimension_numbers<[1], [0], [0], [1], [0, 0, 1, 1], [], []>} : vector<4x36xf32>, vector<36x512xf32>, vector<4x512xf32> -> vector<4x512xf32>
    %147 = vector.broadcast %99 : vector<4x1xf32> to vector<4x512xf32>
    %148 = arith.addf %146, %147 : vector<4x512xf32>
    %cst_50 = arith.constant 0.000000e+00 : f32
    %149 = vector.broadcast %cst_50 : f32 to vector<4x512xf32>
    %150 = arith.cmpf oge, %148, %149 : vector<4x512xf32>
    %151 = vector.broadcast %100 : f32 to vector<4x512xf32>
    %152 = arith.mulf %151, %148 : vector<4x512xf32>
    %153 = arith.select %150, %148, %152 : vector<4x512xi1>, vector<4x512xf32>
    %154 = arith.addf %153, %0 : vector<4x512xf32>
    %c0_51 = arith.constant 0 : index
    %c0_52 = arith.constant 0 : index
    %155 = vector.load %arg8[%c0_51, %c0_52] : memref<4x512xf32, #tpu.memory_space<vmem>>, vector<4x512xf32>
    tpu.vector_store %arg8[%c0_51, %c0_52], %154 {strides = array<i32>} : memref<4x512xf32, #tpu.memory_space<vmem>>, vector<4x512xf32>,
    return
  }
  func.func @transform_0(%arg0: i32) -> (i32, i32) {
    %c0_i32 = arith.constant 0 : i32
    %c0_i32_0 = arith.constant 0 : i32
    %c0_i32_1 = arith.constant 0 : i32
    return %c0_i32, %c0_i32_0 : i32, i32
  }
  func.func @transform_1(%arg0: i32) -> (i32, i32) {
    %c0_i32 = arith.constant 0 : i32
    %c0_i32_0 = arith.constant 0 : i32
    %c0_i32_1 = arith.constant 0 : i32
    return %c0_i32, %c0_i32_0 : i32, i32
  }
  func.func @transform_2(%arg0: i32) -> (i32, i32) {
    %c0_i32 = arith.constant 0 : i32
    %c0_i32_0 = arith.constant 0 : i32
    %c0_i32_1 = arith.constant 0 : i32
    return %c0_i32, %c0_i32_0 : i32, i32
  }
  func.func @transform_3(%arg0: i32) -> i32 {
    %c0_i32 = arith.constant 0 : i32
    %c0_i32_0 = arith.constant 0 : i32
    return %c0_i32 : i32
  }
  func.func @transform_4(%arg0: i32) -> (i32, i32) {
    %c0_i32 = arith.constant 0 : i32
    %c0_i32_0 = arith.constant 0 : i32
    %c0_i32_1 = arith.constant 0 : i32
    return %c0_i32, %c0_i32_0 : i32, i32
  }
  func.func @transform_5(%arg0: i32) -> (i32, i32) {
    %c0_i32 = arith.constant 0 : i32
    %c0_i32_0 = arith.constant 0 : i32
    %c0_i32_1 = arith.constant 0 : i32
    return %c0_i32, %c0_i32_0 : i32, i32
  }
  func.func @transform_6(%arg0: i32) -> i32 {
    %c0_i32 = arith.constant 0 : i32
    %c0_i32_0 = arith.constant 0 : i32
    return %c0_i32 : i32
  }
  func.func @transform_7(%arg0: i32) -> (i32, i32) {
    %c0_i32 = arith.constant 0 : i32
    %c0_i32_0 = arith.constant 0 : i32
    %c0_i32_1 = arith.constant 0 : i32
    return %c0_i32, %c0_i32_0 : i32, i32
  }
}

module attributes {stable_mosaic.version = 11 : i64} {
  func.func @_conv_kernel(%arg0: i32, %arg1: memref<16x128xf32, #tpu.memory_space<vmem>>, %arg2: memref<8x144xf32, #tpu.memory_space<vmem>>, %arg3: memref<8x1xf32, #tpu.memory_space<vmem>>, %arg4: memref<1xf32, #tpu.memory_space<smem>>, %arg5: memref<8x128xf32, #tpu.memory_space<vmem>>) attributes {dimension_semantics = [#tpu.dimension_semantics<arbitrary>], iteration_bounds = array<i64: 1>, scalar_prefetch = 0 : i64, scratch_operands = 0 : i64, tpu.core_type = #tpu.core_type<tc>, window_params = [{pipeline_mode = #tpu.pipeline_mode<synchronous>, transform_indices = @transform_0, window_bounds = array<i64: 16, 128>}, {pipeline_mode = #tpu.pipeline_mode<synchronous>, transform_indices = @transform_1, window_bounds = array<i64: 8, 144>}, {pipeline_mode = #tpu.pipeline_mode<synchronous>, transform_indices = @transform_2, window_bounds = array<i64: 8, 1>}, {transform_indices = @transform_3, window_bounds = array<i64: 1>}, {pipeline_mode = #tpu.pipeline_mode<synchronous>, transform_indices = @transform_4, window_bounds = array<i64: 8, 128>}]} {
    %c0 = arith.constant 0 : index
    %c0_0 = arith.constant 0 : index
    %0 = vector.load %arg1[%c0, %c0_0] : memref<16x128xf32, #tpu.memory_space<vmem>>, vector<16x128xf32>
    %1 = tpu.iota {dimensions = array<i32: 1>} : vector<1x128xi32>
    %c64_i32 = arith.constant 64 : i32
    %c0_i32 = arith.constant 0 : i32
    %2 = arith.cmpi eq, %c64_i32, %c0_i32 : i32
    %c1_i32 = arith.constant 1 : i32
    %3 = arith.select %2, %c1_i32, %c64_i32 : i32
    %4 = vector.broadcast %3 : i32 to vector<1x128xi32>
    %5 = arith.remsi %1, %4 : vector<1x128xi32>
    %c0_i32_1 = arith.constant 0 : i32
    %6 = vector.broadcast %c0_i32_1 : i32 to vector<1x128xi32>
    %7 = arith.cmpi ne, %5, %6 : vector<1x128xi32>
    %c0_i32_2 = arith.constant 0 : i32
    %8 = vector.broadcast %c0_i32_2 : i32 to vector<1x128xi32>
    %9 = arith.cmpi slt, %5, %8 : vector<1x128xi32>
    %c0_i32_3 = arith.constant 0 : i32
    %10 = arith.cmpi slt, %3, %c0_i32_3 : i32
    %11 = vector.broadcast %10 : i1 to vector<1x128xi1>
    %12 = vector.broadcast %11 : vector<1x128xi1> to vector<1x128xi1>
    %13 = arith.xori %9, %12 : vector<1x128xi1>
    %14 = arith.andi %13, %7 : vector<1x128xi1>
    %15 = vector.broadcast %3 : i32 to vector<1x128xi32>
    %16 = arith.addi %5, %15 : vector<1x128xi32>
    %17 = arith.select %14, %16, %5 : vector<1x128xi1>, vector<1x128xi32>
    %c8_i32 = arith.constant 8 : i32
    %c0_i32_4 = arith.constant 0 : i32
    %18 = arith.cmpi eq, %c8_i32, %c0_i32_4 : i32
    %c1_i32_5 = arith.constant 1 : i32
    %19 = arith.select %18, %c1_i32_5, %c8_i32 : i32
    %20 = vector.broadcast %19 : i32 to vector<1x128xi32>
    %21 = arith.remsi %1, %20 : vector<1x128xi32>
    %c0_i32_6 = arith.constant 0 : i32
    %22 = vector.broadcast %c0_i32_6 : i32 to vector<1x128xi32>
    %23 = arith.cmpi ne, %21, %22 : vector<1x128xi32>
    %c0_i32_7 = arith.constant 0 : i32
    %24 = vector.broadcast %c0_i32_7 : i32 to vector<1x128xi32>
    %25 = arith.cmpi slt, %21, %24 : vector<1x128xi32>
    %c0_i32_8 = arith.constant 0 : i32
    %26 = arith.cmpi slt, %19, %c0_i32_8 : i32
    %27 = vector.broadcast %26 : i1 to vector<1x128xi1>
    %28 = vector.broadcast %27 : vector<1x128xi1> to vector<1x128xi1>
    %29 = arith.xori %25, %28 : vector<1x128xi1>
    %30 = arith.andi %29, %23 : vector<1x128xi1>
    %31 = vector.broadcast %19 : i32 to vector<1x128xi32>
    %32 = arith.addi %21, %31 : vector<1x128xi32>
    %33 = arith.select %30, %32, %21 : vector<1x128xi1>, vector<1x128xi32>
    %c8_i32_9 = arith.constant 8 : i32
    %34 = vector.broadcast %c8_i32_9 : i32 to vector<1x128xi32>
    %35 = arith.cmpi sge, %17, %34 : vector<1x128xi32>
    %c56_i32 = arith.constant 56 : i32
    %36 = vector.broadcast %c56_i32 : i32 to vector<1x128xi32>
    %37 = arith.cmpi slt, %17, %36 : vector<1x128xi32>
    %c0_i32_10 = arith.constant 0 : i32
    %38 = vector.broadcast %c0_i32_10 : i32 to vector<1x128xi32>
    %39 = arith.cmpi ne, %33, %38 : vector<1x128xi32>
    %c7_i32 = arith.constant 7 : i32
    %40 = vector.broadcast %c7_i32 : i32 to vector<1x128xi32>
    %41 = arith.cmpi ne, %33, %40 : vector<1x128xi32>
    %c0_11 = arith.constant 0 : index
    %c0_12 = arith.constant 0 : index
    %42 = vector.load %arg2[%c0_11, %c0_12] : memref<8x144xf32, #tpu.memory_space<vmem>>, vector<8x144xf32>
    %c0_13 = arith.constant 0 : index
    %c0_14 = arith.constant 0 : index
    %43 = vector.load %arg3[%c0_13, %c0_14] : memref<8x1xf32, #tpu.memory_space<vmem>>, vector<8x1xf32>
    %c0_15 = arith.constant 0 : index
    %44 = memref.load %arg4[%c0_15] : memref<1xf32, #tpu.memory_space<smem>>
    %c9_i32 = arith.constant 9 : i32
    %45 = tpu.dynamic_rotate %0 by %c9_i32 dim 1 : vector<16x128xf32>, i32 -> vector<16x128xf32>
    %46 = arith.andi %35, %39 : vector<1x128xi1>
    %cst = arith.constant 0.000000e+00 : f32
    %47 = vector.shape_cast %46 : vector<1x128xi1> to vector<1x128xi1>
    %48 = vector.broadcast %47 : vector<1x128xi1> to vector<16x128xi1>
    %49 = vector.broadcast %cst : f32 to vector<16x128xf32>
    %50 = arith.select %48, %45, %49 : vector<16x128xi1>, vector<16x128xf32>
    %c8_i32_16 = arith.constant 8 : i32
    %51 = tpu.dynamic_rotate %0 by %c8_i32_16 dim 1 : vector<16x128xf32>, i32 -> vector<16x128xf32>
    %cst_17 = arith.constant 0.000000e+00 : f32
    %52 = vector.shape_cast %35 : vector<1x128xi1> to vector<1x128xi1>
    %53 = vector.broadcast %52 : vector<1x128xi1> to vector<16x128xi1>
    %54 = vector.broadcast %cst_17 : f32 to vector<16x128xf32>
    %55 = arith.select %53, %51, %54 : vector<16x128xi1>, vector<16x128xf32>
    %c7_i32_18 = arith.constant 7 : i32
    %56 = tpu.dynamic_rotate %0 by %c7_i32_18 dim 1 : vector<16x128xf32>, i32 -> vector<16x128xf32>
    %57 = arith.andi %35, %41 : vector<1x128xi1>
    %cst_19 = arith.constant 0.000000e+00 : f32
    %58 = vector.shape_cast %57 : vector<1x128xi1> to vector<1x128xi1>
    %59 = vector.broadcast %58 : vector<1x128xi1> to vector<16x128xi1>
    %60 = vector.broadcast %cst_19 : f32 to vector<16x128xf32>
    %61 = arith.select %59, %56, %60 : vector<16x128xi1>, vector<16x128xf32>
    %c1_i32_20 = arith.constant 1 : i32
    %62 = tpu.dynamic_rotate %0 by %c1_i32_20 dim 1 : vector<16x128xf32>, i32 -> vector<16x128xf32>
    %cst_21 = arith.constant 0.000000e+00 : f32
    %63 = vector.shape_cast %39 : vector<1x128xi1> to vector<1x128xi1>
    %64 = vector.broadcast %63 : vector<1x128xi1> to vector<16x128xi1>
    %65 = vector.broadcast %cst_21 : f32 to vector<16x128xf32>
    %66 = arith.select %64, %62, %65 : vector<16x128xi1>, vector<16x128xf32>
    %c127_i32 = arith.constant 127 : i32
    %67 = tpu.dynamic_rotate %0 by %c127_i32 dim 1 : vector<16x128xf32>, i32 -> vector<16x128xf32>
    %cst_22 = arith.constant 0.000000e+00 : f32
    %68 = vector.shape_cast %41 : vector<1x128xi1> to vector<1x128xi1>
    %69 = vector.broadcast %68 : vector<1x128xi1> to vector<16x128xi1>
    %70 = vector.broadcast %cst_22 : f32 to vector<16x128xf32>
    %71 = arith.select %69, %67, %70 : vector<16x128xi1>, vector<16x128xf32>
    %c121_i32 = arith.constant 121 : i32
    %72 = tpu.dynamic_rotate %0 by %c121_i32 dim 1 : vector<16x128xf32>, i32 -> vector<16x128xf32>
    %73 = arith.andi %37, %39 : vector<1x128xi1>
    %cst_23 = arith.constant 0.000000e+00 : f32
    %74 = vector.shape_cast %73 : vector<1x128xi1> to vector<1x128xi1>
    %75 = vector.broadcast %74 : vector<1x128xi1> to vector<16x128xi1>
    %76 = vector.broadcast %cst_23 : f32 to vector<16x128xf32>
    %77 = arith.select %75, %72, %76 : vector<16x128xi1>, vector<16x128xf32>
    %c120_i32 = arith.constant 120 : i32
    %78 = tpu.dynamic_rotate %0 by %c120_i32 dim 1 : vector<16x128xf32>, i32 -> vector<16x128xf32>
    %cst_24 = arith.constant 0.000000e+00 : f32
    %79 = vector.shape_cast %37 : vector<1x128xi1> to vector<1x128xi1>
    %80 = vector.broadcast %79 : vector<1x128xi1> to vector<16x128xi1>
    %81 = vector.broadcast %cst_24 : f32 to vector<16x128xf32>
    %82 = arith.select %80, %78, %81 : vector<16x128xi1>, vector<16x128xf32>
    %c119_i32 = arith.constant 119 : i32
    %83 = tpu.dynamic_rotate %0 by %c119_i32 dim 1 : vector<16x128xf32>, i32 -> vector<16x128xf32>
    %84 = arith.andi %37, %41 : vector<1x128xi1>
    %cst_25 = arith.constant 0.000000e+00 : f32
    %85 = vector.shape_cast %84 : vector<1x128xi1> to vector<1x128xi1>
    %86 = vector.broadcast %85 : vector<1x128xi1> to vector<16x128xi1>
    %87 = vector.broadcast %cst_25 : f32 to vector<16x128xf32>
    %88 = arith.select %86, %83, %87 : vector<16x128xi1>, vector<16x128xf32>
    %89 = tpu.concatenate %50, %55, %61, %66, %0, %71, %77, %82, %88 in 0 : vector<16x128xf32>, vector<16x128xf32>, vector<16x128xf32>, vector<16x128xf32>, vector<16x128xf32>, vector<16x128xf32>, vector<16x128xf32>, vector<16x128xf32>, vector<16x128xf32> -> vector<144x128xf32>
    %cst_26 = arith.constant dense<0.000000e+00> : vector<8x128xf32>
    %90 = tpu.matmul %42, %89, %cst_26 {dimension_numbers = #tpu.dot_dimension_numbers<[1], [0], [0], [1], [0, 0, 1, 1], [], []>} : vector<8x144xf32>, vector<144x128xf32>, vector<8x128xf32> -> vector<8x128xf32>
    %91 = vector.broadcast %43 : vector<8x1xf32> to vector<8x128xf32>
    %92 = arith.addf %90, %91 : vector<8x128xf32>
    %cst_27 = arith.constant 0.000000e+00 : f32
    %93 = vector.broadcast %cst_27 : f32 to vector<8x128xf32>
    %94 = arith.cmpf oge, %92, %93 : vector<8x128xf32>
    %95 = vector.broadcast %44 : f32 to vector<8x128xf32>
    %96 = arith.mulf %95, %92 : vector<8x128xf32>
    %97 = arith.select %94, %92, %96 : vector<8x128xi1>, vector<8x128xf32>
    %c0_28 = arith.constant 0 : index
    %c0_29 = arith.constant 0 : index
    %98 = vector.load %arg5[%c0_28, %c0_29] : memref<8x128xf32, #tpu.memory_space<vmem>>, vector<8x128xf32>
    tpu.vector_store %arg5[%c0_28, %c0_29], %97 {strides = array<i32>} : memref<8x128xf32, #tpu.memory_space<vmem>>, vector<8x128xf32>,
    return
  }
  func.func @transform_0(%arg0: i32) -> (i32, i32) {
    %c0_i32 = arith.constant 0 : i32
    %c0_i32_0 = arith.constant 0 : i32
    %c0_i32_1 = arith.constant 0 : i32
    return %c0_i32, %c0_i32_0 : i32, i32
  }
  func.func @transform_1(%arg0: i32) -> (i32, i32) {
    %c0_i32 = arith.constant 0 : i32
    %c0_i32_0 = arith.constant 0 : i32
    %c0_i32_1 = arith.constant 0 : i32
    return %c0_i32, %c0_i32_0 : i32, i32
  }
  func.func @transform_2(%arg0: i32) -> (i32, i32) {
    %c0_i32 = arith.constant 0 : i32
    %c0_i32_0 = arith.constant 0 : i32
    %c0_i32_1 = arith.constant 0 : i32
    return %c0_i32, %c0_i32_0 : i32, i32
  }
  func.func @transform_3(%arg0: i32) -> i32 {
    %c0_i32 = arith.constant 0 : i32
    %c0_i32_0 = arith.constant 0 : i32
    return %c0_i32 : i32
  }
  func.func @transform_4(%arg0: i32) -> (i32, i32) {
    %c0_i32 = arith.constant 0 : i32
    %c0_i32_0 = arith.constant 0 : i32
    %c0_i32_1 = arith.constant 0 : i32
    return %c0_i32, %c0_i32_0 : i32, i32
  }
}

module attributes {stable_mosaic.version = 11 : i64} {
  func.func @_conv_kernel(%arg0: i32, %arg1: memref<8x128xf32, #tpu.memory_space<vmem>>, %arg2: memref<8x72xf32, #tpu.memory_space<vmem>>, %arg3: memref<8x1xf32, #tpu.memory_space<vmem>>, %arg4: memref<1xf32, #tpu.memory_space<smem>>, %arg5: memref<8x128xf32, #tpu.memory_space<vmem>>) attributes {dimension_semantics = [#tpu.dimension_semantics<arbitrary>], iteration_bounds = array<i64: 1>, scalar_prefetch = 0 : i64, scratch_operands = 0 : i64, tpu.core_type = #tpu.core_type<tc>, window_params = [{pipeline_mode = #tpu.pipeline_mode<synchronous>, transform_indices = @transform_0, window_bounds = array<i64: 8, 128>}, {pipeline_mode = #tpu.pipeline_mode<synchronous>, transform_indices = @transform_1, window_bounds = array<i64: 8, 72>}, {pipeline_mode = #tpu.pipeline_mode<synchronous>, transform_indices = @transform_2, window_bounds = array<i64: 8, 1>}, {transform_indices = @transform_3, window_bounds = array<i64: 1>}, {pipeline_mode = #tpu.pipeline_mode<synchronous>, transform_indices = @transform_4, window_bounds = array<i64: 8, 128>}]} {
    %c0 = arith.constant 0 : index
    %c0_0 = arith.constant 0 : index
    %0 = vector.load %arg1[%c0, %c0_0] : memref<8x128xf32, #tpu.memory_space<vmem>>, vector<8x128xf32>
    %1 = tpu.iota {dimensions = array<i32: 1>} : vector<1x128xi32>
    %c64_i32 = arith.constant 64 : i32
    %c0_i32 = arith.constant 0 : i32
    %2 = arith.cmpi eq, %c64_i32, %c0_i32 : i32
    %c1_i32 = arith.constant 1 : i32
    %3 = arith.select %2, %c1_i32, %c64_i32 : i32
    %4 = vector.broadcast %3 : i32 to vector<1x128xi32>
    %5 = arith.remsi %1, %4 : vector<1x128xi32>
    %c0_i32_1 = arith.constant 0 : i32
    %6 = vector.broadcast %c0_i32_1 : i32 to vector<1x128xi32>
    %7 = arith.cmpi ne, %5, %6 : vector<1x128xi32>
    %c0_i32_2 = arith.constant 0 : i32
    %8 = vector.broadcast %c0_i32_2 : i32 to vector<1x128xi32>
    %9 = arith.cmpi slt, %5, %8 : vector<1x128xi32>
    %c0_i32_3 = arith.constant 0 : i32
    %10 = arith.cmpi slt, %3, %c0_i32_3 : i32
    %11 = vector.broadcast %10 : i1 to vector<1x128xi1>
    %12 = vector.broadcast %11 : vector<1x128xi1> to vector<1x128xi1>
    %13 = arith.xori %9, %12 : vector<1x128xi1>
    %14 = arith.andi %13, %7 : vector<1x128xi1>
    %15 = vector.broadcast %3 : i32 to vector<1x128xi32>
    %16 = arith.addi %5, %15 : vector<1x128xi32>
    %17 = arith.select %14, %16, %5 : vector<1x128xi1>, vector<1x128xi32>
    %c8_i32 = arith.constant 8 : i32
    %c0_i32_4 = arith.constant 0 : i32
    %18 = arith.cmpi eq, %c8_i32, %c0_i32_4 : i32
    %c1_i32_5 = arith.constant 1 : i32
    %19 = arith.select %18, %c1_i32_5, %c8_i32 : i32
    %20 = vector.broadcast %19 : i32 to vector<1x128xi32>
    %21 = arith.remsi %1, %20 : vector<1x128xi32>
    %c0_i32_6 = arith.constant 0 : i32
    %22 = vector.broadcast %c0_i32_6 : i32 to vector<1x128xi32>
    %23 = arith.cmpi ne, %21, %22 : vector<1x128xi32>
    %c0_i32_7 = arith.constant 0 : i32
    %24 = vector.broadcast %c0_i32_7 : i32 to vector<1x128xi32>
    %25 = arith.cmpi slt, %21, %24 : vector<1x128xi32>
    %c0_i32_8 = arith.constant 0 : i32
    %26 = arith.cmpi slt, %19, %c0_i32_8 : i32
    %27 = vector.broadcast %26 : i1 to vector<1x128xi1>
    %28 = vector.broadcast %27 : vector<1x128xi1> to vector<1x128xi1>
    %29 = arith.xori %25, %28 : vector<1x128xi1>
    %30 = arith.andi %29, %23 : vector<1x128xi1>
    %31 = vector.broadcast %19 : i32 to vector<1x128xi32>
    %32 = arith.addi %21, %31 : vector<1x128xi32>
    %33 = arith.select %30, %32, %21 : vector<1x128xi1>, vector<1x128xi32>
    %c8_i32_9 = arith.constant 8 : i32
    %34 = vector.broadcast %c8_i32_9 : i32 to vector<1x128xi32>
    %35 = arith.cmpi sge, %17, %34 : vector<1x128xi32>
    %c56_i32 = arith.constant 56 : i32
    %36 = vector.broadcast %c56_i32 : i32 to vector<1x128xi32>
    %37 = arith.cmpi slt, %17, %36 : vector<1x128xi32>
    %c0_i32_10 = arith.constant 0 : i32
    %38 = vector.broadcast %c0_i32_10 : i32 to vector<1x128xi32>
    %39 = arith.cmpi ne, %33, %38 : vector<1x128xi32>
    %c7_i32 = arith.constant 7 : i32
    %40 = vector.broadcast %c7_i32 : i32 to vector<1x128xi32>
    %41 = arith.cmpi ne, %33, %40 : vector<1x128xi32>
    %c0_11 = arith.constant 0 : index
    %c0_12 = arith.constant 0 : index
    %42 = vector.load %arg2[%c0_11, %c0_12] : memref<8x72xf32, #tpu.memory_space<vmem>>, vector<8x72xf32>
    %c0_13 = arith.constant 0 : index
    %c0_14 = arith.constant 0 : index
    %43 = vector.load %arg3[%c0_13, %c0_14] : memref<8x1xf32, #tpu.memory_space<vmem>>, vector<8x1xf32>
    %c0_15 = arith.constant 0 : index
    %44 = memref.load %arg4[%c0_15] : memref<1xf32, #tpu.memory_space<smem>>
    %c9_i32 = arith.constant 9 : i32
    %45 = tpu.dynamic_rotate %0 by %c9_i32 dim 1 : vector<8x128xf32>, i32 -> vector<8x128xf32>
    %46 = arith.andi %35, %39 : vector<1x128xi1>
    %cst = arith.constant 0.000000e+00 : f32
    %47 = vector.shape_cast %46 : vector<1x128xi1> to vector<1x128xi1>
    %48 = vector.broadcast %47 : vector<1x128xi1> to vector<8x128xi1>
    %49 = vector.broadcast %cst : f32 to vector<8x128xf32>
    %50 = arith.select %48, %45, %49 : vector<8x128xi1>, vector<8x128xf32>
    %c8_i32_16 = arith.constant 8 : i32
    %51 = tpu.dynamic_rotate %0 by %c8_i32_16 dim 1 : vector<8x128xf32>, i32 -> vector<8x128xf32>
    %cst_17 = arith.constant 0.000000e+00 : f32
    %52 = vector.shape_cast %35 : vector<1x128xi1> to vector<1x128xi1>
    %53 = vector.broadcast %52 : vector<1x128xi1> to vector<8x128xi1>
    %54 = vector.broadcast %cst_17 : f32 to vector<8x128xf32>
    %55 = arith.select %53, %51, %54 : vector<8x128xi1>, vector<8x128xf32>
    %c7_i32_18 = arith.constant 7 : i32
    %56 = tpu.dynamic_rotate %0 by %c7_i32_18 dim 1 : vector<8x128xf32>, i32 -> vector<8x128xf32>
    %57 = arith.andi %35, %41 : vector<1x128xi1>
    %cst_19 = arith.constant 0.000000e+00 : f32
    %58 = vector.shape_cast %57 : vector<1x128xi1> to vector<1x128xi1>
    %59 = vector.broadcast %58 : vector<1x128xi1> to vector<8x128xi1>
    %60 = vector.broadcast %cst_19 : f32 to vector<8x128xf32>
    %61 = arith.select %59, %56, %60 : vector<8x128xi1>, vector<8x128xf32>
    %c1_i32_20 = arith.constant 1 : i32
    %62 = tpu.dynamic_rotate %0 by %c1_i32_20 dim 1 : vector<8x128xf32>, i32 -> vector<8x128xf32>
    %cst_21 = arith.constant 0.000000e+00 : f32
    %63 = vector.shape_cast %39 : vector<1x128xi1> to vector<1x128xi1>
    %64 = vector.broadcast %63 : vector<1x128xi1> to vector<8x128xi1>
    %65 = vector.broadcast %cst_21 : f32 to vector<8x128xf32>
    %66 = arith.select %64, %62, %65 : vector<8x128xi1>, vector<8x128xf32>
    %c127_i32 = arith.constant 127 : i32
    %67 = tpu.dynamic_rotate %0 by %c127_i32 dim 1 : vector<8x128xf32>, i32 -> vector<8x128xf32>
    %cst_22 = arith.constant 0.000000e+00 : f32
    %68 = vector.shape_cast %41 : vector<1x128xi1> to vector<1x128xi1>
    %69 = vector.broadcast %68 : vector<1x128xi1> to vector<8x128xi1>
    %70 = vector.broadcast %cst_22 : f32 to vector<8x128xf32>
    %71 = arith.select %69, %67, %70 : vector<8x128xi1>, vector<8x128xf32>
    %c121_i32 = arith.constant 121 : i32
    %72 = tpu.dynamic_rotate %0 by %c121_i32 dim 1 : vector<8x128xf32>, i32 -> vector<8x128xf32>
    %73 = arith.andi %37, %39 : vector<1x128xi1>
    %cst_23 = arith.constant 0.000000e+00 : f32
    %74 = vector.shape_cast %73 : vector<1x128xi1> to vector<1x128xi1>
    %75 = vector.broadcast %74 : vector<1x128xi1> to vector<8x128xi1>
    %76 = vector.broadcast %cst_23 : f32 to vector<8x128xf32>
    %77 = arith.select %75, %72, %76 : vector<8x128xi1>, vector<8x128xf32>
    %c120_i32 = arith.constant 120 : i32
    %78 = tpu.dynamic_rotate %0 by %c120_i32 dim 1 : vector<8x128xf32>, i32 -> vector<8x128xf32>
    %cst_24 = arith.constant 0.000000e+00 : f32
    %79 = vector.shape_cast %37 : vector<1x128xi1> to vector<1x128xi1>
    %80 = vector.broadcast %79 : vector<1x128xi1> to vector<8x128xi1>
    %81 = vector.broadcast %cst_24 : f32 to vector<8x128xf32>
    %82 = arith.select %80, %78, %81 : vector<8x128xi1>, vector<8x128xf32>
    %c119_i32 = arith.constant 119 : i32
    %83 = tpu.dynamic_rotate %0 by %c119_i32 dim 1 : vector<8x128xf32>, i32 -> vector<8x128xf32>
    %84 = arith.andi %37, %41 : vector<1x128xi1>
    %cst_25 = arith.constant 0.000000e+00 : f32
    %85 = vector.shape_cast %84 : vector<1x128xi1> to vector<1x128xi1>
    %86 = vector.broadcast %85 : vector<1x128xi1> to vector<8x128xi1>
    %87 = vector.broadcast %cst_25 : f32 to vector<8x128xf32>
    %88 = arith.select %86, %83, %87 : vector<8x128xi1>, vector<8x128xf32>
    %89 = tpu.concatenate %50, %55, %61, %66, %0, %71, %77, %82, %88 in 0 : vector<8x128xf32>, vector<8x128xf32>, vector<8x128xf32>, vector<8x128xf32>, vector<8x128xf32>, vector<8x128xf32>, vector<8x128xf32>, vector<8x128xf32>, vector<8x128xf32> -> vector<72x128xf32>
    %cst_26 = arith.constant dense<0.000000e+00> : vector<8x128xf32>
    %90 = tpu.matmul %42, %89, %cst_26 {dimension_numbers = #tpu.dot_dimension_numbers<[1], [0], [0], [1], [0, 0, 1, 1], [], []>} : vector<8x72xf32>, vector<72x128xf32>, vector<8x128xf32> -> vector<8x128xf32>
    %91 = vector.broadcast %43 : vector<8x1xf32> to vector<8x128xf32>
    %92 = arith.addf %90, %91 : vector<8x128xf32>
    %cst_27 = arith.constant 0.000000e+00 : f32
    %93 = vector.broadcast %cst_27 : f32 to vector<8x128xf32>
    %94 = arith.cmpf oge, %92, %93 : vector<8x128xf32>
    %95 = vector.broadcast %44 : f32 to vector<8x128xf32>
    %96 = arith.mulf %95, %92 : vector<8x128xf32>
    %97 = arith.select %94, %92, %96 : vector<8x128xi1>, vector<8x128xf32>
    %98 = arith.addf %97, %0 : vector<8x128xf32>
    %c0_28 = arith.constant 0 : index
    %c0_29 = arith.constant 0 : index
    %99 = vector.load %arg5[%c0_28, %c0_29] : memref<8x128xf32, #tpu.memory_space<vmem>>, vector<8x128xf32>
    tpu.vector_store %arg5[%c0_28, %c0_29], %98 {strides = array<i32>} : memref<8x128xf32, #tpu.memory_space<vmem>>, vector<8x128xf32>,
    return
  }
  func.func @transform_0(%arg0: i32) -> (i32, i32) {
    %c0_i32 = arith.constant 0 : i32
    %c0_i32_0 = arith.constant 0 : i32
    %c0_i32_1 = arith.constant 0 : i32
    return %c0_i32, %c0_i32_0 : i32, i32
  }
  func.func @transform_1(%arg0: i32) -> (i32, i32) {
    %c0_i32 = arith.constant 0 : i32
    %c0_i32_0 = arith.constant 0 : i32
    %c0_i32_1 = arith.constant 0 : i32
    return %c0_i32, %c0_i32_0 : i32, i32
  }
  func.func @transform_2(%arg0: i32) -> (i32, i32) {
    %c0_i32 = arith.constant 0 : i32
    %c0_i32_0 = arith.constant 0 : i32
    %c0_i32_1 = arith.constant 0 : i32
    return %c0_i32, %c0_i32_0 : i32, i32
  }
  func.func @transform_3(%arg0: i32) -> i32 {
    %c0_i32 = arith.constant 0 : i32
    %c0_i32_0 = arith.constant 0 : i32
    return %c0_i32 : i32
  }
  func.func @transform_4(%arg0: i32) -> (i32, i32) {
    %c0_i32 = arith.constant 0 : i32
    %c0_i32_0 = arith.constant 0 : i32
    %c0_i32_1 = arith.constant 0 : i32
    return %c0_i32, %c0_i32_0 : i32, i32
  }
}

module attributes {stable_mosaic.version = 11 : i64} {
  func.func @_conv_kernel(%arg0: i32, %arg1: memref<32x32xf32, #tpu.memory_space<vmem>>, %arg2: memref<16x288xf32, #tpu.memory_space<vmem>>, %arg3: memref<16x1xf32, #tpu.memory_space<vmem>>, %arg4: memref<1xf32, #tpu.memory_space<smem>>, %arg5: memref<16x32xf32, #tpu.memory_space<vmem>>) attributes {dimension_semantics = [#tpu.dimension_semantics<arbitrary>], iteration_bounds = array<i64: 1>, scalar_prefetch = 0 : i64, scratch_operands = 0 : i64, tpu.core_type = #tpu.core_type<tc>, window_params = [{pipeline_mode = #tpu.pipeline_mode<synchronous>, transform_indices = @transform_0, window_bounds = array<i64: 32, 32>}, {pipeline_mode = #tpu.pipeline_mode<synchronous>, transform_indices = @transform_1, window_bounds = array<i64: 16, 288>}, {pipeline_mode = #tpu.pipeline_mode<synchronous>, transform_indices = @transform_2, window_bounds = array<i64: 16, 1>}, {transform_indices = @transform_3, window_bounds = array<i64: 1>}, {pipeline_mode = #tpu.pipeline_mode<synchronous>, transform_indices = @transform_4, window_bounds = array<i64: 16, 32>}]} {
    %c0 = arith.constant 0 : index
    %c0_0 = arith.constant 0 : index
    %0 = vector.load %arg1[%c0, %c0_0] : memref<32x32xf32, #tpu.memory_space<vmem>>, vector<32x32xf32>
    %1 = tpu.iota {dimensions = array<i32: 1>} : vector<1x32xi32>
    %c16_i32 = arith.constant 16 : i32
    %c0_i32 = arith.constant 0 : i32
    %2 = arith.cmpi eq, %c16_i32, %c0_i32 : i32
    %c1_i32 = arith.constant 1 : i32
    %3 = arith.select %2, %c1_i32, %c16_i32 : i32
    %4 = vector.broadcast %3 : i32 to vector<1x32xi32>
    %5 = arith.remsi %1, %4 : vector<1x32xi32>
    %c0_i32_1 = arith.constant 0 : i32
    %6 = vector.broadcast %c0_i32_1 : i32 to vector<1x32xi32>
    %7 = arith.cmpi ne, %5, %6 : vector<1x32xi32>
    %c0_i32_2 = arith.constant 0 : i32
    %8 = vector.broadcast %c0_i32_2 : i32 to vector<1x32xi32>
    %9 = arith.cmpi slt, %5, %8 : vector<1x32xi32>
    %c0_i32_3 = arith.constant 0 : i32
    %10 = arith.cmpi slt, %3, %c0_i32_3 : i32
    %11 = vector.broadcast %10 : i1 to vector<1x32xi1>
    %12 = vector.broadcast %11 : vector<1x32xi1> to vector<1x32xi1>
    %13 = arith.xori %9, %12 : vector<1x32xi1>
    %14 = arith.andi %13, %7 : vector<1x32xi1>
    %15 = vector.broadcast %3 : i32 to vector<1x32xi32>
    %16 = arith.addi %5, %15 : vector<1x32xi32>
    %17 = arith.select %14, %16, %5 : vector<1x32xi1>, vector<1x32xi32>
    %c4_i32 = arith.constant 4 : i32
    %c0_i32_4 = arith.constant 0 : i32
    %18 = arith.cmpi eq, %c4_i32, %c0_i32_4 : i32
    %c1_i32_5 = arith.constant 1 : i32
    %19 = arith.select %18, %c1_i32_5, %c4_i32 : i32
    %20 = vector.broadcast %19 : i32 to vector<1x32xi32>
    %21 = arith.remsi %1, %20 : vector<1x32xi32>
    %c0_i32_6 = arith.constant 0 : i32
    %22 = vector.broadcast %c0_i32_6 : i32 to vector<1x32xi32>
    %23 = arith.cmpi ne, %21, %22 : vector<1x32xi32>
    %c0_i32_7 = arith.constant 0 : i32
    %24 = vector.broadcast %c0_i32_7 : i32 to vector<1x32xi32>
    %25 = arith.cmpi slt, %21, %24 : vector<1x32xi32>
    %c0_i32_8 = arith.constant 0 : i32
    %26 = arith.cmpi slt, %19, %c0_i32_8 : i32
    %27 = vector.broadcast %26 : i1 to vector<1x32xi1>
    %28 = vector.broadcast %27 : vector<1x32xi1> to vector<1x32xi1>
    %29 = arith.xori %25, %28 : vector<1x32xi1>
    %30 = arith.andi %29, %23 : vector<1x32xi1>
    %31 = vector.broadcast %19 : i32 to vector<1x32xi32>
    %32 = arith.addi %21, %31 : vector<1x32xi32>
    %33 = arith.select %30, %32, %21 : vector<1x32xi1>, vector<1x32xi32>
    %c4_i32_9 = arith.constant 4 : i32
    %34 = vector.broadcast %c4_i32_9 : i32 to vector<1x32xi32>
    %35 = arith.cmpi sge, %17, %34 : vector<1x32xi32>
    %c12_i32 = arith.constant 12 : i32
    %36 = vector.broadcast %c12_i32 : i32 to vector<1x32xi32>
    %37 = arith.cmpi slt, %17, %36 : vector<1x32xi32>
    %c0_i32_10 = arith.constant 0 : i32
    %38 = vector.broadcast %c0_i32_10 : i32 to vector<1x32xi32>
    %39 = arith.cmpi ne, %33, %38 : vector<1x32xi32>
    %c3_i32 = arith.constant 3 : i32
    %40 = vector.broadcast %c3_i32 : i32 to vector<1x32xi32>
    %41 = arith.cmpi ne, %33, %40 : vector<1x32xi32>
    %c0_11 = arith.constant 0 : index
    %c0_12 = arith.constant 0 : index
    %42 = vector.load %arg2[%c0_11, %c0_12] : memref<16x288xf32, #tpu.memory_space<vmem>>, vector<16x288xf32>
    %c0_13 = arith.constant 0 : index
    %c0_14 = arith.constant 0 : index
    %43 = vector.load %arg3[%c0_13, %c0_14] : memref<16x1xf32, #tpu.memory_space<vmem>>, vector<16x1xf32>
    %c0_15 = arith.constant 0 : index
    %44 = memref.load %arg4[%c0_15] : memref<1xf32, #tpu.memory_space<smem>>
    %cst = arith.constant 0.000000e+00 : f32
    %45 = vector.broadcast %cst : f32 to vector<32x5xf32>
    %46 = vector.extract_strided_slice %0 {offsets = [0, 0], sizes = [32, 27], strides = [1, 1]} : vector<32x32xf32> to vector<32x27xf32>
    %47 = tpu.concatenate %45, %46 in 1 : vector<32x5xf32>, vector<32x27xf32> -> vector<32x32xf32>
    %48 = arith.andi %35, %39 : vector<1x32xi1>
    %cst_16 = arith.constant 0.000000e+00 : f32
    %49 = vector.shape_cast %48 : vector<1x32xi1> to vector<1x32xi1>
    %50 = vector.broadcast %49 : vector<1x32xi1> to vector<32x32xi1>
    %51 = vector.broadcast %cst_16 : f32 to vector<32x32xf32>
    %52 = arith.select %50, %47, %51 : vector<32x32xi1>, vector<32x32xf32>
    %cst_17 = arith.constant 0.000000e+00 : f32
    %53 = vector.broadcast %cst_17 : f32 to vector<32x4xf32>
    %54 = vector.extract_strided_slice %0 {offsets = [0, 0], sizes = [32, 28], strides = [1, 1]} : vector<32x32xf32> to vector<32x28xf32>
    %55 = tpu.concatenate %53, %54 in 1 : vector<32x4xf32>, vector<32x28xf32> -> vector<32x32xf32>
    %cst_18 = arith.constant 0.000000e+00 : f32
    %56 = vector.shape_cast %35 : vector<1x32xi1> to vector<1x32xi1>
    %57 = vector.broadcast %56 : vector<1x32xi1> to vector<32x32xi1>
    %58 = vector.broadcast %cst_18 : f32 to vector<32x32xf32>
    %59 = arith.select %57, %55, %58 : vector<32x32xi1>, vector<32x32xf32>
    %cst_19 = arith.constant 0.000000e+00 : f32
    %60 = vector.broadcast %cst_19 : f32 to vector<32x3xf32>
    %61 = vector.extract_strided_slice %0 {offsets = [0, 0], sizes = [32, 29], strides = [1, 1]} : vector<32x32xf32> to vector<32x29xf32>
    %62 = tpu.concatenate %60, %61 in 1 : vector<32x3xf32>, vector<32x29xf32> -> vector<32x32xf32>
    %63 = arith.andi %35, %41 : vector<1x32xi1>
    %cst_20 = arith.constant 0.000000e+00 : f32
    %64 = vector.shape_cast %63 : vector<1x32xi1> to vector<1x32xi1>
    %65 = vector.broadcast %64 : vector<1x32xi1> to vector<32x32xi1>
    %66 = vector.broadcast %cst_20 : f32 to vector<32x32xf32>
    %67 = arith.select %65, %62, %66 : vector<32x32xi1>, vector<32x32xf32>
    %cst_21 = arith.constant 0.000000e+00 : f32
    %68 = vector.broadcast %cst_21 : f32 to vector<32x1xf32>
    %69 = vector.extract_strided_slice %0 {offsets = [0, 0], sizes = [32, 31], strides = [1, 1]} : vector<32x32xf32> to vector<32x31xf32>
    %70 = tpu.concatenate %68, %69 in 1 : vector<32x1xf32>, vector<32x31xf32> -> vector<32x32xf32>
    %cst_22 = arith.constant 0.000000e+00 : f32
    %71 = vector.shape_cast %39 : vector<1x32xi1> to vector<1x32xi1>
    %72 = vector.broadcast %71 : vector<1x32xi1> to vector<32x32xi1>
    %73 = vector.broadcast %cst_22 : f32 to vector<32x32xf32>
    %74 = arith.select %72, %70, %73 : vector<32x32xi1>, vector<32x32xf32>
    %75 = vector.extract_strided_slice %0 {offsets = [0, 1], sizes = [32, 31], strides = [1, 1]} : vector<32x32xf32> to vector<32x31xf32>
    %cst_23 = arith.constant 0.000000e+00 : f32
    %76 = vector.broadcast %cst_23 : f32 to vector<32x1xf32>
    %77 = tpu.concatenate %75, %76 in 1 : vector<32x31xf32>, vector<32x1xf32> -> vector<32x32xf32>
    %cst_24 = arith.constant 0.000000e+00 : f32
    %78 = vector.shape_cast %41 : vector<1x32xi1> to vector<1x32xi1>
    %79 = vector.broadcast %78 : vector<1x32xi1> to vector<32x32xi1>
    %80 = vector.broadcast %cst_24 : f32 to vector<32x32xf32>
    %81 = arith.select %79, %77, %80 : vector<32x32xi1>, vector<32x32xf32>
    %82 = vector.extract_strided_slice %0 {offsets = [0, 3], sizes = [32, 29], strides = [1, 1]} : vector<32x32xf32> to vector<32x29xf32>
    %cst_25 = arith.constant 0.000000e+00 : f32
    %83 = vector.broadcast %cst_25 : f32 to vector<32x3xf32>
    %84 = tpu.concatenate %82, %83 in 1 : vector<32x29xf32>, vector<32x3xf32> -> vector<32x32xf32>
    %85 = arith.andi %37, %39 : vector<1x32xi1>
    %cst_26 = arith.constant 0.000000e+00 : f32
    %86 = vector.shape_cast %85 : vector<1x32xi1> to vector<1x32xi1>
    %87 = vector.broadcast %86 : vector<1x32xi1> to vector<32x32xi1>
    %88 = vector.broadcast %cst_26 : f32 to vector<32x32xf32>
    %89 = arith.select %87, %84, %88 : vector<32x32xi1>, vector<32x32xf32>
    %90 = vector.extract_strided_slice %0 {offsets = [0, 4], sizes = [32, 28], strides = [1, 1]} : vector<32x32xf32> to vector<32x28xf32>
    %cst_27 = arith.constant 0.000000e+00 : f32
    %91 = vector.broadcast %cst_27 : f32 to vector<32x4xf32>
    %92 = tpu.concatenate %90, %91 in 1 : vector<32x28xf32>, vector<32x4xf32> -> vector<32x32xf32>
    %cst_28 = arith.constant 0.000000e+00 : f32
    %93 = vector.shape_cast %37 : vector<1x32xi1> to vector<1x32xi1>
    %94 = vector.broadcast %93 : vector<1x32xi1> to vector<32x32xi1>
    %95 = vector.broadcast %cst_28 : f32 to vector<32x32xf32>
    %96 = arith.select %94, %92, %95 : vector<32x32xi1>, vector<32x32xf32>
    %97 = vector.extract_strided_slice %0 {offsets = [0, 5], sizes = [32, 27], strides = [1, 1]} : vector<32x32xf32> to vector<32x27xf32>
    %cst_29 = arith.constant 0.000000e+00 : f32
    %98 = vector.broadcast %cst_29 : f32 to vector<32x5xf32>
    %99 = tpu.concatenate %97, %98 in 1 : vector<32x27xf32>, vector<32x5xf32> -> vector<32x32xf32>
    %100 = arith.andi %37, %41 : vector<1x32xi1>
    %cst_30 = arith.constant 0.000000e+00 : f32
    %101 = vector.shape_cast %100 : vector<1x32xi1> to vector<1x32xi1>
    %102 = vector.broadcast %101 : vector<1x32xi1> to vector<32x32xi1>
    %103 = vector.broadcast %cst_30 : f32 to vector<32x32xf32>
    %104 = arith.select %102, %99, %103 : vector<32x32xi1>, vector<32x32xf32>
    %105 = tpu.concatenate %52, %59, %67, %74, %0, %81, %89, %96, %104 in 0 : vector<32x32xf32>, vector<32x32xf32>, vector<32x32xf32>, vector<32x32xf32>, vector<32x32xf32>, vector<32x32xf32>, vector<32x32xf32>, vector<32x32xf32>, vector<32x32xf32> -> vector<288x32xf32>
    %cst_31 = arith.constant dense<0.000000e+00> : vector<16x32xf32>
    %106 = tpu.matmul %42, %105, %cst_31 {dimension_numbers = #tpu.dot_dimension_numbers<[1], [0], [0], [1], [0, 0, 1, 1], [], []>} : vector<16x288xf32>, vector<288x32xf32>, vector<16x32xf32> -> vector<16x32xf32>
    %107 = vector.broadcast %43 : vector<16x1xf32> to vector<16x32xf32>
    %108 = arith.addf %106, %107 : vector<16x32xf32>
    %cst_32 = arith.constant 0.000000e+00 : f32
    %109 = vector.broadcast %cst_32 : f32 to vector<16x32xf32>
    %110 = arith.cmpf oge, %108, %109 : vector<16x32xf32>
    %111 = vector.broadcast %44 : f32 to vector<16x32xf32>
    %112 = arith.mulf %111, %108 : vector<16x32xf32>
    %113 = arith.select %110, %108, %112 : vector<16x32xi1>, vector<16x32xf32>
    %c0_33 = arith.constant 0 : index
    %c0_34 = arith.constant 0 : index
    %114 = vector.load %arg5[%c0_33, %c0_34] : memref<16x32xf32, #tpu.memory_space<vmem>>, vector<16x32xf32>
    tpu.vector_store %arg5[%c0_33, %c0_34], %113 {strides = array<i32>} : memref<16x32xf32, #tpu.memory_space<vmem>>, vector<16x32xf32>,
    return
  }
  func.func @transform_0(%arg0: i32) -> (i32, i32) {
    %c0_i32 = arith.constant 0 : i32
    %c0_i32_0 = arith.constant 0 : i32
    %c0_i32_1 = arith.constant 0 : i32
    return %c0_i32, %c0_i32_0 : i32, i32
  }
  func.func @transform_1(%arg0: i32) -> (i32, i32) {
    %c0_i32 = arith.constant 0 : i32
    %c0_i32_0 = arith.constant 0 : i32
    %c0_i32_1 = arith.constant 0 : i32
    return %c0_i32, %c0_i32_0 : i32, i32
  }
  func.func @transform_2(%arg0: i32) -> (i32, i32) {
    %c0_i32 = arith.constant 0 : i32
    %c0_i32_0 = arith.constant 0 : i32
    %c0_i32_1 = arith.constant 0 : i32
    return %c0_i32, %c0_i32_0 : i32, i32
  }
  func.func @transform_3(%arg0: i32) -> i32 {
    %c0_i32 = arith.constant 0 : i32
    %c0_i32_0 = arith.constant 0 : i32
    return %c0_i32 : i32
  }
  func.func @transform_4(%arg0: i32) -> (i32, i32) {
    %c0_i32 = arith.constant 0 : i32
    %c0_i32_0 = arith.constant 0 : i32
    %c0_i32_1 = arith.constant 0 : i32
    return %c0_i32, %c0_i32_0 : i32, i32
  }
}

module attributes {stable_mosaic.version = 11 : i64} {
  func.func @_conv_kernel(%arg0: i32, %arg1: memref<16x32xf32, #tpu.memory_space<vmem>>, %arg2: memref<16x144xf32, #tpu.memory_space<vmem>>, %arg3: memref<16x1xf32, #tpu.memory_space<vmem>>, %arg4: memref<1xf32, #tpu.memory_space<smem>>, %arg5: memref<16x32xf32, #tpu.memory_space<vmem>>) attributes {dimension_semantics = [#tpu.dimension_semantics<arbitrary>], iteration_bounds = array<i64: 1>, scalar_prefetch = 0 : i64, scratch_operands = 0 : i64, tpu.core_type = #tpu.core_type<tc>, window_params = [{pipeline_mode = #tpu.pipeline_mode<synchronous>, transform_indices = @transform_0, window_bounds = array<i64: 16, 32>}, {pipeline_mode = #tpu.pipeline_mode<synchronous>, transform_indices = @transform_1, window_bounds = array<i64: 16, 144>}, {pipeline_mode = #tpu.pipeline_mode<synchronous>, transform_indices = @transform_2, window_bounds = array<i64: 16, 1>}, {transform_indices = @transform_3, window_bounds = array<i64: 1>}, {pipeline_mode = #tpu.pipeline_mode<synchronous>, transform_indices = @transform_4, window_bounds = array<i64: 16, 32>}]} {
    %c0 = arith.constant 0 : index
    %c0_0 = arith.constant 0 : index
    %0 = vector.load %arg1[%c0, %c0_0] : memref<16x32xf32, #tpu.memory_space<vmem>>, vector<16x32xf32>
    %1 = tpu.iota {dimensions = array<i32: 1>} : vector<1x32xi32>
    %c16_i32 = arith.constant 16 : i32
    %c0_i32 = arith.constant 0 : i32
    %2 = arith.cmpi eq, %c16_i32, %c0_i32 : i32
    %c1_i32 = arith.constant 1 : i32
    %3 = arith.select %2, %c1_i32, %c16_i32 : i32
    %4 = vector.broadcast %3 : i32 to vector<1x32xi32>
    %5 = arith.remsi %1, %4 : vector<1x32xi32>
    %c0_i32_1 = arith.constant 0 : i32
    %6 = vector.broadcast %c0_i32_1 : i32 to vector<1x32xi32>
    %7 = arith.cmpi ne, %5, %6 : vector<1x32xi32>
    %c0_i32_2 = arith.constant 0 : i32
    %8 = vector.broadcast %c0_i32_2 : i32 to vector<1x32xi32>
    %9 = arith.cmpi slt, %5, %8 : vector<1x32xi32>
    %c0_i32_3 = arith.constant 0 : i32
    %10 = arith.cmpi slt, %3, %c0_i32_3 : i32
    %11 = vector.broadcast %10 : i1 to vector<1x32xi1>
    %12 = vector.broadcast %11 : vector<1x32xi1> to vector<1x32xi1>
    %13 = arith.xori %9, %12 : vector<1x32xi1>
    %14 = arith.andi %13, %7 : vector<1x32xi1>
    %15 = vector.broadcast %3 : i32 to vector<1x32xi32>
    %16 = arith.addi %5, %15 : vector<1x32xi32>
    %17 = arith.select %14, %16, %5 : vector<1x32xi1>, vector<1x32xi32>
    %c4_i32 = arith.constant 4 : i32
    %c0_i32_4 = arith.constant 0 : i32
    %18 = arith.cmpi eq, %c4_i32, %c0_i32_4 : i32
    %c1_i32_5 = arith.constant 1 : i32
    %19 = arith.select %18, %c1_i32_5, %c4_i32 : i32
    %20 = vector.broadcast %19 : i32 to vector<1x32xi32>
    %21 = arith.remsi %1, %20 : vector<1x32xi32>
    %c0_i32_6 = arith.constant 0 : i32
    %22 = vector.broadcast %c0_i32_6 : i32 to vector<1x32xi32>
    %23 = arith.cmpi ne, %21, %22 : vector<1x32xi32>
    %c0_i32_7 = arith.constant 0 : i32
    %24 = vector.broadcast %c0_i32_7 : i32 to vector<1x32xi32>
    %25 = arith.cmpi slt, %21, %24 : vector<1x32xi32>
    %c0_i32_8 = arith.constant 0 : i32
    %26 = arith.cmpi slt, %19, %c0_i32_8 : i32
    %27 = vector.broadcast %26 : i1 to vector<1x32xi1>
    %28 = vector.broadcast %27 : vector<1x32xi1> to vector<1x32xi1>
    %29 = arith.xori %25, %28 : vector<1x32xi1>
    %30 = arith.andi %29, %23 : vector<1x32xi1>
    %31 = vector.broadcast %19 : i32 to vector<1x32xi32>
    %32 = arith.addi %21, %31 : vector<1x32xi32>
    %33 = arith.select %30, %32, %21 : vector<1x32xi1>, vector<1x32xi32>
    %c4_i32_9 = arith.constant 4 : i32
    %34 = vector.broadcast %c4_i32_9 : i32 to vector<1x32xi32>
    %35 = arith.cmpi sge, %17, %34 : vector<1x32xi32>
    %c12_i32 = arith.constant 12 : i32
    %36 = vector.broadcast %c12_i32 : i32 to vector<1x32xi32>
    %37 = arith.cmpi slt, %17, %36 : vector<1x32xi32>
    %c0_i32_10 = arith.constant 0 : i32
    %38 = vector.broadcast %c0_i32_10 : i32 to vector<1x32xi32>
    %39 = arith.cmpi ne, %33, %38 : vector<1x32xi32>
    %c3_i32 = arith.constant 3 : i32
    %40 = vector.broadcast %c3_i32 : i32 to vector<1x32xi32>
    %41 = arith.cmpi ne, %33, %40 : vector<1x32xi32>
    %c0_11 = arith.constant 0 : index
    %c0_12 = arith.constant 0 : index
    %42 = vector.load %arg2[%c0_11, %c0_12] : memref<16x144xf32, #tpu.memory_space<vmem>>, vector<16x144xf32>
    %c0_13 = arith.constant 0 : index
    %c0_14 = arith.constant 0 : index
    %43 = vector.load %arg3[%c0_13, %c0_14] : memref<16x1xf32, #tpu.memory_space<vmem>>, vector<16x1xf32>
    %c0_15 = arith.constant 0 : index
    %44 = memref.load %arg4[%c0_15] : memref<1xf32, #tpu.memory_space<smem>>
    %cst = arith.constant 0.000000e+00 : f32
    %45 = vector.broadcast %cst : f32 to vector<16x5xf32>
    %46 = vector.extract_strided_slice %0 {offsets = [0, 0], sizes = [16, 27], strides = [1, 1]} : vector<16x32xf32> to vector<16x27xf32>
    %47 = tpu.concatenate %45, %46 in 1 : vector<16x5xf32>, vector<16x27xf32> -> vector<16x32xf32>
    %48 = arith.andi %35, %39 : vector<1x32xi1>
    %cst_16 = arith.constant 0.000000e+00 : f32
    %49 = vector.shape_cast %48 : vector<1x32xi1> to vector<1x32xi1>
    %50 = vector.broadcast %49 : vector<1x32xi1> to vector<16x32xi1>
    %51 = vector.broadcast %cst_16 : f32 to vector<16x32xf32>
    %52 = arith.select %50, %47, %51 : vector<16x32xi1>, vector<16x32xf32>
    %cst_17 = arith.constant 0.000000e+00 : f32
    %53 = vector.broadcast %cst_17 : f32 to vector<16x4xf32>
    %54 = vector.extract_strided_slice %0 {offsets = [0, 0], sizes = [16, 28], strides = [1, 1]} : vector<16x32xf32> to vector<16x28xf32>
    %55 = tpu.concatenate %53, %54 in 1 : vector<16x4xf32>, vector<16x28xf32> -> vector<16x32xf32>
    %cst_18 = arith.constant 0.000000e+00 : f32
    %56 = vector.shape_cast %35 : vector<1x32xi1> to vector<1x32xi1>
    %57 = vector.broadcast %56 : vector<1x32xi1> to vector<16x32xi1>
    %58 = vector.broadcast %cst_18 : f32 to vector<16x32xf32>
    %59 = arith.select %57, %55, %58 : vector<16x32xi1>, vector<16x32xf32>
    %cst_19 = arith.constant 0.000000e+00 : f32
    %60 = vector.broadcast %cst_19 : f32 to vector<16x3xf32>
    %61 = vector.extract_strided_slice %0 {offsets = [0, 0], sizes = [16, 29], strides = [1, 1]} : vector<16x32xf32> to vector<16x29xf32>
    %62 = tpu.concatenate %60, %61 in 1 : vector<16x3xf32>, vector<16x29xf32> -> vector<16x32xf32>
    %63 = arith.andi %35, %41 : vector<1x32xi1>
    %cst_20 = arith.constant 0.000000e+00 : f32
    %64 = vector.shape_cast %63 : vector<1x32xi1> to vector<1x32xi1>
    %65 = vector.broadcast %64 : vector<1x32xi1> to vector<16x32xi1>
    %66 = vector.broadcast %cst_20 : f32 to vector<16x32xf32>
    %67 = arith.select %65, %62, %66 : vector<16x32xi1>, vector<16x32xf32>
    %cst_21 = arith.constant 0.000000e+00 : f32
    %68 = vector.broadcast %cst_21 : f32 to vector<16x1xf32>
    %69 = vector.extract_strided_slice %0 {offsets = [0, 0], sizes = [16, 31], strides = [1, 1]} : vector<16x32xf32> to vector<16x31xf32>
    %70 = tpu.concatenate %68, %69 in 1 : vector<16x1xf32>, vector<16x31xf32> -> vector<16x32xf32>
    %cst_22 = arith.constant 0.000000e+00 : f32
    %71 = vector.shape_cast %39 : vector<1x32xi1> to vector<1x32xi1>
    %72 = vector.broadcast %71 : vector<1x32xi1> to vector<16x32xi1>
    %73 = vector.broadcast %cst_22 : f32 to vector<16x32xf32>
    %74 = arith.select %72, %70, %73 : vector<16x32xi1>, vector<16x32xf32>
    %75 = vector.extract_strided_slice %0 {offsets = [0, 1], sizes = [16, 31], strides = [1, 1]} : vector<16x32xf32> to vector<16x31xf32>
    %cst_23 = arith.constant 0.000000e+00 : f32
    %76 = vector.broadcast %cst_23 : f32 to vector<16x1xf32>
    %77 = tpu.concatenate %75, %76 in 1 : vector<16x31xf32>, vector<16x1xf32> -> vector<16x32xf32>
    %cst_24 = arith.constant 0.000000e+00 : f32
    %78 = vector.shape_cast %41 : vector<1x32xi1> to vector<1x32xi1>
    %79 = vector.broadcast %78 : vector<1x32xi1> to vector<16x32xi1>
    %80 = vector.broadcast %cst_24 : f32 to vector<16x32xf32>
    %81 = arith.select %79, %77, %80 : vector<16x32xi1>, vector<16x32xf32>
    %82 = vector.extract_strided_slice %0 {offsets = [0, 3], sizes = [16, 29], strides = [1, 1]} : vector<16x32xf32> to vector<16x29xf32>
    %cst_25 = arith.constant 0.000000e+00 : f32
    %83 = vector.broadcast %cst_25 : f32 to vector<16x3xf32>
    %84 = tpu.concatenate %82, %83 in 1 : vector<16x29xf32>, vector<16x3xf32> -> vector<16x32xf32>
    %85 = arith.andi %37, %39 : vector<1x32xi1>
    %cst_26 = arith.constant 0.000000e+00 : f32
    %86 = vector.shape_cast %85 : vector<1x32xi1> to vector<1x32xi1>
    %87 = vector.broadcast %86 : vector<1x32xi1> to vector<16x32xi1>
    %88 = vector.broadcast %cst_26 : f32 to vector<16x32xf32>
    %89 = arith.select %87, %84, %88 : vector<16x32xi1>, vector<16x32xf32>
    %90 = vector.extract_strided_slice %0 {offsets = [0, 4], sizes = [16, 28], strides = [1, 1]} : vector<16x32xf32> to vector<16x28xf32>
    %cst_27 = arith.constant 0.000000e+00 : f32
    %91 = vector.broadcast %cst_27 : f32 to vector<16x4xf32>
    %92 = tpu.concatenate %90, %91 in 1 : vector<16x28xf32>, vector<16x4xf32> -> vector<16x32xf32>
    %cst_28 = arith.constant 0.000000e+00 : f32
    %93 = vector.shape_cast %37 : vector<1x32xi1> to vector<1x32xi1>
    %94 = vector.broadcast %93 : vector<1x32xi1> to vector<16x32xi1>
    %95 = vector.broadcast %cst_28 : f32 to vector<16x32xf32>
    %96 = arith.select %94, %92, %95 : vector<16x32xi1>, vector<16x32xf32>
    %97 = vector.extract_strided_slice %0 {offsets = [0, 5], sizes = [16, 27], strides = [1, 1]} : vector<16x32xf32> to vector<16x27xf32>
    %cst_29 = arith.constant 0.000000e+00 : f32
    %98 = vector.broadcast %cst_29 : f32 to vector<16x5xf32>
    %99 = tpu.concatenate %97, %98 in 1 : vector<16x27xf32>, vector<16x5xf32> -> vector<16x32xf32>
    %100 = arith.andi %37, %41 : vector<1x32xi1>
    %cst_30 = arith.constant 0.000000e+00 : f32
    %101 = vector.shape_cast %100 : vector<1x32xi1> to vector<1x32xi1>
    %102 = vector.broadcast %101 : vector<1x32xi1> to vector<16x32xi1>
    %103 = vector.broadcast %cst_30 : f32 to vector<16x32xf32>
    %104 = arith.select %102, %99, %103 : vector<16x32xi1>, vector<16x32xf32>
    %105 = tpu.concatenate %52, %59, %67, %74, %0, %81, %89, %96, %104 in 0 : vector<16x32xf32>, vector<16x32xf32>, vector<16x32xf32>, vector<16x32xf32>, vector<16x32xf32>, vector<16x32xf32>, vector<16x32xf32>, vector<16x32xf32>, vector<16x32xf32> -> vector<144x32xf32>
    %cst_31 = arith.constant dense<0.000000e+00> : vector<16x32xf32>
    %106 = tpu.matmul %42, %105, %cst_31 {dimension_numbers = #tpu.dot_dimension_numbers<[1], [0], [0], [1], [0, 0, 1, 1], [], []>} : vector<16x144xf32>, vector<144x32xf32>, vector<16x32xf32> -> vector<16x32xf32>
    %107 = vector.broadcast %43 : vector<16x1xf32> to vector<16x32xf32>
    %108 = arith.addf %106, %107 : vector<16x32xf32>
    %cst_32 = arith.constant 0.000000e+00 : f32
    %109 = vector.broadcast %cst_32 : f32 to vector<16x32xf32>
    %110 = arith.cmpf oge, %108, %109 : vector<16x32xf32>
    %111 = vector.broadcast %44 : f32 to vector<16x32xf32>
    %112 = arith.mulf %111, %108 : vector<16x32xf32>
    %113 = arith.select %110, %108, %112 : vector<16x32xi1>, vector<16x32xf32>
    %114 = arith.addf %113, %0 : vector<16x32xf32>
    %c0_33 = arith.constant 0 : index
    %c0_34 = arith.constant 0 : index
    %115 = vector.load %arg5[%c0_33, %c0_34] : memref<16x32xf32, #tpu.memory_space<vmem>>, vector<16x32xf32>
    tpu.vector_store %arg5[%c0_33, %c0_34], %114 {strides = array<i32>} : memref<16x32xf32, #tpu.memory_space<vmem>>, vector<16x32xf32>,
    return
  }
  func.func @transform_0(%arg0: i32) -> (i32, i32) {
    %c0_i32 = arith.constant 0 : i32
    %c0_i32_0 = arith.constant 0 : i32
    %c0_i32_1 = arith.constant 0 : i32
    return %c0_i32, %c0_i32_0 : i32, i32
  }
  func.func @transform_1(%arg0: i32) -> (i32, i32) {
    %c0_i32 = arith.constant 0 : i32
    %c0_i32_0 = arith.constant 0 : i32
    %c0_i32_1 = arith.constant 0 : i32
    return %c0_i32, %c0_i32_0 : i32, i32
  }
  func.func @transform_2(%arg0: i32) -> (i32, i32) {
    %c0_i32 = arith.constant 0 : i32
    %c0_i32_0 = arith.constant 0 : i32
    %c0_i32_1 = arith.constant 0 : i32
    return %c0_i32, %c0_i32_0 : i32, i32
  }
  func.func @transform_3(%arg0: i32) -> i32 {
    %c0_i32 = arith.constant 0 : i32
    %c0_i32_0 = arith.constant 0 : i32
    return %c0_i32 : i32
  }
  func.func @transform_4(%arg0: i32) -> (i32, i32) {
    %c0_i32 = arith.constant 0 : i32
    %c0_i32_0 = arith.constant 0 : i32
    %c0_i32_1 = arith.constant 0 : i32
    return %c0_i32, %c0_i32_0 : i32, i32
  }
}

module attributes {stable_mosaic.version = 11 : i64} {
  func.func @_conv_kernel(%arg0: i32, %arg1: memref<16x32xf32, #tpu.memory_space<vmem>>, %arg2: memref<32x16xf32, #tpu.memory_space<vmem>>, %arg3: memref<32x1xf32, #tpu.memory_space<vmem>>, %arg4: memref<1xf32, #tpu.memory_space<smem>>, %arg5: memref<32x32xf32, #tpu.memory_space<vmem>>) attributes {dimension_semantics = [#tpu.dimension_semantics<arbitrary>], iteration_bounds = array<i64: 1>, scalar_prefetch = 0 : i64, scratch_operands = 0 : i64, tpu.core_type = #tpu.core_type<tc>, window_params = [{pipeline_mode = #tpu.pipeline_mode<synchronous>, transform_indices = @transform_0, window_bounds = array<i64: 16, 32>}, {pipeline_mode = #tpu.pipeline_mode<synchronous>, transform_indices = @transform_1, window_bounds = array<i64: 32, 16>}, {pipeline_mode = #tpu.pipeline_mode<synchronous>, transform_indices = @transform_2, window_bounds = array<i64: 32, 1>}, {transform_indices = @transform_3, window_bounds = array<i64: 1>}, {pipeline_mode = #tpu.pipeline_mode<synchronous>, transform_indices = @transform_4, window_bounds = array<i64: 32, 32>}]} {
    %c0 = arith.constant 0 : index
    %c0_0 = arith.constant 0 : index
    %0 = vector.load %arg1[%c0, %c0_0] : memref<16x32xf32, #tpu.memory_space<vmem>>, vector<16x32xf32>
    %c0_1 = arith.constant 0 : index
    %c0_2 = arith.constant 0 : index
    %1 = vector.load %arg2[%c0_1, %c0_2] : memref<32x16xf32, #tpu.memory_space<vmem>>, vector<32x16xf32>
    %c0_3 = arith.constant 0 : index
    %c0_4 = arith.constant 0 : index
    %2 = vector.load %arg3[%c0_3, %c0_4] : memref<32x1xf32, #tpu.memory_space<vmem>>, vector<32x1xf32>
    %cst = arith.constant dense<0.000000e+00> : vector<32x32xf32>
    %3 = tpu.matmul %1, %0, %cst {dimension_numbers = #tpu.dot_dimension_numbers<[1], [0], [0], [1], [0, 0, 1, 1], [], []>} : vector<32x16xf32>, vector<16x32xf32>, vector<32x32xf32> -> vector<32x32xf32>
    %4 = vector.broadcast %2 : vector<32x1xf32> to vector<32x32xf32>
    %5 = arith.addf %3, %4 : vector<32x32xf32>
    %c0_5 = arith.constant 0 : index
    %c0_6 = arith.constant 0 : index
    %6 = vector.load %arg5[%c0_5, %c0_6] : memref<32x32xf32, #tpu.memory_space<vmem>>, vector<32x32xf32>
    tpu.vector_store %arg5[%c0_5, %c0_6], %5 {strides = array<i32>} : memref<32x32xf32, #tpu.memory_space<vmem>>, vector<32x32xf32>,
    return
  }
  func.func @transform_0(%arg0: i32) -> (i32, i32) {
    %c0_i32 = arith.constant 0 : i32
    %c0_i32_0 = arith.constant 0 : i32
    %c0_i32_1 = arith.constant 0 : i32
    return %c0_i32, %c0_i32_0 : i32, i32
  }
  func.func @transform_1(%arg0: i32) -> (i32, i32) {
    %c0_i32 = arith.constant 0 : i32
    %c0_i32_0 = arith.constant 0 : i32
    %c0_i32_1 = arith.constant 0 : i32
    return %c0_i32, %c0_i32_0 : i32, i32
  }
  func.func @transform_2(%arg0: i32) -> (i32, i32) {
    %c0_i32 = arith.constant 0 : i32
    %c0_i32_0 = arith.constant 0 : i32
    %c0_i32_1 = arith.constant 0 : i32
    return %c0_i32, %c0_i32_0 : i32, i32
  }
  func.func @transform_3(%arg0: i32) -> i32 {
    %c0_i32 = arith.constant 0 : i32
    %c0_i32_0 = arith.constant 0 : i32
    return %c0_i32 : i32
  }
  func.func @transform_4(%arg0: i32) -> (i32, i32) {
    %c0_i32 = arith.constant 0 : i32
    %c0_i32_0 = arith.constant 0 : i32
    %c0_i32_1 = arith.constant 0 : i32
    return %c0_i32, %c0_i32_0 : i32, i32
  }
}

module attributes {stable_mosaic.version = 11 : i64} {
  func.func @_conv1x1_cat_kernel(%arg0: i32, %arg1: memref<8x128xf32, #tpu.memory_space<vmem>>, %arg2: memref<8x128xf32, #tpu.memory_space<vmem>>, %arg3: memref<8x8xf32, #tpu.memory_space<vmem>>, %arg4: memref<8x8xf32, #tpu.memory_space<vmem>>, %arg5: memref<8x1xf32, #tpu.memory_space<vmem>>, %arg6: memref<8x128xf32, #tpu.memory_space<vmem>>) attributes {dimension_semantics = [#tpu.dimension_semantics<arbitrary>], iteration_bounds = array<i64: 1>, scalar_prefetch = 0 : i64, scratch_operands = 0 : i64, tpu.core_type = #tpu.core_type<tc>, window_params = [{pipeline_mode = #tpu.pipeline_mode<synchronous>, transform_indices = @transform_0, window_bounds = array<i64: 8, 128>}, {pipeline_mode = #tpu.pipeline_mode<synchronous>, transform_indices = @transform_1, window_bounds = array<i64: 8, 128>}, {pipeline_mode = #tpu.pipeline_mode<synchronous>, transform_indices = @transform_2, window_bounds = array<i64: 8, 8>}, {pipeline_mode = #tpu.pipeline_mode<synchronous>, transform_indices = @transform_3, window_bounds = array<i64: 8, 8>}, {pipeline_mode = #tpu.pipeline_mode<synchronous>, transform_indices = @transform_4, window_bounds = array<i64: 8, 1>}, {pipeline_mode = #tpu.pipeline_mode<synchronous>, transform_indices = @transform_5, window_bounds = array<i64: 8, 128>}]} {
    %c0 = arith.constant 0 : index
    %c0_0 = arith.constant 0 : index
    %0 = vector.load %arg3[%c0, %c0_0] : memref<8x8xf32, #tpu.memory_space<vmem>>, vector<8x8xf32>
    %c0_1 = arith.constant 0 : index
    %c0_2 = arith.constant 0 : index
    %1 = vector.load %arg1[%c0_1, %c0_2] : memref<8x128xf32, #tpu.memory_space<vmem>>, vector<8x128xf32>
    %cst = arith.constant dense<0.000000e+00> : vector<8x128xf32>
    %2 = tpu.matmul %0, %1, %cst {dimension_numbers = #tpu.dot_dimension_numbers<[1], [0], [0], [1], [0, 0, 1, 1], [], []>} : vector<8x8xf32>, vector<8x128xf32>, vector<8x128xf32> -> vector<8x128xf32>
    %c0_3 = arith.constant 0 : index
    %c0_4 = arith.constant 0 : index
    %3 = vector.load %arg4[%c0_3, %c0_4] : memref<8x8xf32, #tpu.memory_space<vmem>>, vector<8x8xf32>
    %c0_5 = arith.constant 0 : index
    %c0_6 = arith.constant 0 : index
    %4 = vector.load %arg2[%c0_5, %c0_6] : memref<8x128xf32, #tpu.memory_space<vmem>>, vector<8x128xf32>
    %cst_7 = arith.constant dense<0.000000e+00> : vector<8x128xf32>
    %5 = tpu.matmul %3, %4, %cst_7 {dimension_numbers = #tpu.dot_dimension_numbers<[1], [0], [0], [1], [0, 0, 1, 1], [], []>} : vector<8x8xf32>, vector<8x128xf32>, vector<8x128xf32> -> vector<8x128xf32>
    %6 = arith.addf %2, %5 : vector<8x128xf32>
    %c0_8 = arith.constant 0 : index
    %c0_9 = arith.constant 0 : index
    %7 = vector.load %arg5[%c0_8, %c0_9] : memref<8x1xf32, #tpu.memory_space<vmem>>, vector<8x1xf32>
    %8 = vector.broadcast %7 : vector<8x1xf32> to vector<8x128xf32>
    %9 = arith.addf %6, %8 : vector<8x128xf32>
    %c0_10 = arith.constant 0 : index
    %c0_11 = arith.constant 0 : index
    %10 = vector.load %arg6[%c0_10, %c0_11] : memref<8x128xf32, #tpu.memory_space<vmem>>, vector<8x128xf32>
    tpu.vector_store %arg6[%c0_10, %c0_11], %9 {strides = array<i32>} : memref<8x128xf32, #tpu.memory_space<vmem>>, vector<8x128xf32>,
    return
  }
  func.func @transform_0(%arg0: i32) -> (i32, i32) {
    %c0_i32 = arith.constant 0 : i32
    %c0_i32_0 = arith.constant 0 : i32
    %c0_i32_1 = arith.constant 0 : i32
    return %c0_i32, %c0_i32_0 : i32, i32
  }
  func.func @transform_1(%arg0: i32) -> (i32, i32) {
    %c0_i32 = arith.constant 0 : i32
    %c0_i32_0 = arith.constant 0 : i32
    %c0_i32_1 = arith.constant 0 : i32
    return %c0_i32, %c0_i32_0 : i32, i32
  }
  func.func @transform_2(%arg0: i32) -> (i32, i32) {
    %c0_i32 = arith.constant 0 : i32
    %c0_i32_0 = arith.constant 0 : i32
    %c0_i32_1 = arith.constant 0 : i32
    return %c0_i32, %c0_i32_0 : i32, i32
  }
  func.func @transform_3(%arg0: i32) -> (i32, i32) {
    %c0_i32 = arith.constant 0 : i32
    %c0_i32_0 = arith.constant 0 : i32
    %c0_i32_1 = arith.constant 0 : i32
    return %c0_i32, %c0_i32_0 : i32, i32
  }
  func.func @transform_4(%arg0: i32) -> (i32, i32) {
    %c0_i32 = arith.constant 0 : i32
    %c0_i32_0 = arith.constant 0 : i32
    %c0_i32_1 = arith.constant 0 : i32
    return %c0_i32, %c0_i32_0 : i32, i32
  }
  func.func @transform_5(%arg0: i32) -> (i32, i32) {
    %c0_i32 = arith.constant 0 : i32
    %c0_i32_0 = arith.constant 0 : i32
    %c0_i32_1 = arith.constant 0 : i32
    return %c0_i32, %c0_i32_0 : i32, i32
  }
}

module attributes {stable_mosaic.version = 11 : i64} {
  func.func @_conv_kernel(%arg0: i32, %arg1: memref<8x128xf32, #tpu.memory_space<vmem>>, %arg2: memref<16x8xf32, #tpu.memory_space<vmem>>, %arg3: memref<16x1xf32, #tpu.memory_space<vmem>>, %arg4: memref<1xf32, #tpu.memory_space<smem>>, %arg5: memref<16x128xf32, #tpu.memory_space<vmem>>) attributes {dimension_semantics = [#tpu.dimension_semantics<arbitrary>], iteration_bounds = array<i64: 1>, scalar_prefetch = 0 : i64, scratch_operands = 0 : i64, tpu.core_type = #tpu.core_type<tc>, window_params = [{pipeline_mode = #tpu.pipeline_mode<synchronous>, transform_indices = @transform_0, window_bounds = array<i64: 8, 128>}, {pipeline_mode = #tpu.pipeline_mode<synchronous>, transform_indices = @transform_1, window_bounds = array<i64: 16, 8>}, {pipeline_mode = #tpu.pipeline_mode<synchronous>, transform_indices = @transform_2, window_bounds = array<i64: 16, 1>}, {transform_indices = @transform_3, window_bounds = array<i64: 1>}, {pipeline_mode = #tpu.pipeline_mode<synchronous>, transform_indices = @transform_4, window_bounds = array<i64: 16, 128>}]} {
    %c0 = arith.constant 0 : index
    %c0_0 = arith.constant 0 : index
    %0 = vector.load %arg1[%c0, %c0_0] : memref<8x128xf32, #tpu.memory_space<vmem>>, vector<8x128xf32>
    %c0_1 = arith.constant 0 : index
    %c0_2 = arith.constant 0 : index
    %1 = vector.load %arg2[%c0_1, %c0_2] : memref<16x8xf32, #tpu.memory_space<vmem>>, vector<16x8xf32>
    %c0_3 = arith.constant 0 : index
    %c0_4 = arith.constant 0 : index
    %2 = vector.load %arg3[%c0_3, %c0_4] : memref<16x1xf32, #tpu.memory_space<vmem>>, vector<16x1xf32>
    %cst = arith.constant dense<0.000000e+00> : vector<16x128xf32>
    %3 = tpu.matmul %1, %0, %cst {dimension_numbers = #tpu.dot_dimension_numbers<[1], [0], [0], [1], [0, 0, 1, 1], [], []>} : vector<16x8xf32>, vector<8x128xf32>, vector<16x128xf32> -> vector<16x128xf32>
    %4 = vector.broadcast %2 : vector<16x1xf32> to vector<16x128xf32>
    %5 = arith.addf %3, %4 : vector<16x128xf32>
    %c0_5 = arith.constant 0 : index
    %c0_6 = arith.constant 0 : index
    %6 = vector.load %arg5[%c0_5, %c0_6] : memref<16x128xf32, #tpu.memory_space<vmem>>, vector<16x128xf32>
    tpu.vector_store %arg5[%c0_5, %c0_6], %5 {strides = array<i32>} : memref<16x128xf32, #tpu.memory_space<vmem>>, vector<16x128xf32>,
    return
  }
  func.func @transform_0(%arg0: i32) -> (i32, i32) {
    %c0_i32 = arith.constant 0 : i32
    %c0_i32_0 = arith.constant 0 : i32
    %c0_i32_1 = arith.constant 0 : i32
    return %c0_i32, %c0_i32_0 : i32, i32
  }
  func.func @transform_1(%arg0: i32) -> (i32, i32) {
    %c0_i32 = arith.constant 0 : i32
    %c0_i32_0 = arith.constant 0 : i32
    %c0_i32_1 = arith.constant 0 : i32
    return %c0_i32, %c0_i32_0 : i32, i32
  }
  func.func @transform_2(%arg0: i32) -> (i32, i32) {
    %c0_i32 = arith.constant 0 : i32
    %c0_i32_0 = arith.constant 0 : i32
    %c0_i32_1 = arith.constant 0 : i32
    return %c0_i32, %c0_i32_0 : i32, i32
  }
  func.func @transform_3(%arg0: i32) -> i32 {
    %c0_i32 = arith.constant 0 : i32
    %c0_i32_0 = arith.constant 0 : i32
    return %c0_i32 : i32
  }
  func.func @transform_4(%arg0: i32) -> (i32, i32) {
    %c0_i32 = arith.constant 0 : i32
    %c0_i32_0 = arith.constant 0 : i32
    %c0_i32_1 = arith.constant 0 : i32
    return %c0_i32, %c0_i32_0 : i32, i32
  }
}

module attributes {stable_mosaic.version = 11 : i64} {
  func.func @_conv_kernel(%arg0: i32, %arg1: memref<4x512xf32, #tpu.memory_space<vmem>>, %arg2: memref<4x36xf32, #tpu.memory_space<vmem>>, %arg3: memref<4x1xf32, #tpu.memory_space<vmem>>, %arg4: memref<1xf32, #tpu.memory_space<smem>>, %arg5: memref<4x512xf32, #tpu.memory_space<vmem>>, %arg6: memref<4x512xf32, #tpu.memory_space<vmem>>) attributes {dimension_semantics = [#tpu.dimension_semantics<arbitrary>], iteration_bounds = array<i64: 1>, scalar_prefetch = 0 : i64, scratch_operands = 0 : i64, tpu.core_type = #tpu.core_type<tc>, window_params = [{pipeline_mode = #tpu.pipeline_mode<synchronous>, transform_indices = @transform_0, window_bounds = array<i64: 4, 512>}, {pipeline_mode = #tpu.pipeline_mode<synchronous>, transform_indices = @transform_1, window_bounds = array<i64: 4, 36>}, {pipeline_mode = #tpu.pipeline_mode<synchronous>, transform_indices = @transform_2, window_bounds = array<i64: 4, 1>}, {transform_indices = @transform_3, window_bounds = array<i64: 1>}, {pipeline_mode = #tpu.pipeline_mode<synchronous>, transform_indices = @transform_4, window_bounds = array<i64: 4, 512>}, {pipeline_mode = #tpu.pipeline_mode<synchronous>, transform_indices = @transform_5, window_bounds = array<i64: 4, 512>}]} {
    %c0 = arith.constant 0 : index
    %c0_0 = arith.constant 0 : index
    %0 = vector.load %arg1[%c0, %c0_0] : memref<4x512xf32, #tpu.memory_space<vmem>>, vector<4x512xf32>
    %1 = tpu.iota {dimensions = array<i32: 1>} : vector<1x512xi32>
    %c256_i32 = arith.constant 256 : i32
    %c0_i32 = arith.constant 0 : i32
    %2 = arith.cmpi eq, %c256_i32, %c0_i32 : i32
    %c1_i32 = arith.constant 1 : i32
    %3 = arith.select %2, %c1_i32, %c256_i32 : i32
    %4 = vector.broadcast %3 : i32 to vector<1x512xi32>
    %5 = arith.remsi %1, %4 : vector<1x512xi32>
    %c0_i32_1 = arith.constant 0 : i32
    %6 = vector.broadcast %c0_i32_1 : i32 to vector<1x512xi32>
    %7 = arith.cmpi ne, %5, %6 : vector<1x512xi32>
    %c0_i32_2 = arith.constant 0 : i32
    %8 = vector.broadcast %c0_i32_2 : i32 to vector<1x512xi32>
    %9 = arith.cmpi slt, %5, %8 : vector<1x512xi32>
    %c0_i32_3 = arith.constant 0 : i32
    %10 = arith.cmpi slt, %3, %c0_i32_3 : i32
    %11 = vector.broadcast %10 : i1 to vector<1x512xi1>
    %12 = vector.broadcast %11 : vector<1x512xi1> to vector<1x512xi1>
    %13 = arith.xori %9, %12 : vector<1x512xi1>
    %14 = arith.andi %13, %7 : vector<1x512xi1>
    %15 = vector.broadcast %3 : i32 to vector<1x512xi32>
    %16 = arith.addi %5, %15 : vector<1x512xi32>
    %17 = arith.select %14, %16, %5 : vector<1x512xi1>, vector<1x512xi32>
    %c16_i32 = arith.constant 16 : i32
    %c0_i32_4 = arith.constant 0 : i32
    %18 = arith.cmpi eq, %c16_i32, %c0_i32_4 : i32
    %c1_i32_5 = arith.constant 1 : i32
    %19 = arith.select %18, %c1_i32_5, %c16_i32 : i32
    %20 = vector.broadcast %19 : i32 to vector<1x512xi32>
    %21 = arith.remsi %1, %20 : vector<1x512xi32>
    %c0_i32_6 = arith.constant 0 : i32
    %22 = vector.broadcast %c0_i32_6 : i32 to vector<1x512xi32>
    %23 = arith.cmpi ne, %21, %22 : vector<1x512xi32>
    %c0_i32_7 = arith.constant 0 : i32
    %24 = vector.broadcast %c0_i32_7 : i32 to vector<1x512xi32>
    %25 = arith.cmpi slt, %21, %24 : vector<1x512xi32>
    %c0_i32_8 = arith.constant 0 : i32
    %26 = arith.cmpi slt, %19, %c0_i32_8 : i32
    %27 = vector.broadcast %26 : i1 to vector<1x512xi1>
    %28 = vector.broadcast %27 : vector<1x512xi1> to vector<1x512xi1>
    %29 = arith.xori %25, %28 : vector<1x512xi1>
    %30 = arith.andi %29, %23 : vector<1x512xi1>
    %31 = vector.broadcast %19 : i32 to vector<1x512xi32>
    %32 = arith.addi %21, %31 : vector<1x512xi32>
    %33 = arith.select %30, %32, %21 : vector<1x512xi1>, vector<1x512xi32>
    %c16_i32_9 = arith.constant 16 : i32
    %34 = vector.broadcast %c16_i32_9 : i32 to vector<1x512xi32>
    %35 = arith.cmpi sge, %17, %34 : vector<1x512xi32>
    %c240_i32 = arith.constant 240 : i32
    %36 = vector.broadcast %c240_i32 : i32 to vector<1x512xi32>
    %37 = arith.cmpi slt, %17, %36 : vector<1x512xi32>
    %c0_i32_10 = arith.constant 0 : i32
    %38 = vector.broadcast %c0_i32_10 : i32 to vector<1x512xi32>
    %39 = arith.cmpi ne, %33, %38 : vector<1x512xi32>
    %c15_i32 = arith.constant 15 : i32
    %40 = vector.broadcast %c15_i32 : i32 to vector<1x512xi32>
    %41 = arith.cmpi ne, %33, %40 : vector<1x512xi32>
    %c0_11 = arith.constant 0 : index
    %c0_12 = arith.constant 0 : index
    %42 = vector.load %arg2[%c0_11, %c0_12] : memref<4x36xf32, #tpu.memory_space<vmem>>, vector<4x36xf32>
    %c0_13 = arith.constant 0 : index
    %c0_14 = arith.constant 0 : index
    %43 = vector.load %arg3[%c0_13, %c0_14] : memref<4x1xf32, #tpu.memory_space<vmem>>, vector<4x1xf32>
    %c17_i32 = arith.constant 17 : i32
    %44 = tpu.dynamic_rotate %0 by %c17_i32 dim 1 : vector<4x512xf32>, i32 -> vector<4x512xf32>
    %45 = arith.andi %35, %39 : vector<1x512xi1>
    %cst = arith.constant 0.000000e+00 : f32
    %46 = vector.shape_cast %45 : vector<1x512xi1> to vector<1x512xi1>
    %47 = vector.broadcast %46 : vector<1x512xi1> to vector<4x512xi1>
    %48 = vector.broadcast %cst : f32 to vector<4x512xf32>
    %49 = arith.select %47, %44, %48 : vector<4x512xi1>, vector<4x512xf32>
    %c16_i32_15 = arith.constant 16 : i32
    %50 = tpu.dynamic_rotate %0 by %c16_i32_15 dim 1 : vector<4x512xf32>, i32 -> vector<4x512xf32>
    %cst_16 = arith.constant 0.000000e+00 : f32
    %51 = vector.shape_cast %35 : vector<1x512xi1> to vector<1x512xi1>
    %52 = vector.broadcast %51 : vector<1x512xi1> to vector<4x512xi1>
    %53 = vector.broadcast %cst_16 : f32 to vector<4x512xf32>
    %54 = arith.select %52, %50, %53 : vector<4x512xi1>, vector<4x512xf32>
    %c15_i32_17 = arith.constant 15 : i32
    %55 = tpu.dynamic_rotate %0 by %c15_i32_17 dim 1 : vector<4x512xf32>, i32 -> vector<4x512xf32>
    %56 = arith.andi %35, %41 : vector<1x512xi1>
    %cst_18 = arith.constant 0.000000e+00 : f32
    %57 = vector.shape_cast %56 : vector<1x512xi1> to vector<1x512xi1>
    %58 = vector.broadcast %57 : vector<1x512xi1> to vector<4x512xi1>
    %59 = vector.broadcast %cst_18 : f32 to vector<4x512xf32>
    %60 = arith.select %58, %55, %59 : vector<4x512xi1>, vector<4x512xf32>
    %c1_i32_19 = arith.constant 1 : i32
    %61 = tpu.dynamic_rotate %0 by %c1_i32_19 dim 1 : vector<4x512xf32>, i32 -> vector<4x512xf32>
    %cst_20 = arith.constant 0.000000e+00 : f32
    %62 = vector.shape_cast %39 : vector<1x512xi1> to vector<1x512xi1>
    %63 = vector.broadcast %62 : vector<1x512xi1> to vector<4x512xi1>
    %64 = vector.broadcast %cst_20 : f32 to vector<4x512xf32>
    %65 = arith.select %63, %61, %64 : vector<4x512xi1>, vector<4x512xf32>
    %c511_i32 = arith.constant 511 : i32
    %66 = tpu.dynamic_rotate %0 by %c511_i32 dim 1 : vector<4x512xf32>, i32 -> vector<4x512xf32>
    %cst_21 = arith.constant 0.000000e+00 : f32
    %67 = vector.shape_cast %41 : vector<1x512xi1> to vector<1x512xi1>
    %68 = vector.broadcast %67 : vector<1x512xi1> to vector<4x512xi1>
    %69 = vector.broadcast %cst_21 : f32 to vector<4x512xf32>
    %70 = arith.select %68, %66, %69 : vector<4x512xi1>, vector<4x512xf32>
    %c497_i32 = arith.constant 497 : i32
    %71 = tpu.dynamic_rotate %0 by %c497_i32 dim 1 : vector<4x512xf32>, i32 -> vector<4x512xf32>
    %72 = arith.andi %37, %39 : vector<1x512xi1>
    %cst_22 = arith.constant 0.000000e+00 : f32
    %73 = vector.shape_cast %72 : vector<1x512xi1> to vector<1x512xi1>
    %74 = vector.broadcast %73 : vector<1x512xi1> to vector<4x512xi1>
    %75 = vector.broadcast %cst_22 : f32 to vector<4x512xf32>
    %76 = arith.select %74, %71, %75 : vector<4x512xi1>, vector<4x512xf32>
    %c496_i32 = arith.constant 496 : i32
    %77 = tpu.dynamic_rotate %0 by %c496_i32 dim 1 : vector<4x512xf32>, i32 -> vector<4x512xf32>
    %cst_23 = arith.constant 0.000000e+00 : f32
    %78 = vector.shape_cast %37 : vector<1x512xi1> to vector<1x512xi1>
    %79 = vector.broadcast %78 : vector<1x512xi1> to vector<4x512xi1>
    %80 = vector.broadcast %cst_23 : f32 to vector<4x512xf32>
    %81 = arith.select %79, %77, %80 : vector<4x512xi1>, vector<4x512xf32>
    %c495_i32 = arith.constant 495 : i32
    %82 = tpu.dynamic_rotate %0 by %c495_i32 dim 1 : vector<4x512xf32>, i32 -> vector<4x512xf32>
    %83 = arith.andi %37, %41 : vector<1x512xi1>
    %cst_24 = arith.constant 0.000000e+00 : f32
    %84 = vector.shape_cast %83 : vector<1x512xi1> to vector<1x512xi1>
    %85 = vector.broadcast %84 : vector<1x512xi1> to vector<4x512xi1>
    %86 = vector.broadcast %cst_24 : f32 to vector<4x512xf32>
    %87 = arith.select %85, %82, %86 : vector<4x512xi1>, vector<4x512xf32>
    %88 = tpu.concatenate %49, %54, %60, %65, %0, %70, %76, %81, %87 in 0 : vector<4x512xf32>, vector<4x512xf32>, vector<4x512xf32>, vector<4x512xf32>, vector<4x512xf32>, vector<4x512xf32>, vector<4x512xf32>, vector<4x512xf32>, vector<4x512xf32> -> vector<36x512xf32>
    %cst_25 = arith.constant dense<0.000000e+00> : vector<4x512xf32>
    %89 = tpu.matmul %42, %88, %cst_25 {dimension_numbers = #tpu.dot_dimension_numbers<[1], [0], [0], [1], [0, 0, 1, 1], [], []>} : vector<4x36xf32>, vector<36x512xf32>, vector<4x512xf32> -> vector<4x512xf32>
    %90 = vector.broadcast %43 : vector<4x1xf32> to vector<4x512xf32>
    %91 = arith.addf %89, %90 : vector<4x512xf32>
    %c0_26 = arith.constant 0 : index
    %c0_27 = arith.constant 0 : index
    %92 = vector.load %arg5[%c0_26, %c0_27] : memref<4x512xf32, #tpu.memory_space<vmem>>, vector<4x512xf32>
    %93 = arith.addf %91, %92 : vector<4x512xf32>
    %c0_28 = arith.constant 0 : index
    %c0_29 = arith.constant 0 : index
    %94 = vector.load %arg6[%c0_28, %c0_29] : memref<4x512xf32, #tpu.memory_space<vmem>>, vector<4x512xf32>
    tpu.vector_store %arg6[%c0_28, %c0_29], %93 {strides = array<i32>} : memref<4x512xf32, #tpu.memory_space<vmem>>, vector<4x512xf32>,
    return
  }
  func.func @transform_0(%arg0: i32) -> (i32, i32) {
    %c0_i32 = arith.constant 0 : i32
    %c0_i32_0 = arith.constant 0 : i32
    %c0_i32_1 = arith.constant 0 : i32
    return %c0_i32, %c0_i32_0 : i32, i32
  }
  func.func @transform_1(%arg0: i32) -> (i32, i32) {
    %c0_i32 = arith.constant 0 : i32
    %c0_i32_0 = arith.constant 0 : i32
    %c0_i32_1 = arith.constant 0 : i32
    return %c0_i32, %c0_i32_0 : i32, i32
  }
  func.func @transform_2(%arg0: i32) -> (i32, i32) {
    %c0_i32 = arith.constant 0 : i32
    %c0_i32_0 = arith.constant 0 : i32
    %c0_i32_1 = arith.constant 0 : i32
    return %c0_i32, %c0_i32_0 : i32, i32
  }
  func.func @transform_3(%arg0: i32) -> i32 {
    %c0_i32 = arith.constant 0 : i32
    %c0_i32_0 = arith.constant 0 : i32
    return %c0_i32 : i32
  }
  func.func @transform_4(%arg0: i32) -> (i32, i32) {
    %c0_i32 = arith.constant 0 : i32
    %c0_i32_0 = arith.constant 0 : i32
    %c0_i32_1 = arith.constant 0 : i32
    return %c0_i32, %c0_i32_0 : i32, i32
  }
  func.func @transform_5(%arg0: i32) -> (i32, i32) {
    %c0_i32 = arith.constant 0 : i32
    %c0_i32_0 = arith.constant 0 : i32
    %c0_i32_1 = arith.constant 0 : i32
    return %c0_i32, %c0_i32_0 : i32, i32
  }
}

module attributes {stable_mosaic.version = 11 : i64} {
  func.func @_conv1x1_cat_kernel(%arg0: i32, %arg1: memref<4x512xf32, #tpu.memory_space<vmem>>, %arg2: memref<4x512xf32, #tpu.memory_space<vmem>>, %arg3: memref<4x4xf32, #tpu.memory_space<vmem>>, %arg4: memref<4x4xf32, #tpu.memory_space<vmem>>, %arg5: memref<4x1xf32, #tpu.memory_space<vmem>>, %arg6: memref<4x512xf32, #tpu.memory_space<vmem>>) attributes {dimension_semantics = [#tpu.dimension_semantics<arbitrary>], iteration_bounds = array<i64: 1>, scalar_prefetch = 0 : i64, scratch_operands = 0 : i64, tpu.core_type = #tpu.core_type<tc>, window_params = [{pipeline_mode = #tpu.pipeline_mode<synchronous>, transform_indices = @transform_0, window_bounds = array<i64: 4, 512>}, {pipeline_mode = #tpu.pipeline_mode<synchronous>, transform_indices = @transform_1, window_bounds = array<i64: 4, 512>}, {pipeline_mode = #tpu.pipeline_mode<synchronous>, transform_indices = @transform_2, window_bounds = array<i64: 4, 4>}, {pipeline_mode = #tpu.pipeline_mode<synchronous>, transform_indices = @transform_3, window_bounds = array<i64: 4, 4>}, {pipeline_mode = #tpu.pipeline_mode<synchronous>, transform_indices = @transform_4, window_bounds = array<i64: 4, 1>}, {pipeline_mode = #tpu.pipeline_mode<synchronous>, transform_indices = @transform_5, window_bounds = array<i64: 4, 512>}]} {
    %c0 = arith.constant 0 : index
    %c0_0 = arith.constant 0 : index
    %0 = vector.load %arg3[%c0, %c0_0] : memref<4x4xf32, #tpu.memory_space<vmem>>, vector<4x4xf32>
    %c0_1 = arith.constant 0 : index
    %c0_2 = arith.constant 0 : index
    %1 = vector.load %arg1[%c0_1, %c0_2] : memref<4x512xf32, #tpu.memory_space<vmem>>, vector<4x512xf32>
    %cst = arith.constant dense<0.000000e+00> : vector<4x512xf32>
    %2 = tpu.matmul %0, %1, %cst {dimension_numbers = #tpu.dot_dimension_numbers<[1], [0], [0], [1], [0, 0, 1, 1], [], []>} : vector<4x4xf32>, vector<4x512xf32>, vector<4x512xf32> -> vector<4x512xf32>
    %c0_3 = arith.constant 0 : index
    %c0_4 = arith.constant 0 : index
    %3 = vector.load %arg4[%c0_3, %c0_4] : memref<4x4xf32, #tpu.memory_space<vmem>>, vector<4x4xf32>
    %c0_5 = arith.constant 0 : index
    %c0_6 = arith.constant 0 : index
    %4 = vector.load %arg2[%c0_5, %c0_6] : memref<4x512xf32, #tpu.memory_space<vmem>>, vector<4x512xf32>
    %cst_7 = arith.constant dense<0.000000e+00> : vector<4x512xf32>
    %5 = tpu.matmul %3, %4, %cst_7 {dimension_numbers = #tpu.dot_dimension_numbers<[1], [0], [0], [1], [0, 0, 1, 1], [], []>} : vector<4x4xf32>, vector<4x512xf32>, vector<4x512xf32> -> vector<4x512xf32>
    %6 = arith.addf %2, %5 : vector<4x512xf32>
    %c0_8 = arith.constant 0 : index
    %c0_9 = arith.constant 0 : index
    %7 = vector.load %arg5[%c0_8, %c0_9] : memref<4x1xf32, #tpu.memory_space<vmem>>, vector<4x1xf32>
    %8 = vector.broadcast %7 : vector<4x1xf32> to vector<4x512xf32>
    %9 = arith.addf %6, %8 : vector<4x512xf32>
    %c0_10 = arith.constant 0 : index
    %c0_11 = arith.constant 0 : index
    %10 = vector.load %arg6[%c0_10, %c0_11] : memref<4x512xf32, #tpu.memory_space<vmem>>, vector<4x512xf32>
    tpu.vector_store %arg6[%c0_10, %c0_11], %9 {strides = array<i32>} : memref<4x512xf32, #tpu.memory_space<vmem>>, vector<4x512xf32>,
    return
  }
  func.func @transform_0(%arg0: i32) -> (i32, i32) {
    %c0_i32 = arith.constant 0 : i32
    %c0_i32_0 = arith.constant 0 : i32
    %c0_i32_1 = arith.constant 0 : i32
    return %c0_i32, %c0_i32_0 : i32, i32
  }
  func.func @transform_1(%arg0: i32) -> (i32, i32) {
    %c0_i32 = arith.constant 0 : i32
    %c0_i32_0 = arith.constant 0 : i32
    %c0_i32_1 = arith.constant 0 : i32
    return %c0_i32, %c0_i32_0 : i32, i32
  }
  func.func @transform_2(%arg0: i32) -> (i32, i32) {
    %c0_i32 = arith.constant 0 : i32
    %c0_i32_0 = arith.constant 0 : i32
    %c0_i32_1 = arith.constant 0 : i32
    return %c0_i32, %c0_i32_0 : i32, i32
  }
  func.func @transform_3(%arg0: i32) -> (i32, i32) {
    %c0_i32 = arith.constant 0 : i32
    %c0_i32_0 = arith.constant 0 : i32
    %c0_i32_1 = arith.constant 0 : i32
    return %c0_i32, %c0_i32_0 : i32, i32
  }
  func.func @transform_4(%arg0: i32) -> (i32, i32) {
    %c0_i32 = arith.constant 0 : i32
    %c0_i32_0 = arith.constant 0 : i32
    %c0_i32_1 = arith.constant 0 : i32
    return %c0_i32, %c0_i32_0 : i32, i32
  }
  func.func @transform_5(%arg0: i32) -> (i32, i32) {
    %c0_i32 = arith.constant 0 : i32
    %c0_i32_0 = arith.constant 0 : i32
    %c0_i32_1 = arith.constant 0 : i32
    return %c0_i32, %c0_i32_0 : i32, i32
  }
}

</mosaic_0001>

<llo_original>
// kernel: residual_block_forward.13
$region0: #{residual_block_forward.13}
  #allocation0 [shape = 'u32[]', space=smem, size = 0x4, offset = 0x4, fixed_abs, tag = 'smem constant byte address 0x4 - core index']
  #allocation1 [shape = 'u32[72,128]{1,0:T(1,128)}', space=vmem, size = 0x9000, scoped, tag = 'internal scratch']
  #allocation2 [shape = 'f32[1]{0:T(128)S(6)}', space=smem, size = 0x200, scoped, tag = 'scoped memory for residual_block_forward.13']
  %s0 = inlined_call_operand.vmem [shape: f32[16,128], index: 0, kind: input, shape index: {}]
  %s1 = inlined_call_operand.vmem [shape: f32[8,144], index: 1, kind: input, shape index: {}]
  %s2 = inlined_call_operand.vmem [shape: f32[8,1], index: 2, kind: input, shape index: {}]
  %s3 = inlined_call_operand.<no memory space> [shape: f32[1], index: 3, kind: input, shape index: {}]
  %s4 = inlined_call_operand.vmem [shape: f32[8,128], index: 4, kind: output, shape index: {}]
  %s5 = sld [smem:[#allocation0]]
  $region26: #{residual_block_forward.13} parent=0
    _
  %s7 = ssub.s32 1, %s5
  %s8 = scalar_select 0, %s7, %s5
  %9 = sst [smem:[#allocation2]] %s3
  // Predicated region
  $region2: #{residual_block_forward.13} parent=0 // pred_check
    _
  $region3: #{residual_block_forward.13} parent=0 // pred_check_branch
    %11 = sbr.rel (0) target = $region5
  $region4: #{residual_block_forward.13} parent=0 // pred_region
    _
  $region5: #{residual_block_forward.13} parent=0 // pred_fallthru
    _
  // Predicated region
  $region6: #{residual_block_forward.13} parent=0 // pred_check
    _
  $region7: #{residual_block_forward.13} parent=0 // pred_check_branch
    %13 = sbr.rel (0) target = $region9
  $region8: #{residual_block_forward.13} parent=0 // pred_region
    _
  $region9: #{residual_block_forward.13} parent=0 // pred_fallthru
    _
  // Predicated region
  $region10: #{residual_block_forward.13} parent=0 // pred_check
    _
  $region11: #{residual_block_forward.13} parent=0 // pred_check_branch
    %15 = sbr.rel (0) target = $region13
  $region12: #{residual_block_forward.13} parent=0 // pred_region
    _
  $region13: #{residual_block_forward.13} parent=0 // pred_fallthru
    _
  // Predicated region
  $region14: #{residual_block_forward.13} parent=0 // pred_check
    _
  $region15: #{residual_block_forward.13} parent=0 // pred_check_branch
    %17 = sbr.rel (0) target = $region17
  $region16: #{residual_block_forward.13} parent=0 // pred_region
    _
  $region17: #{residual_block_forward.13} parent=0 // pred_fallthru
    _
  %v18 = vld [vmem:[%s0] sm:$0xff]
  %v19 = vld [vmem:[%s0 + $0x8] sm:$0xff]
  %v20 = vlaneseq
  %v21 = vand.u32 %v20, 127
  %vm22 = vcmp.lt.s32.totalorder %v21, 0
  %v23 = vsub.s32 0, %v21
  %v24 = vsel %vm22, %v23, %v21
  %v25 = vshrl.u32 %v24, 6
  %v26 = vand.u32 %v24, 63
  %v27 = vsub.s32 0, %v26
  %v28 = vsel %vm22, %v27, %v26
  %vm29 = vcmp.ne.s32.totalorder %v28, 0
  %vm30 = vcmp.lt.s32.totalorder %v28, 0
  %vm31 = vmand %vm30, %vm29
  %v32 = vadd.s32 %v28, 64
  %v33 = vsel %vm31, %v32, %v28
  %vm34 = vcmp.lt.s32.totalorder %v21, 0
  %v35 = vsub.s32 0, %v21
  %v36 = vsel %vm34, %v35, %v21
  %v37 = vshrl.u32 %v36, 3
  %v38 = vand.u32 %v36, 7
  %v39 = vsub.s32 0, %v38
  %v40 = vsel %vm34, %v39, %v38
  %vm41 = vcmp.ne.s32.totalorder %v40, 0
  %vm42 = vcmp.lt.s32.totalorder %v40, 0
  %vm43 = vmand %vm42, %vm41
  %v44 = vadd.s32 %v40, 8
  %v45 = vsel %vm43, %v44, %v40
  %vm46 = vcmp.ge.s32.totalorder %v33, 8
  %vm47 = vcmp.lt.s32.totalorder %v33, 56
  %vm48 = vcmp.ne.s32.totalorder %v45, 0
  %vm49 = vcmp.ne.s32.totalorder %v45, 7
  %v50 = vld [vmem:[%s1] sm:$0xff]
  %v51 = vld [vmem:[%s1 + $0x8] sm:$0xff]
  %v52 = vld [vmem:[%s2] sm:$0xff]
  %s53 = sld [smem:[#allocation2]]
  %54 = vrot.lane.b32.xlu0 %v18, 9
  %v55 = vpop.permute.xlu0 %54
  %56 = vrot.lane.b32.xlu0 %v19, 9
  %v57 = vpop.permute.xlu0 %56
  %vm58 = vmand %vm46, %vm48
  %v59 = vsel %vm58, 1, 0
  %vm60 = vcmp.eq.s32.totalorder %v59, 1
  %v61 = vsel %vm60, %v55, 0.0
  %v62 = vsel %vm60, %v57, 0.0
  %63 = vrot.lane.b32.xlu0 %v18, 8
  %v64 = vpop.permute.xlu0 %63
  %65 = vrot.lane.b32.xlu0 %v19, 8
  %v66 = vpop.permute.xlu0 %65
  %v67 = vsel %vm46, 1, 0
  %vm68 = vcmp.eq.s32.totalorder %v67, 1
  %v69 = vsel %vm68, %v64, 0.0
  %v70 = vsel %vm68, %v66, 0.0
  %71 = vrot.lane.b32.xlu0 %v18, 7
  %v72 = vpop.permute.xlu0 %71
  %73 = vrot.lane.b32.xlu0 %v19, 7
  %v74 = vpop.permute.xlu0 %73
  %vm75 = vmand %vm46, %vm49
  %v76 = vsel %vm75, 1, 0
  %vm77 = vcmp.eq.s32.totalorder %v76, 1
  %v78 = vsel %vm77, %v72, 0.0
  %v79 = vsel %vm77, %v74, 0.0
  %80 = vrot.lane.b32.xlu0 %v18, 1
  %v81 = vpop.permute.xlu0 %80
  %82 = vrot.lane.b32.xlu0 %v19, 1
  %v83 = vpop.permute.xlu0 %82
  %v84 = vsel %vm48, 1, 0
  %vm85 = vcmp.eq.s32.totalorder %v84, 1
  %v86 = vsel %vm85, %v81, 0.0
  %v87 = vsel %vm85, %v83, 0.0
  %88 = vrot.lane.b32.xlu0 %v18, 127
  %v89 = vpop.permute.xlu0 %88
  %90 = vrot.lane.b32.xlu0 %v19, 127
  %v91 = vpop.permute.xlu0 %90
  %v92 = vsel %vm49, 1, 0
  %vm93 = vcmp.eq.s32.totalorder %v92, 1
  %v94 = vsel %vm93, %v89, 0.0
  %v95 = vsel %vm93, %v91, 0.0
  %96 = vrot.lane.b32.xlu0 %v18, 121
  %v97 = vpop.permute.xlu0 %96
  %98 = vrot.lane.b32.xlu0 %v19, 121
  %v99 = vpop.permute.xlu0 %98
  %vm100 = vmand %vm47, %vm48
  %v101 = vsel %vm100, 1, 0
  %vm102 = vcmp.eq.s32.totalorder %v101, 1
  %v103 = vsel %vm102, %v97, 0.0
  %v104 = vsel %vm102, %v99, 0.0
  %105 = vrot.lane.b32.xlu0 %v18, 120
  %v106 = vpop.permute.xlu0 %105
  %107 = vrot.lane.b32.xlu0 %v19, 120
  %v108 = vpop.permute.xlu0 %107
  %v109 = vsel %vm47, 1, 0
  %vm110 = vcmp.eq.s32.totalorder %v109, 1
  %v111 = vsel %vm110, %v106, 0.0
  %v112 = vsel %vm110, %v108, 0.0
  %113 = vrot.lane.b32.xlu0 %v18, 119
  %v114 = vpop.permute.xlu0 %113
  %115 = vrot.lane.b32.xlu0 %v19, 119
  %v116 = vpop.permute.xlu0 %115
  %vm117 = vmand %vm47, %vm49
  %v118 = vsel %vm117, 1, 0
  %vm119 = vcmp.eq.s32.totalorder %v118, 1
  %v120 = vsel %vm119, %v114, 0.0
  %v121 = vsel %vm119, %v116, 0.0
  %123 = vset.pattern.permute.xlu0 0
  %124 = vperm.xlu0 %123, %v52
  %v125 = vpop.permute.xlu0 %124
  %vm127 = vcmask 130048
  %v129 = vsel %vm127, %v51, 0
  %131 = vmatpush.msra.mxu0 %v112
  %132 = vmatpush.msra.mxu0 %v111
  %133 = vmatpush.msra.mxu0 %v104
  %134 = vmatpush.msra.mxu0 %v103
  %135 = vmatpush.msra.mxu0 %v95
  %136 = vmatpush.msra.mxu0 %v94
  %137 = vmatpush.msra.mxu0 %v19
  %138 = vmatpush.msra.mxu0 %v18
  %139 = vmatpush.msra.mxu0 %v87
  %140 = vmatpush.msra.mxu0 %v86
  %141 = vmatpush.msra.mxu0 %v79
  %142 = vmatpush.msra.mxu0 %v78
  %143 = vmatpush.msra.mxu0 %v70
  %144 = vmatpush.msra.mxu0 %v69
  %145 = vmatpush.msra.mxu0 %v62
  %146 = vmatpush.msra.mxu0 %v61
  %147 = vmatmul.f32.gmra.mxu0 %v50
  %v148 = vpop.f32.mrf.mxu0
  %v149 = vadd.f32 %v125, %v148
  %150 = vdwg.mxu0
  %151 = vmatpush.msra.mxu0 0.0
  %152 = vmatpush.msra.mxu0 0.0
  %153 = vmatpush.msra.mxu0 0.0
  %154 = vmatpush.msra.mxu0 0.0
  %155 = vmatpush.msra.mxu0 0.0
  %156 = vmatpush.msra.mxu0 0.0
  %157 = vmatpush.msra.mxu0 0.0
  %158 = vmatpush.msra.mxu0 0.0
  %159 = vmatpush.msra.mxu0 0.0
  %160 = vmatpush.msra.mxu0 0.0
  %161 = vmatpush.msra.mxu0 0.0
  %162 = vmatpush.msra.mxu0 0.0
  %163 = vmatpush.msra.mxu0 0.0
  %164 = vmatpush.msra.mxu0 0.0
  %165 = vmatpush.msra.mxu0 %v121
  %166 = vmatpush.msra.mxu0 %v120
  %167 = vmatmul.f32.gmra.mxu0 %v129
  %v168 = vpop.f32.mrf.mxu0
  %v169 = vadd.f32 %v149, %v168
  %170 = vdwg.mxu0
  %vm171 = vcmp.ge.f32.partialorder %v169, 0.0
  %v172 = vstv %s53
  %v173 = vmul.f32 %v172, %v169
  %v174 = vsel %vm171, %v169, %v173
  %175 = vst [vmem:[%s4] sm:$0xff] %v174
  // Predicated region
  $region18: #{residual_block_forward.13} parent=0 // pred_check
    _
  $region19: #{residual_block_forward.13} parent=0 // pred_check_branch
    %177 = sbr.rel (0) target = $region21
  $region20: #{residual_block_forward.13} parent=0 // pred_region
    _
  $region21: #{residual_block_forward.13} parent=0 // pred_fallthru
    _
  // Predicated region
  $region22: #{residual_block_forward.13} parent=0 // pred_check
    _
  $region23: #{residual_block_forward.13} parent=0 // pred_check_branch
    %179 = sbr.rel (0) target = $region25
  $region24: #{residual_block_forward.13} parent=0 // pred_region
    _
  $region25: #{residual_block_forward.13} parent=0 // pred_fallthru
    _

// kernel: residual_block_forward.12
$region0: #{residual_block_forward.12}
  #allocation0 [shape = 'u32[]', space=smem, size = 0x4, offset = 0x4, fixed_abs, tag = 'smem constant byte address 0x4 - core index']
  #allocation1 [shape = 'u32[72,128]{1,0:T(1,128)}', space=vmem, size = 0x9000, scoped, tag = 'internal scratch']
  #allocation2 [shape = 'f32[1]{0:T(128)S(6)}', space=smem, size = 0x200, scoped, tag = 'scoped memory for residual_block_forward.12']
  #allocation3 [shape = 'f32[1]{0:T(128)S(6)}', space=smem, size = 0x200, scoped, tag = 'scoped memory for residual_block_forward.12']
  %s0 = inlined_call_operand.vmem [shape: f32[4,512], index: 0, kind: input, shape index: {}]
  %s1 = inlined_call_operand.vmem [shape: f32[4,36], index: 1, kind: input, shape index: {}]
  %s2 = inlined_call_operand.vmem [shape: f32[4,1], index: 2, kind: input, shape index: {}]
  %s3 = inlined_call_operand.<no memory space> [shape: f32[1], index: 3, kind: input, shape index: {}]
  %s4 = inlined_call_operand.vmem [shape: f32[4,36], index: 4, kind: input, shape index: {}]
  %s5 = inlined_call_operand.vmem [shape: f32[4,1], index: 5, kind: input, shape index: {}]
  %s6 = inlined_call_operand.<no memory space> [shape: f32[1], index: 6, kind: input, shape index: {}]
  %s7 = inlined_call_operand.vmem [shape: f32[4,512], index: 7, kind: output, shape index: {}]
  %s8 = sld [smem:[#allocation0]]
  $region38: #{residual_block_forward.12} parent=0
    _
  %s10 = ssub.s32 1, %s8
  %s11 = scalar_select 0, %s10, %s8
  %12 = sst [smem:[#allocation2]] %s3
  %13 = sst [smem:[#allocation3]] %s6
  // Predicated region
  $region2: #{residual_block_forward.12} parent=0 // pred_check
    _
  $region3: #{residual_block_forward.12} parent=0 // pred_check_branch
    %15 = sbr.rel (0) target = $region5
  $region4: #{residual_block_forward.12} parent=0 // pred_region
    _
  $region5: #{residual_block_forward.12} parent=0 // pred_fallthru
    _
  // Predicated region
  $region6: #{residual_block_forward.12} parent=0 // pred_check
    _
  $region7: #{residual_block_forward.12} parent=0 // pred_check_branch
    %17 = sbr.rel (0) target = $region9
  $region8: #{residual_block_forward.12} parent=0 // pred_region
    _
  $region9: #{residual_block_forward.12} parent=0 // pred_fallthru
    _
  // Predicated region
  $region10: #{residual_block_forward.12} parent=0 // pred_check
    _
  $region11: #{residual_block_forward.12} parent=0 // pred_check_branch
    %19 = sbr.rel (0) target = $region13
  $region12: #{residual_block_forward.12} parent=0 // pred_region
    _
  $region13: #{residual_block_forward.12} parent=0 // pred_fallthru
    _
  // Predicated region
  $region14: #{residual_block_forward.12} parent=0 // pred_check
    _
  $region15: #{residual_block_forward.12} parent=0 // pred_check_branch
    %21 = sbr.rel (0) target = $region17
  $region16: #{residual_block_forward.12} parent=0 // pred_region
    _
  $region17: #{residual_block_forward.12} parent=0 // pred_fallthru
    _
  // Predicated region
  $region18: #{residual_block_forward.12} parent=0 // pred_check
    _
  $region19: #{residual_block_forward.12} parent=0 // pred_check_branch
    %23 = sbr.rel (0) target = $region21
  $region20: #{residual_block_forward.12} parent=0 // pred_region
    _
  $region21: #{residual_block_forward.12} parent=0 // pred_fallthru
    _
  // Predicated region
  $region22: #{residual_block_forward.12} parent=0 // pred_check
    _
  $region23: #{residual_block_forward.12} parent=0 // pred_check_branch
    %25 = sbr.rel (0) target = $region25
  $region24: #{residual_block_forward.12} parent=0 // pred_region
    _
  $region25: #{residual_block_forward.12} parent=0 // pred_fallthru
    _
  // Predicated region
  $region26: #{residual_block_forward.12} parent=0 // pred_check
    _
  $region27: #{residual_block_forward.12} parent=0 // pred_check_branch
    %27 = sbr.rel (0) target = $region29
  $region28: #{residual_block_forward.12} parent=0 // pred_region
    _
  $region29: #{residual_block_forward.12} parent=0 // pred_fallthru
    _
  %v28 = vld [vmem:[%s0] sm:$0xff]
  %v29 = vld [vmem:[%s0 + $0x8] sm:$0xff]
  %v30 = vlaneseq
  %v31 = vand.u32 %v30, 127
  %v32 = vadd.s32 %v31, 128
  %v33 = vadd.s32 %v31, 256
  %v34 = vadd.s32 %v31, 384
  %vm35 = vcmp.lt.s32.totalorder %v31, 0
  %v36 = vsub.s32 0, %v31
  %v37 = vsel %vm35, %v36, %v31
  %v38 = vshrl.u32 %v37, 8
  %v39 = vand.u32 %v37, 255
  %v40 = vsub.s32 0, %v39
  %v41 = vsel %vm35, %v40, %v39
  %vm42 = vcmp.lt.s32.totalorder %v32, 0
  %v43 = vsub.s32 0, %v32
  %v44 = vsel %vm42, %v43, %v32
  %v45 = vshrl.u32 %v44, 8
  %v46 = vand.u32 %v44, 255
  %v47 = vsub.s32 0, %v46
  %v48 = vsel %vm42, %v47, %v46
  %vm49 = vcmp.lt.s32.totalorder %v33, 0
  %v50 = vsub.s32 0, %v33
  %v51 = vsel %vm49, %v50, %v33
  %v52 = vshrl.u32 %v51, 8
  %v53 = vand.u32 %v51, 255
  %v54 = vsub.s32 0, %v53
  %v55 = vsel %vm49, %v54, %v53
  %vm56 = vcmp.lt.s32.totalorder %v34, 0
  %v57 = vsub.s32 0, %v34
  %v58 = vsel %vm56, %v57, %v34
  %v59 = vshrl.u32 %v58, 8
  %v60 = vand.u32 %v58, 255
  %v61 = vsub.s32 0, %v60
  %v62 = vsel %vm56, %v61, %v60
  %vm63 = vcmp.ne.s32.totalorder %v41, 0
  %vm64 = vcmp.ne.s32.totalorder %v48, 0
  %vm65 = vcmp.ne.s32.totalorder %v55, 0
  %vm66 = vcmp.ne.s32.totalorder %v62, 0
  %vm67 = vcmp.lt.s32.totalorder %v41, 0
  %vm68 = vcmp.lt.s32.totalorder %v48, 0
  %vm69 = vcmp.lt.s32.totalorder %v55, 0
  %vm70 = vcmp.lt.s32.totalorder %v62, 0
  %vm71 = vmand %vm67, %vm63
  %vm72 = vmand %vm68, %vm64
  %vm73 = vmand %vm69, %vm65
  %vm74 = vmand %vm70, %vm66
  %v75 = vadd.s32 %v41, 256
  %v76 = vadd.s32 %v48, 256
  %v77 = vadd.s32 %v55, 256
  %v78 = vadd.s32 %v62, 256
  %v79 = vsel %vm71, %v75, %v41
  %v80 = vsel %vm72, %v76, %v48
  %v81 = vsel %vm73, %v77, %v55
  %v82 = vsel %vm74, %v78, %v62
  %vm83 = vcmp.lt.s32.totalorder %v31, 0
  %v84 = vsub.s32 0, %v31
  %v85 = vsel %vm83, %v84, %v31
  %v86 = vshrl.u32 %v85, 4
  %v87 = vand.u32 %v85, 15
  %v88 = vsub.s32 0, %v87
  %v89 = vsel %vm83, %v88, %v87
  %vm90 = vcmp.lt.s32.totalorder %v32, 0
  %v91 = vsub.s32 0, %v32
  %v92 = vsel %vm90, %v91, %v32
  %v93 = vshrl.u32 %v92, 4
  %v94 = vand.u32 %v92, 15
  %v95 = vsub.s32 0, %v94
  %v96 = vsel %vm90, %v95, %v94
  %vm97 = vcmp.lt.s32.totalorder %v33, 0
  %v98 = vsub.s32 0, %v33
  %v99 = vsel %vm97, %v98, %v33
  %v100 = vshrl.u32 %v99, 4
  %v101 = vand.u32 %v99, 15
  %v102 = vsub.s32 0, %v101
  %v103 = vsel %vm97, %v102, %v101
  %vm104 = vcmp.lt.s32.totalorder %v34, 0
  %v105 = vsub.s32 0, %v34
  %v106 = vsel %vm104, %v105, %v34
  %v107 = vshrl.u32 %v106, 4
  %v108 = vand.u32 %v106, 15
  %v109 = vsub.s32 0, %v108
  %v110 = vsel %vm104, %v109, %v108
  %vm111 = vcmp.ne.s32.totalorder %v89, 0
  %vm112 = vcmp.ne.s32.totalorder %v96, 0
  %vm113 = vcmp.ne.s32.totalorder %v103, 0
  %vm114 = vcmp.ne.s32.totalorder %v110, 0
  %vm115 = vcmp.lt.s32.totalorder %v89, 0
  %vm116 = vcmp.lt.s32.totalorder %v96, 0
  %vm117 = vcmp.lt.s32.totalorder %v103, 0
  %vm118 = vcmp.lt.s32.totalorder %v110, 0
  %vm119 = vmand %vm115, %vm111
  %vm120 = vmand %vm116, %vm112
  %vm121 = vmand %vm117, %vm113
  %vm122 = vmand %vm118, %vm114
  %v123 = vadd.s32 %v89, 16
  %v124 = vadd.s32 %v96, 16
  %v125 = vadd.s32 %v103, 16
  %v126 = vadd.s32 %v110, 16
  %v127 = vsel %vm119, %v123, %v89
  %v128 = vsel %vm120, %v124, %v96
  %v129 = vsel %vm121, %v125, %v103
  %v130 = vsel %vm122, %v126, %v110
  %vm131 = vcmp.ge.s32.totalorder %v79, 16
  %vm132 = vcmp.ge.s32.totalorder %v80, 16
  %vm133 = vcmp.ge.s32.totalorder %v81, 16
  %vm134 = vcmp.ge.s32.totalorder %v82, 16
  %vm135 = vcmp.lt.s32.totalorder %v79, 240
  %vm136 = vcmp.lt.s32.totalorder %v80, 240
  %vm137 = vcmp.lt.s32.totalorder %v81, 240
  %vm138 = vcmp.lt.s32.totalorder %v82, 240
  %vm139 = vcmp.ne.s32.totalorder %v127, 0
  %vm140 = vcmp.ne.s32.totalorder %v128, 0
  %vm141 = vcmp.ne.s32.totalorder %v129, 0
  %vm142 = vcmp.ne.s32.totalorder %v130, 0
  %vm143 = vcmp.ne.s32.totalorder %v127, 15
  %vm144 = vcmp.ne.s32.totalorder %v128, 15
  %vm145 = vcmp.ne.s32.totalorder %v129, 15
  %vm146 = vcmp.ne.s32.totalorder %v130, 15
  %v147 = vld [vmem:[%s1] sm:$0xf]
  %v148 = vld [vmem:[%s2] sm:$0xf]
  %s149 = sld [smem:[#allocation2]]
  %152 = vst [vmem:[#allocation1] ss:$2 sm:$0xff] %v28
  %s153 = scalar_lea.vmem [#allocation1], 16
  %154 = vst [vmem:[%s153] ss:$2 sm:$0xff] %v29
  %v155 = vld.sshfl [vmem:[#allocation1] sm:$0xff pattern:$0x75316420]
  %v156 = vld.sshfl [vmem:[#allocation1 + $0x8] sm:$0xff pattern:$0x75316420]
  %v157 = vld.sshfl [vmem:[#allocation1 + $0x10] sm:$0xff pattern:$0x75316420]
  %v158 = vld.sshfl [vmem:[#allocation1 + $0x18] sm:$0xff pattern:$0x75316420]
  %163 = vrot.lane.b32.xlu0 %v155, 17
  %v164 = vpop.permute.xlu0 %163
  %165 = vrot.lane.b32.xlu0 %v156, 17
  %v166 = vpop.permute.xlu0 %165
  %167 = vrot.lane.b32.xlu0 %v157, 17
  %v168 = vpop.permute.xlu0 %167
  %169 = vrot.lane.b32.xlu0 %v158, 17
  %v170 = vpop.permute.xlu0 %169
  %vm171 = vcmp.lt.s32.totalorder %v31, 17
  %v172 = vsel %vm171, %v168, %v170
  %v173 = vsel %vm171, %v166, %v168
  %v174 = vsel %vm171, %v164, %v166
  %v175 = vsel %vm171, %v170, %v164
  %vm176 = vmand %vm131, %vm139
  %vm177 = vmand %vm132, %vm140
  %vm178 = vmand %vm133, %vm141
  %vm179 = vmand %vm134, %vm142
  %v180 = vsel %vm176, 1, 0
  %v181 = vsel %vm177, 1, 0
  %v182 = vsel %vm178, 1, 0
  %v183 = vsel %vm179, 1, 0
  %vm184 = vcmp.eq.s32.totalorder %v180, 1
  %vm185 = vcmp.eq.s32.totalorder %v181, 1
  %vm186 = vcmp.eq.s32.totalorder %v182, 1
  %vm187 = vcmp.eq.s32.totalorder %v183, 1
  %v188 = vsel %vm184, %v175, 0.0
  %v189 = vsel %vm185, %v174, 0.0
  %v190 = vsel %vm186, %v173, 0.0
  %v191 = vsel %vm187, %v172, 0.0
  %192 = vst [vmem:[#allocation1] ss:$2 sm:$0xff] %v28
  %s193 = scalar_lea.vmem [#allocation1], 16
  %194 = vst [vmem:[%s193] ss:$2 sm:$0xff] %v29
  %v195 = vld.sshfl [vmem:[#allocation1] sm:$0xff pattern:$0x75316420]
  %v196 = vld.sshfl [vmem:[#allocation1 + $0x8] sm:$0xff pattern:$0x75316420]
  %v197 = vld.sshfl [vmem:[#allocation1 + $0x10] sm:$0xff pattern:$0x75316420]
  %v198 = vld.sshfl [vmem:[#allocation1 + $0x18] sm:$0xff pattern:$0x75316420]
  %203 = vrot.lane.b32.xlu0 %v195, 16
  %v204 = vpop.permute.xlu0 %203
  %205 = vrot.lane.b32.xlu0 %v196, 16
  %v206 = vpop.permute.xlu0 %205
  %207 = vrot.lane.b32.xlu0 %v197, 16
  %v208 = vpop.permute.xlu0 %207
  %209 = vrot.lane.b32.xlu0 %v198, 16
  %v210 = vpop.permute.xlu0 %209
  %vm211 = vcmp.lt.s32.totalorder %v31, 16
  %v212 = vsel %vm211, %v208, %v210
  %v213 = vsel %vm211, %v206, %v208
  %v214 = vsel %vm211, %v204, %v206
  %v215 = vsel %vm211, %v210, %v204
  %v216 = vsel %vm131, 1, 0
  %v217 = vsel %vm132, 1, 0
  %v218 = vsel %vm133, 1, 0
  %v219 = vsel %vm134, 1, 0
  %vm220 = vcmp.eq.s32.totalorder %v216, 1
  %vm221 = vcmp.eq.s32.totalorder %v217, 1
  %vm222 = vcmp.eq.s32.totalorder %v218, 1
  %vm223 = vcmp.eq.s32.totalorder %v219, 1
  %v224 = vsel %vm220, %v215, 0.0
  %v225 = vsel %vm221, %v214, 0.0
  %v226 = vsel %vm222, %v213, 0.0
  %v227 = vsel %vm223, %v212, 0.0
  %228 = vst [vmem:[#allocation1] ss:$2 sm:$0xff] %v28
  %s229 = scalar_lea.vmem [#allocation1], 16
  %230 = vst [vmem:[%s229] ss:$2 sm:$0xff] %v29
  %v231 = vld.sshfl [vmem:[#allocation1] sm:$0xff pattern:$0x75316420]
  %v232 = vld.sshfl [vmem:[#allocation1 + $0x8] sm:$0xff pattern:$0x75316420]
  %v233 = vld.sshfl [vmem:[#allocation1 + $0x10] sm:$0xff pattern:$0x75316420]
  %v234 = vld.sshfl [vmem:[#allocation1 + $0x18] sm:$0xff pattern:$0x75316420]
  %239 = vrot.lane.b32.xlu0 %v231, 15
  %v240 = vpop.permute.xlu0 %239
  %241 = vrot.lane.b32.xlu0 %v232, 15
  %v242 = vpop.permute.xlu0 %241
  %243 = vrot.lane.b32.xlu0 %v233, 15
  %v244 = vpop.permute.xlu0 %243
  %245 = vrot.lane.b32.xlu0 %v234, 15
  %v246 = vpop.permute.xlu0 %245
  %vm247 = vcmp.lt.s32.totalorder %v31, 15
  %v248 = vsel %vm247, %v244, %v246
  %v249 = vsel %vm247, %v242, %v244
  %v250 = vsel %vm247, %v240, %v242
  %v251 = vsel %vm247, %v246, %v240
  %vm252 = vmand %vm131, %vm143
  %vm253 = vmand %vm132, %vm144
  %vm254 = vmand %vm133, %vm145
  %vm255 = vmand %vm134, %vm146
  %v256 = vsel %vm252, 1, 0
  %v257 = vsel %vm253, 1, 0
  %v258 = vsel %vm254, 1, 0
  %v259 = vsel %vm255, 1, 0
  %vm260 = vcmp.eq.s32.totalorder %v256, 1
  %vm261 = vcmp.eq.s32.totalorder %v257, 1
  %vm262 = vcmp.eq.s32.totalorder %v258, 1
  %vm263 = vcmp.eq.s32.totalorder %v259, 1
  %v264 = vsel %vm260, %v251, 0.0
  %v265 = vsel %vm261, %v250, 0.0
  %v266 = vsel %vm262, %v249, 0.0
  %v267 = vsel %vm263, %v248, 0.0
  %268 = vst [vmem:[#allocation1] ss:$2 sm:$0xff] %v28
  %s269 = scalar_lea.vmem [#allocation1], 16
  %270 = vst [vmem:[%s269] ss:$2 sm:$0xff] %v29
  %v271 = vld.sshfl [vmem:[#allocation1] sm:$0xff pattern:$0x75316420]
  %v272 = vld.sshfl [vmem:[#allocation1 + $0x8] sm:$0xff pattern:$0x75316420]
  %v273 = vld.sshfl [vmem:[#allocation1 + $0x10] sm:$0xff pattern:$0x75316420]
  %v274 = vld.sshfl [vmem:[#allocation1 + $0x18] sm:$0xff pattern:$0x75316420]
  %279 = vrot.lane.b32.xlu0 %v271, 1
  %v280 = vpop.permute.xlu0 %279
  %281 = vrot.lane.b32.xlu0 %v272, 1
  %v282 = vpop.permute.xlu0 %281
  %283 = vrot.lane.b32.xlu0 %v273, 1
  %v284 = vpop.permute.xlu0 %283
  %285 = vrot.lane.b32.xlu0 %v274, 1
  %v286 = vpop.permute.xlu0 %285
  %vm287 = vcmp.lt.s32.totalorder %v31, 1
  %v288 = vsel %vm287, %v284, %v286
  %v289 = vsel %vm287, %v282, %v284
  %v290 = vsel %vm287, %v280, %v282
  %v291 = vsel %vm287, %v286, %v280
  %v292 = vsel %vm139, 1, 0
  %v293 = vsel %vm140, 1, 0
  %v294 = vsel %vm141, 1, 0
  %v295 = vsel %vm142, 1, 0
  %vm296 = vcmp.eq.s32.totalorder %v292, 1
  %vm297 = vcmp.eq.s32.totalorder %v293, 1
  %vm298 = vcmp.eq.s32.totalorder %v294, 1
  %vm299 = vcmp.eq.s32.totalorder %v295, 1
  %v300 = vsel %vm296, %v291, 0.0
  %v301 = vsel %vm297, %v290, 0.0
  %v302 = vsel %vm298, %v289, 0.0
  %v303 = vsel %vm299, %v288, 0.0
  %304 = vst [vmem:[#allocation1] ss:$2 sm:$0xff] %v28
  %s305 = scalar_lea.vmem [#allocation1], 16
  %306 = vst [vmem:[%s305] ss:$2 sm:$0xff] %v29
  %v307 = vld.sshfl [vmem:[#allocation1] sm:$0xff pattern:$0x75316420]
  %v308 = vld.sshfl [vmem:[#allocation1 + $0x8] sm:$0xff pattern:$0x75316420]
  %v309 = vld.sshfl [vmem:[#allocation1 + $0x10] sm:$0xff pattern:$0x75316420]
  %v310 = vld.sshfl [vmem:[#allocation1 + $0x18] sm:$0xff pattern:$0x75316420]
  %315 = vrot.lane.b32.xlu0 %v307, 127
  %v316 = vpop.permute.xlu0 %315
  %317 = vrot.lane.b32.xlu0 %v308, 127
  %v318 = vpop.permute.xlu0 %317
  %319 = vrot.lane.b32.xlu0 %v309, 127
  %v320 = vpop.permute.xlu0 %319
  %321 = vrot.lane.b32.xlu0 %v310, 127
  %v322 = vpop.permute.xlu0 %321
  %vm323 = vcmp.lt.s32.totalorder %v31, 127
  %v324 = vsel %vm323, %v320, %v322
  %v325 = vsel %vm323, %v318, %v320
  %v326 = vsel %vm323, %v316, %v318
  %v327 = vsel %vm323, %v322, %v316
  %v328 = vsel %vm143, 1, 0
  %v329 = vsel %vm144, 1, 0
  %v330 = vsel %vm145, 1, 0
  %v331 = vsel %vm146, 1, 0
  %vm332 = vcmp.eq.s32.totalorder %v328, 1
  %vm333 = vcmp.eq.s32.totalorder %v329, 1
  %vm334 = vcmp.eq.s32.totalorder %v330, 1
  %vm335 = vcmp.eq.s32.totalorder %v331, 1
  %v336 = vsel %vm332, %v326, 0.0
  %v337 = vsel %vm333, %v325, 0.0
  %v338 = vsel %vm334, %v324, 0.0
  %v339 = vsel %vm335, %v327, 0.0
  %340 = vst [vmem:[#allocation1] ss:$2 sm:$0xff] %v28
  %s341 = scalar_lea.vmem [#allocation1], 16
  %342 = vst [vmem:[%s341] ss:$2 sm:$0xff] %v29
  %v343 = vld.sshfl [vmem:[#allocation1] sm:$0xff pattern:$0x75316420]
  %v344 = vld.sshfl [vmem:[#allocation1 + $0x8] sm:$0xff pattern:$0x75316420]
  %v345 = vld.sshfl [vmem:[#allocation1 + $0x10] sm:$0xff pattern:$0x75316420]
  %v346 = vld.sshfl [vmem:[#allocation1 + $0x18] sm:$0xff pattern:$0x75316420]
  %351 = vrot.lane.b32.xlu0 %v343, 113
  %v352 = vpop.permute.xlu0 %351
  %353 = vrot.lane.b32.xlu0 %v344, 113
  %v354 = vpop.permute.xlu0 %353
  %355 = vrot.lane.b32.xlu0 %v345, 113
  %v356 = vpop.permute.xlu0 %355
  %357 = vrot.lane.b32.xlu0 %v346, 113
  %v358 = vpop.permute.xlu0 %357
  %vm359 = vcmp.lt.s32.totalorder %v31, 113
  %v360 = vsel %vm359, %v356, %v358
  %v361 = vsel %vm359, %v354, %v356
  %v362 = vsel %vm359, %v352, %v354
  %v363 = vsel %vm359, %v358, %v352
  %vm364 = vmand %vm135, %vm139
  %vm365 = vmand %vm136, %vm140
  %vm366 = vmand %vm137, %vm141
  %vm367 = vmand %vm138, %vm142
  %v368 = vsel %vm364, 1, 0
  %v369 = vsel %vm365, 1, 0
  %v370 = vsel %vm366, 1, 0
  %v371 = vsel %vm367, 1, 0
  %vm372 = vcmp.eq.s32.totalorder %v368, 1
  %vm373 = vcmp.eq.s32.totalorder %v369, 1
  %vm374 = vcmp.eq.s32.totalorder %v370, 1
  %vm375 = vcmp.eq.s32.totalorder %v371, 1
  %v376 = vsel %vm372, %v362, 0.0
  %v377 = vsel %vm373, %v361, 0.0
  %v378 = vsel %vm374, %v360, 0.0
  %v379 = vsel %vm375, %v363, 0.0
  %380 = vst [vmem:[#allocation1] ss:$2 sm:$0xff] %v28
  %s381 = scalar_lea.vmem [#allocation1], 16
  %382 = vst [vmem:[%s381] ss:$2 sm:$0xff] %v29
  %v383 = vld.sshfl [vmem:[#allocation1] sm:$0xff pattern:$0x75316420]
  %v384 = vld.sshfl [vmem:[#allocation1 + $0x8] sm:$0xff pattern:$0x75316420]
  %v385 = vld.sshfl [vmem:[#allocation1 + $0x10] sm:$0xff pattern:$0x75316420]
  %v386 = vld.sshfl [vmem:[#allocation1 + $0x18] sm:$0xff pattern:$0x75316420]
  %391 = vrot.lane.b32.xlu0 %v383, 112
  %v392 = vpop.permute.xlu0 %391
  %393 = vrot.lane.b32.xlu0 %v384, 112
  %v394 = vpop.permute.xlu0 %393
  %395 = vrot.lane.b32.xlu0 %v385, 112
  %v396 = vpop.permute.xlu0 %395
  %397 = vrot.lane.b32.xlu0 %v386, 112
  %v398 = vpop.permute.xlu0 %397
  %vm399 = vcmp.lt.s32.totalorder %v31, 112
  %v400 = vsel %vm399, %v396, %v398
  %v401 = vsel %vm399, %v394, %v396
  %v402 = vsel %vm399, %v392, %v394
  %v403 = vsel %vm399, %v398, %v392
  %v404 = vsel %vm135, 1, 0
  %v405 = vsel %vm136, 1, 0
  %v406 = vsel %vm137, 1, 0
  %v407 = vsel %vm138, 1, 0
  %vm408 = vcmp.eq.s32.totalorder %v404, 1
  %vm409 = vcmp.eq.s32.totalorder %v405, 1
  %vm410 = vcmp.eq.s32.totalorder %v406, 1
  %vm411 = vcmp.eq.s32.totalorder %v407, 1
  %v412 = vsel %vm408, %v402, 0.0
  %v413 = vsel %vm409, %v401, 0.0
  %v414 = vsel %vm410, %v400, 0.0
  %v415 = vsel %vm411, %v403, 0.0
  %416 = vst [vmem:[#allocation1] ss:$2 sm:$0xff] %v28
  %s417 = scalar_lea.vmem [#allocation1], 16
  %418 = vst [vmem:[%s417] ss:$2 sm:$0xff] %v29
  %v419 = vld.sshfl [vmem:[#allocation1] sm:$0xff pattern:$0x75316420]
  %v420 = vld.sshfl [vmem:[#allocation1 + $0x8] sm:$0xff pattern:$0x75316420]
  %v421 = vld.sshfl [vmem:[#allocation1 + $0x10] sm:$0xff pattern:$0x75316420]
  %v422 = vld.sshfl [vmem:[#allocation1 + $0x18] sm:$0xff pattern:$0x75316420]
  %427 = vrot.lane.b32.xlu0 %v419, 111
  %v428 = vpop.permute.xlu0 %427
  %429 = vrot.lane.b32.xlu0 %v420, 111
  %v430 = vpop.permute.xlu0 %429
  %431 = vrot.lane.b32.xlu0 %v421, 111
  %v432 = vpop.permute.xlu0 %431
  %433 = vrot.lane.b32.xlu0 %v422, 111
  %v434 = vpop.permute.xlu0 %433
  %vm435 = vcmp.lt.s32.totalorder %v31, 111
  %v436 = vsel %vm435, %v432, %v434
  %v437 = vsel %vm435, %v430, %v432
  %v438 = vsel %vm435, %v428, %v430
  %v439 = vsel %vm435, %v434, %v428
  %vm440 = vmand %vm135, %vm143
  %vm441 = vmand %vm136, %vm144
  %vm442 = vmand %vm137, %vm145
  %vm443 = vmand %vm138, %vm146
  %v444 = vsel %vm440, 1, 0
  %v445 = vsel %vm441, 1, 0
  %v446 = vsel %vm442, 1, 0
  %v447 = vsel %vm443, 1, 0
  %vm448 = vcmp.eq.s32.totalorder %v444, 1
  %vm449 = vcmp.eq.s32.totalorder %v445, 1
  %vm450 = vcmp.eq.s32.totalorder %v446, 1
  %vm451 = vcmp.eq.s32.totalorder %v447, 1
  %v452 = vsel %vm448, %v438, 0.0
  %v453 = vsel %vm449, %v437, 0.0
  %v454 = vsel %vm450, %v436, 0.0
  %v455 = vsel %vm451, %v439, 0.0
  %v460 = vrot.slane %v224, 4
  %v461 = vrot.slane %v225, 4
  %v462 = vrot.slane %v226, 4
  %v463 = vrot.slane %v227, 4
  %v472 = vrot.slane %v300, 4
  %v473 = vrot.slane %v301, 4
  %v474 = vrot.slane %v302, 4
  %v475 = vrot.slane %v303, 4
  %480 = vst [vmem:[#allocation1] ss:$2 sm:$0xff] %v28
  %s481 = scalar_lea.vmem [#allocation1], 16
  %482 = vst [vmem:[%s481] ss:$2 sm:$0xff] %v29
  %v483 = vld.sshfl [vmem:[#allocation1] sm:$0xff pattern:$0x75316420]
  %v484 = vld.sshfl [vmem:[#allocation1 + $0x8] sm:$0xff pattern:$0x75316420]
  %v485 = vld.sshfl [vmem:[#allocation1 + $0x10] sm:$0xff pattern:$0x75316420]
  %v486 = vld.sshfl [vmem:[#allocation1 + $0x18] sm:$0xff pattern:$0x75316420]
  %v495 = vrot.slane %v336, 4
  %v496 = vrot.slane %v337, 4
  %v497 = vrot.slane %v338, 4
  %v498 = vrot.slane %v339, 4
  %v507 = vrot.slane %v412, 4
  %v508 = vrot.slane %v413, 4
  %v509 = vrot.slane %v414, 4
  %v510 = vrot.slane %v415, 4
  %vm515 = vcmask 1043456
  %v516 = vsel %vm515, %v188, %v460
  %v517 = vsel %vm515, %v189, %v461
  %v518 = vsel %vm515, %v190, %v462
  %v519 = vsel %vm515, %v191, %v463
  %v520 = vsel %vm515, %v264, %v472
  %v521 = vsel %vm515, %v265, %v473
  %v522 = vsel %vm515, %v266, %v474
  %v523 = vsel %vm515, %v267, %v475
  %v524 = vsel %vm515, %v483, %v495
  %v525 = vsel %vm515, %v484, %v496
  %v526 = vsel %vm515, %v485, %v497
  %v527 = vsel %vm515, %v486, %v498
  %v528 = vsel %vm515, %v376, %v507
  %v529 = vsel %vm515, %v377, %v508
  %v530 = vsel %vm515, %v378, %v509
  %v531 = vsel %vm515, %v379, %v510
  %533 = vset.pattern.permute.xlu0 0
  %534 = vperm.xlu0 %533, %v148
  %v535 = vpop.permute.xlu0 %534
  %vm537 = vcmask 293888
  %v539 = vsel %vm537, %v147, 0
  %v542 = vsel %vm515, %v452, 0
  %v545 = vsel %vm515, %v453, 0
  %v548 = vsel %vm515, %v454, 0
  %v551 = vsel %vm515, %v455, 0
  %553 = vmatpush.msra.mxu0 0.0
  %554 = vmatpush.msra.mxu0 0.0
  %555 = vmatpush.msra.mxu0 0.0
  %556 = vmatpush.msra.mxu0 0.0
  %557 = vmatpush.msra.mxu0 0.0
  %558 = vmatpush.msra.mxu0 0.0
  %559 = vmatpush.msra.mxu0 0.0
  %560 = vmatpush.msra.mxu0 0.0
  %561 = vmatpush.msra.mxu0 0.0
  %562 = vmatpush.msra.mxu0 0.0
  %563 = vmatpush.msra.mxu0 0.0
  %564 = vmatpush.msra.mxu0 %v542
  %565 = vmatpush.msra.mxu0 %v528
  %566 = vmatpush.msra.mxu0 %v524
  %567 = vmatpush.msra.mxu0 %v520
  %568 = vmatpush.msra.mxu0 %v516
  %569 = vmatmul.f32.gmra.mxu0 %v539
  %v570 = vpop.f32.mrf.mxu0
  %v571 = vadd.f32 %v535, %v570
  %572 = vdwg.mxu0
  %573 = vmatpush.msra.mxu0 0.0
  %574 = vmatpush.msra.mxu0 0.0
  %575 = vmatpush.msra.mxu0 0.0
  %576 = vmatpush.msra.mxu0 0.0
  %577 = vmatpush.msra.mxu0 0.0
  %578 = vmatpush.msra.mxu0 0.0
  %579 = vmatpush.msra.mxu0 0.0
  %580 = vmatpush.msra.mxu0 0.0
  %581 = vmatpush.msra.mxu0 0.0
  %582 = vmatpush.msra.mxu0 0.0
  %583 = vmatpush.msra.mxu0 0.0
  %584 = vmatpush.msra.mxu0 %v545
  %585 = vmatpush.msra.mxu0 %v529
  %586 = vmatpush.msra.mxu0 %v525
  %587 = vmatpush.msra.mxu0 %v521
  %588 = vmatpush.msra.mxu0 %v517
  %589 = vmatmul.f32.gmra.mxu0 %v539
  %v590 = vpop.f32.mrf.mxu0
  %v591 = vadd.f32 %v535, %v590
  %592 = vdwg.mxu0
  %593 = vmatpush.msra.mxu0 0.0
  %594 = vmatpush.msra.mxu0 0.0
  %595 = vmatpush.msra.mxu0 0.0
  %596 = vmatpush.msra.mxu0 0.0
  %597 = vmatpush.msra.mxu0 0.0
  %598 = vmatpush.msra.mxu0 0.0
  %599 = vmatpush.msra.mxu0 0.0
  %600 = vmatpush.msra.mxu0 0.0
  %601 = vmatpush.msra.mxu0 0.0
  %602 = vmatpush.msra.mxu0 0.0
  %603 = vmatpush.msra.mxu0 0.0
  %604 = vmatpush.msra.mxu0 %v548
  %605 = vmatpush.msra.mxu0 %v530
  %606 = vmatpush.msra.mxu0 %v526
  %607 = vmatpush.msra.mxu0 %v522
  %608 = vmatpush.msra.mxu0 %v518
  %609 = vmatmul.f32.gmra.mxu0 %v539
  %v610 = vpop.f32.mrf.mxu0
  %v611 = vadd.f32 %v535, %v610
  %612 = vdwg.mxu0
  %613 = vmatpush.msra.mxu0 0.0
  %614 = vmatpush.msra.mxu0 0.0
  %615 = vmatpush.msra.mxu0 0.0
  %616 = vmatpush.msra.mxu0 0.0
  %617 = vmatpush.msra.mxu0 0.0
  %618 = vmatpush.msra.mxu0 0.0
  %619 = vmatpush.msra.mxu0 0.0
  %620 = vmatpush.msra.mxu0 0.0
  %621 = vmatpush.msra.mxu0 0.0
  %622 = vmatpush.msra.mxu0 0.0
  %623 = vmatpush.msra.mxu0 0.0
  %624 = vmatpush.msra.mxu0 %v551
  %625 = vmatpush.msra.mxu0 %v531
  %626 = vmatpush.msra.mxu0 %v527
  %627 = vmatpush.msra.mxu0 %v523
  %628 = vmatpush.msra.mxu0 %v519
  %629 = vmatmul.f32.gmra.mxu0 %v539
  %v630 = vpop.f32.mrf.mxu0
  %v631 = vadd.f32 %v535, %v630
  %632 = vdwg.mxu0
  %vm633 = vcmp.ge.f32.partialorder %v571, 0.0
  %vm634 = vcmp.ge.f32.partialorder %v591, 0.0
  %vm635 = vcmp.ge.f32.partialorder %v611, 0.0
  %vm636 = vcmp.ge.f32.partialorder %v631, 0.0
  %v637 = vstv %s149
  %v638 = vmul.f32 %v637, %v571
  %v639 = vmul.f32 %v637, %v591
  %v640 = vmul.f32 %v637, %v611
  %v641 = vmul.f32 %v637, %v631
  %v642 = vsel %vm633, %v571, %v638
  %v643 = vsel %vm634, %v591, %v639
  %v644 = vsel %vm635, %v611, %v640
  %v645 = vsel %vm636, %v631, %v641
  %v646 = vld [vmem:[%s4] sm:$0xf]
  %v647 = vld [vmem:[%s5] sm:$0xf]
  %s648 = sld [smem:[#allocation3]]
  %649 = vrot.lane.b32.xlu0 %v642, 17
  %v650 = vpop.permute.xlu0 %649
  %651 = vrot.lane.b32.xlu0 %v643, 17
  %v652 = vpop.permute.xlu0 %651
  %653 = vrot.lane.b32.xlu0 %v644, 17
  %v654 = vpop.permute.xlu0 %653
  %655 = vrot.lane.b32.xlu0 %v645, 17
  %v656 = vpop.permute.xlu0 %655
  %v657 = vsel %vm171, %v654, %v656
  %v658 = vsel %vm171, %v652, %v654
  %v659 = vsel %vm171, %v650, %v652
  %v660 = vsel %vm171, %v656, %v650
  %v661 = vsel %vm184, %v660, 0.0
  %v662 = vsel %vm185, %v659, 0.0
  %v663 = vsel %vm186, %v658, 0.0
  %v664 = vsel %vm187, %v657, 0.0
  %665 = vrot.lane.b32.xlu0 %v642, 16
  %v666 = vpop.permute.xlu0 %665
  %667 = vrot.lane.b32.xlu0 %v643, 16
  %v668 = vpop.permute.xlu0 %667
  %669 = vrot.lane.b32.xlu0 %v644, 16
  %v670 = vpop.permute.xlu0 %669
  %671 = vrot.lane.b32.xlu0 %v645, 16
  %v672 = vpop.permute.xlu0 %671
  %v673 = vsel %vm211, %v670, %v672
  %v674 = vsel %vm211, %v668, %v670
  %v675 = vsel %vm211, %v666, %v668
  %v676 = vsel %vm211, %v672, %v666
  %v677 = vsel %vm220, %v676, 0.0
  %v678 = vsel %vm221, %v675, 0.0
  %v679 = vsel %vm222, %v674, 0.0
  %v680 = vsel %vm223, %v673, 0.0
  %681 = vrot.lane.b32.xlu0 %v642, 15
  %v682 = vpop.permute.xlu0 %681
  %683 = vrot.lane.b32.xlu0 %v643, 15
  %v684 = vpop.permute.xlu0 %683
  %685 = vrot.lane.b32.xlu0 %v644, 15
  %v686 = vpop.permute.xlu0 %685
  %687 = vrot.lane.b32.xlu0 %v645, 15
  %v688 = vpop.permute.xlu0 %687
  %v689 = vsel %vm247, %v686, %v688
  %v690 = vsel %vm247, %v684, %v686
  %v691 = vsel %vm247, %v682, %v684
  %v692 = vsel %vm247, %v688, %v682
  %v693 = vsel %vm260, %v692, 0.0
  %v694 = vsel %vm261, %v691, 0.0
  %v695 = vsel %vm262, %v690, 0.0
  %v696 = vsel %vm263, %v689, 0.0
  %697 = vrot.lane.b32.xlu0 %v642, 1
  %v698 = vpop.permute.xlu0 %697
  %699 = vrot.lane.b32.xlu0 %v643, 1
  %v700 = vpop.permute.xlu0 %699
  %701 = vrot.lane.b32.xlu0 %v644, 1
  %v702 = vpop.permute.xlu0 %701
  %703 = vrot.lane.b32.xlu0 %v645, 1
  %v704 = vpop.permute.xlu0 %703
  %v705 = vsel %vm287, %v702, %v704
  %v706 = vsel %vm287, %v700, %v702
  %v707 = vsel %vm287, %v698, %v700
  %v708 = vsel %vm287, %v704, %v698
  %v709 = vsel %vm296, %v708, 0.0
  %v710 = vsel %vm297, %v707, 0.0
  %v711 = vsel %vm298, %v706, 0.0
  %v712 = vsel %vm299, %v705, 0.0
  %713 = vrot.lane.b32.xlu0 %v642, 127
  %v714 = vpop.permute.xlu0 %713
  %715 = vrot.lane.b32.xlu0 %v643, 127
  %v716 = vpop.permute.xlu0 %715
  %717 = vrot.lane.b32.xlu0 %v644, 127
  %v718 = vpop.permute.xlu0 %717
  %719 = vrot.lane.b32.xlu0 %v645, 127
  %v720 = vpop.permute.xlu0 %719
  %v721 = vsel %vm323, %v718, %v720
  %v722 = vsel %vm323, %v716, %v718
  %v723 = vsel %vm323, %v714, %v716
  %v724 = vsel %vm323, %v720, %v714
  %v725 = vsel %vm332, %v723, 0.0
  %v726 = vsel %vm333, %v722, 0.0
  %v727 = vsel %vm334, %v721, 0.0
  %v728 = vsel %vm335, %v724, 0.0
  %729 = vrot.lane.b32.xlu0 %v642, 113
  %v730 = vpop.permute.xlu0 %729
  %731 = vrot.lane.b32.xlu0 %v643, 113
  %v732 = vpop.permute.xlu0 %731
  %733 = vrot.lane.b32.xlu0 %v644, 113
  %v734 = vpop.permute.xlu0 %733
  %735 = vrot.lane.b32.xlu0 %v645, 113
  %v736 = vpop.permute.xlu0 %735
  %v737 = vsel %vm359, %v734, %v736
  %v738 = vsel %vm359, %v732, %v734
  %v739 = vsel %vm359, %v730, %v732
  %v740 = vsel %vm359, %v736, %v730
  %v741 = vsel %vm372, %v739, 0.0
  %v742 = vsel %vm373, %v738, 0.0
  %v743 = vsel %vm374, %v737, 0.0
  %v744 = vsel %vm375, %v740, 0.0
  %745 = vrot.lane.b32.xlu0 %v642, 112
  %v746 = vpop.permute.xlu0 %745
  %747 = vrot.lane.b32.xlu0 %v643, 112
  %v748 = vpop.permute.xlu0 %747
  %749 = vrot.lane.b32.xlu0 %v644, 112
  %v750 = vpop.permute.xlu0 %749
  %751 = vrot.lane.b32.xlu0 %v645, 112
  %v752 = vpop.permute.xlu0 %751
  %v753 = vsel %vm399, %v750, %v752
  %v754 = vsel %vm399, %v748, %v750
  %v755 = vsel %vm399, %v746, %v748
  %v756 = vsel %vm399, %v752, %v746
  %v757 = vsel %vm408, %v755, 0.0
  %v758 = vsel %vm409, %v754, 0.0
  %v759 = vsel %vm410, %v753, 0.0
  %v760 = vsel %vm411, %v756, 0.0
  %761 = vrot.lane.b32.xlu0 %v642, 111
  %v762 = vpop.permute.xlu0 %761
  %763 = vrot.lane.b32.xlu0 %v643, 111
  %v764 = vpop.permute.xlu0 %763
  %765 = vrot.lane.b32.xlu0 %v644, 111
  %v766 = vpop.permute.xlu0 %765
  %767 = vrot.lane.b32.xlu0 %v645, 111
  %v768 = vpop.permute.xlu0 %767
  %v769 = vsel %vm435, %v766, %v768
  %v770 = vsel %vm435, %v764, %v766
  %v771 = vsel %vm435, %v762, %v764
  %v772 = vsel %vm435, %v768, %v762
  %v773 = vsel %vm448, %v771, 0.0
  %v774 = vsel %vm449, %v770, 0.0
  %v775 = vsel %vm450, %v769, 0.0
  %v776 = vsel %vm451, %v772, 0.0
  %v781 = vrot.slane %v677, 4
  %v782 = vrot.slane %v678, 4
  %v783 = vrot.slane %v679, 4
  %v784 = vrot.slane %v680, 4
  %v793 = vrot.slane %v709, 4
  %v794 = vrot.slane %v710, 4
  %v795 = vrot.slane %v711, 4
  %v796 = vrot.slane %v712, 4
  %v805 = vrot.slane %v725, 4
  %v806 = vrot.slane %v726, 4
  %v807 = vrot.slane %v727, 4
  %v808 = vrot.slane %v728, 4
  %v817 = vrot.slane %v757, 4
  %v818 = vrot.slane %v758, 4
  %v819 = vrot.slane %v759, 4
  %v820 = vrot.slane %v760, 4
  %v825 = vsel %vm515, %v661, %v781
  %v826 = vsel %vm515, %v662, %v782
  %v827 = vsel %vm515, %v663, %v783
  %v828 = vsel %vm515, %v664, %v784
  %v829 = vsel %vm515, %v693, %v793
  %v830 = vsel %vm515, %v694, %v794
  %v831 = vsel %vm515, %v695, %v795
  %v832 = vsel %vm515, %v696, %v796
  %v833 = vsel %vm515, %v642, %v805
  %v834 = vsel %vm515, %v643, %v806
  %v835 = vsel %vm515, %v644, %v807
  %v836 = vsel %vm515, %v645, %v808
  %v837 = vsel %vm515, %v741, %v817
  %v838 = vsel %vm515, %v742, %v818
  %v839 = vsel %vm515, %v743, %v819
  %v840 = vsel %vm515, %v744, %v820
  %842 = vset.pattern.permute.xlu0 0
  %843 = vperm.xlu0 %842, %v647
  %v844 = vpop.permute.xlu0 %843
  %v847 = vsel %vm537, %v646, 0
  %v850 = vsel %vm515, %v773, 0
  %v853 = vsel %vm515, %v774, 0
  %v856 = vsel %vm515, %v775, 0
  %v859 = vsel %vm515, %v776, 0
  %861 = vmatpush.msra.mxu0 0.0
  %862 = vmatpush.msra.mxu0 0.0
  %863 = vmatpush.msra.mxu0 0.0
  %864 = vmatpush.msra.mxu0 0.0
  %865 = vmatpush.msra.mxu0 0.0
  %866 = vmatpush.msra.mxu0 0.0
  %867 = vmatpush.msra.mxu0 0.0
  %868 = vmatpush.msra.mxu0 0.0
  %869 = vmatpush.msra.mxu0 0.0
  %870 = vmatpush.msra.mxu0 0.0
  %871 = vmatpush.msra.mxu0 0.0
  %872 = vmatpush.msra.mxu0 %v850
  %873 = vmatpush.msra.mxu0 %v837
  %874 = vmatpush.msra.mxu0 %v833
  %875 = vmatpush.msra.mxu0 %v829
  %876 = vmatpush.msra.mxu0 %v825
  %877 = vmatmul.f32.gmra.mxu0 %v847
  %v878 = vpop.f32.mrf.mxu0
  %v879 = vadd.f32 %v844, %v878
  %880 = vdwg.mxu0
  %881 = vmatpush.msra.mxu0 0.0
  %882 = vmatpush.msra.mxu0 0.0
  %883 = vmatpush.msra.mxu0 0.0
  %884 = vmatpush.msra.mxu0 0.0
  %885 = vmatpush.msra.mxu0 0.0
  %886 = vmatpush.msra.mxu0 0.0
  %887 = vmatpush.msra.mxu0 0.0
  %888 = vmatpush.msra.mxu0 0.0
  %889 = vmatpush.msra.mxu0 0.0
  %890 = vmatpush.msra.mxu0 0.0
  %891 = vmatpush.msra.mxu0 0.0
  %892 = vmatpush.msra.mxu0 %v853
  %893 = vmatpush.msra.mxu0 %v838
  %894 = vmatpush.msra.mxu0 %v834
  %895 = vmatpush.msra.mxu0 %v830
  %896 = vmatpush.msra.mxu0 %v826
  %897 = vmatmul.f32.gmra.mxu0 %v847
  %v898 = vpop.f32.mrf.mxu0
  %v899 = vadd.f32 %v844, %v898
  %900 = vdwg.mxu0
  %901 = vmatpush.msra.mxu0 0.0
  %902 = vmatpush.msra.mxu0 0.0
  %903 = vmatpush.msra.mxu0 0.0
  %904 = vmatpush.msra.mxu0 0.0
  %905 = vmatpush.msra.mxu0 0.0
  %906 = vmatpush.msra.mxu0 0.0
  %907 = vmatpush.msra.mxu0 0.0
  %908 = vmatpush.msra.mxu0 0.0
  %909 = vmatpush.msra.mxu0 0.0
  %910 = vmatpush.msra.mxu0 0.0
  %911 = vmatpush.msra.mxu0 0.0
  %912 = vmatpush.msra.mxu0 %v856
  %913 = vmatpush.msra.mxu0 %v839
  %914 = vmatpush.msra.mxu0 %v835
  %915 = vmatpush.msra.mxu0 %v831
  %916 = vmatpush.msra.mxu0 %v827
  %917 = vmatmul.f32.gmra.mxu0 %v847
  %v918 = vpop.f32.mrf.mxu0
  %v919 = vadd.f32 %v844, %v918
  %920 = vdwg.mxu0
  %921 = vmatpush.msra.mxu0 0.0
  %922 = vmatpush.msra.mxu0 0.0
  %923 = vmatpush.msra.mxu0 0.0
  %924 = vmatpush.msra.mxu0 0.0
  %925 = vmatpush.msra.mxu0 0.0
  %926 = vmatpush.msra.mxu0 0.0
  %927 = vmatpush.msra.mxu0 0.0
  %928 = vmatpush.msra.mxu0 0.0
  %929 = vmatpush.msra.mxu0 0.0
  %930 = vmatpush.msra.mxu0 0.0
  %931 = vmatpush.msra.mxu0 0.0
  %932 = vmatpush.msra.mxu0 %v859
  %933 = vmatpush.msra.mxu0 %v840
  %934 = vmatpush.msra.mxu0 %v836
  %935 = vmatpush.msra.mxu0 %v832
  %936 = vmatpush.msra.mxu0 %v828
  %937 = vmatmul.f32.gmra.mxu0 %v847
  %v938 = vpop.f32.mrf.mxu0
  %v939 = vadd.f32 %v844, %v938
  %940 = vdwg.mxu0
  %vm941 = vcmp.ge.f32.partialorder %v879, 0.0
  %vm942 = vcmp.ge.f32.partialorder %v899, 0.0
  %vm943 = vcmp.ge.f32.partialorder %v919, 0.0
  %vm944 = vcmp.ge.f32.partialorder %v939, 0.0
  %v945 = vstv %s648
  %v946 = vmul.f32 %v945, %v879
  %v947 = vmul.f32 %v945, %v899
  %v948 = vmul.f32 %v945, %v919
  %v949 = vmul.f32 %v945, %v939
  %v950 = vsel %vm941, %v879, %v946
  %v951 = vsel %vm942, %v899, %v947
  %v952 = vsel %vm943, %v919, %v948
  %v953 = vsel %vm944, %v939, %v949
  %954 = vst [vmem:[#allocation1] ss:$2 sm:$0xff] %v28
  %s955 = scalar_lea.vmem [#allocation1], 16
  %956 = vst [vmem:[%s955] ss:$2 sm:$0xff] %v29
  %v957 = vld.sshfl [vmem:[#allocation1] sm:$0xff pattern:$0x75316420]
  %v958 = vld.sshfl [vmem:[#allocation1 + $0x8] sm:$0xff pattern:$0x75316420]
  %v959 = vld.sshfl [vmem:[#allocation1 + $0x10] sm:$0xff pattern:$0x75316420]
  %v960 = vld.sshfl [vmem:[#allocation1 + $0x18] sm:$0xff pattern:$0x75316420]
  %v965 = vadd.f32 %v950, %v957
  %v966 = vadd.f32 %v951, %v958
  %v967 = vadd.f32 %v952, %v959
  %v968 = vadd.f32 %v953, %v960
  %v973 = vrot.slane %v966, 4
  %v974 = vrot.slane %v968, 4
  %v975 = vsel %vm515, %v965, %v973
  %v976 = vsel %vm515, %v967, %v974
  %979 = vst [vmem:[%s7] sm:$0xff] %v975
  %980 = vst [vmem:[%s7 + $0x8] sm:$0xff] %v976
  // Predicated region
  $region30: #{residual_block_forward.12} parent=0 // pred_check
    _
  $region31: #{residual_block_forward.12} parent=0 // pred_check_branch
    %982 = sbr.rel (0) target = $region33
  $region32: #{residual_block_forward.12} parent=0 // pred_region
    _
  $region33: #{residual_block_forward.12} parent=0 // pred_fallthru
    _
  // Predicated region
  $region34: #{residual_block_forward.12} parent=0 // pred_check
    _
  $region35: #{residual_block_forward.12} parent=0 // pred_check_branch
    %984 = sbr.rel (0) target = $region37
  $region36: #{residual_block_forward.12} parent=0 // pred_region
    _
  $region37: #{residual_block_forward.12} parent=0 // pred_fallthru
    _

// kernel: residual_block_forward.14
$region0: #{residual_block_forward.14}
  #allocation0 [shape = 'u32[]', space=smem, size = 0x4, offset = 0x4, fixed_abs, tag = 'smem constant byte address 0x4 - core index']
  #allocation1 [shape = 'u32[72,128]{1,0:T(1,128)}', space=vmem, size = 0x9000, scoped, tag = 'internal scratch']
  #allocation2 [shape = 'f32[1]{0:T(128)S(6)}', space=smem, size = 0x200, scoped, tag = 'scoped memory for residual_block_forward.14']
  %s0 = inlined_call_operand.vmem [shape: f32[8,128], index: 0, kind: input, shape index: {}]
  %s1 = inlined_call_operand.vmem [shape: f32[8,72], index: 1, kind: input, shape index: {}]
  %s2 = inlined_call_operand.vmem [shape: f32[8,1], index: 2, kind: input, shape index: {}]
  %s3 = inlined_call_operand.<no memory space> [shape: f32[1], index: 3, kind: input, shape index: {}]
  %s4 = inlined_call_operand.vmem [shape: f32[8,128], index: 4, kind: output, shape index: {}]
  %s5 = sld [smem:[#allocation0]]
  $region26: #{residual_block_forward.14} parent=0
    _
  %s7 = ssub.s32 1, %s5
  %s8 = scalar_select 0, %s7, %s5
  %9 = sst [smem:[#allocation2]] %s3
  // Predicated region
  $region2: #{residual_block_forward.14} parent=0 // pred_check
    _
  $region3: #{residual_block_forward.14} parent=0 // pred_check_branch
    %11 = sbr.rel (0) target = $region5
  $region4: #{residual_block_forward.14} parent=0 // pred_region
    _
  $region5: #{residual_block_forward.14} parent=0 // pred_fallthru
    _
  // Predicated region
  $region6: #{residual_block_forward.14} parent=0 // pred_check
    _
  $region7: #{residual_block_forward.14} parent=0 // pred_check_branch
    %13 = sbr.rel (0) target = $region9
  $region8: #{residual_block_forward.14} parent=0 // pred_region
    _
  $region9: #{residual_block_forward.14} parent=0 // pred_fallthru
    _
  // Predicated region
  $region10: #{residual_block_forward.14} parent=0 // pred_check
    _
  $region11: #{residual_block_forward.14} parent=0 // pred_check_branch
    %15 = sbr.rel (0) target = $region13
  $region12: #{residual_block_forward.14} parent=0 // pred_region
    _
  $region13: #{residual_block_forward.14} parent=0 // pred_fallthru
    _
  // Predicated region
  $region14: #{residual_block_forward.14} parent=0 // pred_check
    _
  $region15: #{residual_block_forward.14} parent=0 // pred_check_branch
    %17 = sbr.rel (0) target = $region17
  $region16: #{residual_block_forward.14} parent=0 // pred_region
    _
  $region17: #{residual_block_forward.14} parent=0 // pred_fallthru
    _
  %v18 = vld [vmem:[%s0] sm:$0xff]
  %v19 = vlaneseq
  %v20 = vand.u32 %v19, 127
  %vm21 = vcmp.lt.s32.totalorder %v20, 0
  %v22 = vsub.s32 0, %v20
  %v23 = vsel %vm21, %v22, %v20
  %v24 = vshrl.u32 %v23, 6
  %v25 = vand.u32 %v23, 63
  %v26 = vsub.s32 0, %v25
  %v27 = vsel %vm21, %v26, %v25
  %vm28 = vcmp.ne.s32.totalorder %v27, 0
  %vm29 = vcmp.lt.s32.totalorder %v27, 0
  %vm30 = vmand %vm29, %vm28
  %v31 = vadd.s32 %v27, 64
  %v32 = vsel %vm30, %v31, %v27
  %vm33 = vcmp.lt.s32.totalorder %v20, 0
  %v34 = vsub.s32 0, %v20
  %v35 = vsel %vm33, %v34, %v20
  %v36 = vshrl.u32 %v35, 3
  %v37 = vand.u32 %v35, 7
  %v38 = vsub.s32 0, %v37
  %v39 = vsel %vm33, %v38, %v37
  %vm40 = vcmp.ne.s32.totalorder %v39, 0
  %vm41 = vcmp.lt.s32.totalorder %v39, 0
  %vm42 = vmand %vm41, %vm40
  %v43 = vadd.s32 %v39, 8
  %v44 = vsel %vm42, %v43, %v39
  %vm45 = vcmp.ge.s32.totalorder %v32, 8
  %vm46 = vcmp.lt.s32.totalorder %v32, 56
  %vm47 = vcmp.ne.s32.totalorder %v44, 0
  %vm48 = vcmp.ne.s32.totalorder %v44, 7
  %v49 = vld [vmem:[%s1] sm:$0xff]
  %v50 = vld [vmem:[%s2] sm:$0xff]
  %s51 = sld [smem:[#allocation2]]
  %52 = vrot.lane.b32.xlu0 %v18, 9
  %v53 = vpop.permute.xlu0 %52
  %vm54 = vmand %vm45, %vm47
  %v55 = vsel %vm54, 1, 0
  %vm56 = vcmp.eq.s32.totalorder %v55, 1
  %v57 = vsel %vm56, %v53, 0.0
  %58 = vrot.lane.b32.xlu0 %v18, 8
  %v59 = vpop.permute.xlu0 %58
  %v60 = vsel %vm45, 1, 0
  %vm61 = vcmp.eq.s32.totalorder %v60, 1
  %v62 = vsel %vm61, %v59, 0.0
  %63 = vrot.lane.b32.xlu0 %v18, 7
  %v64 = vpop.permute.xlu0 %63
  %vm65 = vmand %vm45, %vm48
  %v66 = vsel %vm65, 1, 0
  %vm67 = vcmp.eq.s32.totalorder %v66, 1
  %v68 = vsel %vm67, %v64, 0.0
  %69 = vrot.lane.b32.xlu0 %v18, 1
  %v70 = vpop.permute.xlu0 %69
  %v71 = vsel %vm47, 1, 0
  %vm72 = vcmp.eq.s32.totalorder %v71, 1
  %v73 = vsel %vm72, %v70, 0.0
  %74 = vrot.lane.b32.xlu0 %v18, 127
  %v75 = vpop.permute.xlu0 %74
  %v76 = vsel %vm48, 1, 0
  %vm77 = vcmp.eq.s32.totalorder %v76, 1
  %v78 = vsel %vm77, %v75, 0.0
  %79 = vrot.lane.b32.xlu0 %v18, 121
  %v80 = vpop.permute.xlu0 %79
  %vm81 = vmand %vm46, %vm47
  %v82 = vsel %vm81, 1, 0
  %vm83 = vcmp.eq.s32.totalorder %v82, 1
  %v84 = vsel %vm83, %v80, 0.0
  %85 = vrot.lane.b32.xlu0 %v18, 120
  %v86 = vpop.permute.xlu0 %85
  %v87 = vsel %vm46, 1, 0
  %vm88 = vcmp.eq.s32.totalorder %v87, 1
  %v89 = vsel %vm88, %v86, 0.0
  %90 = vrot.lane.b32.xlu0 %v18, 119
  %v91 = vpop.permute.xlu0 %90
  %vm92 = vmand %vm46, %vm48
  %v93 = vsel %vm92, 1, 0
  %vm94 = vcmp.eq.s32.totalorder %v93, 1
  %v95 = vsel %vm94, %v91, 0.0
  %97 = vset.pattern.permute.xlu0 0
  %98 = vperm.xlu0 %97, %v50
  %v99 = vpop.permute.xlu0 %98
  %vm101 = vcmask 588800
  %v103 = vsel %vm101, %v49, 0
  %105 = vmatpush.msra.mxu0 0.0
  %106 = vmatpush.msra.mxu0 0.0
  %107 = vmatpush.msra.mxu0 0.0
  %108 = vmatpush.msra.mxu0 0.0
  %109 = vmatpush.msra.mxu0 0.0
  %110 = vmatpush.msra.mxu0 0.0
  %111 = vmatpush.msra.mxu0 0.0
  %112 = vmatpush.msra.mxu0 %v95
  %113 = vmatpush.msra.mxu0 %v89
  %114 = vmatpush.msra.mxu0 %v84
  %115 = vmatpush.msra.mxu0 %v78
  %116 = vmatpush.msra.mxu0 %v18
  %117 = vmatpush.msra.mxu0 %v73
  %118 = vmatpush.msra.mxu0 %v68
  %119 = vmatpush.msra.mxu0 %v62
  %120 = vmatpush.msra.mxu0 %v57
  %121 = vmatmul.f32.gmra.mxu0 %v103
  %v122 = vpop.f32.mrf.mxu0
  %v123 = vadd.f32 %v99, %v122
  %124 = vdwg.mxu0
  %vm125 = vcmp.ge.f32.partialorder %v123, 0.0
  %v126 = vstv %s51
  %v127 = vmul.f32 %v126, %v123
  %v128 = vsel %vm125, %v123, %v127
  %v129 = vadd.f32 %v128, %v18
  %130 = vst [vmem:[%s4] sm:$0xff] %v129
  // Predicated region
  $region18: #{residual_block_forward.14} parent=0 // pred_check
    _
  $region19: #{residual_block_forward.14} parent=0 // pred_check_branch
    %132 = sbr.rel (0) target = $region21
  $region20: #{residual_block_forward.14} parent=0 // pred_region
    _
  $region21: #{residual_block_forward.14} parent=0 // pred_fallthru
    _
  // Predicated region
  $region22: #{residual_block_forward.14} parent=0 // pred_check
    _
  $region23: #{residual_block_forward.14} parent=0 // pred_check_branch
    %134 = sbr.rel (0) target = $region25
  $region24: #{residual_block_forward.14} parent=0 // pred_region
    _
  $region25: #{residual_block_forward.14} parent=0 // pred_fallthru
    _

// kernel: residual_block_forward.17
$region0: #{residual_block_forward.17}
  #allocation0 [shape = 'u32[]', space=smem, size = 0x4, offset = 0x4, fixed_abs, tag = 'smem constant byte address 0x4 - core index']
  #allocation1 [shape = 'u32[72,128]{1,0:T(1,128)}', space=vmem, size = 0x9000, scoped, tag = 'internal scratch']
  #allocation2 [shape = 'f32[1]{0:T(128)S(6)}', space=smem, size = 0x200, scoped, tag = 'scoped memory for residual_block_forward.17']
  %s0 = inlined_call_operand.vmem [shape: f32[16,32], index: 0, kind: input, shape index: {}]
  %s1 = inlined_call_operand.vmem [shape: f32[32,16], index: 1, kind: input, shape index: {}]
  %s2 = inlined_call_operand.vmem [shape: f32[32,1], index: 2, kind: input, shape index: {}]
  %s3 = inlined_call_operand.<no memory space> [shape: f32[1], index: 3, kind: input, shape index: {}]
  %s4 = inlined_call_operand.vmem [shape: f32[32,32], index: 4, kind: output, shape index: {}]
  %s5 = sld [smem:[#allocation0]]
  $region26: #{residual_block_forward.17} parent=0
    _
  %s7 = ssub.s32 1, %s5
  %s8 = scalar_select 0, %s7, %s5
  %9 = sst [smem:[#allocation2]] %s3
  // Predicated region
  $region2: #{residual_block_forward.17} parent=0 // pred_check
    _
  $region3: #{residual_block_forward.17} parent=0 // pred_check_branch
    %11 = sbr.rel (0) target = $region5
  $region4: #{residual_block_forward.17} parent=0 // pred_region
    _
  $region5: #{residual_block_forward.17} parent=0 // pred_fallthru
    _
  // Predicated region
  $region6: #{residual_block_forward.17} parent=0 // pred_check
    _
  $region7: #{residual_block_forward.17} parent=0 // pred_check_branch
    %13 = sbr.rel (0) target = $region9
  $region8: #{residual_block_forward.17} parent=0 // pred_region
    _
  $region9: #{residual_block_forward.17} parent=0 // pred_fallthru
    _
  // Predicated region
  $region10: #{residual_block_forward.17} parent=0 // pred_check
    _
  $region11: #{residual_block_forward.17} parent=0 // pred_check_branch
    %15 = sbr.rel (0) target = $region13
  $region12: #{residual_block_forward.17} parent=0 // pred_region
    _
  $region13: #{residual_block_forward.17} parent=0 // pred_fallthru
    _
  // Predicated region
  $region14: #{residual_block_forward.17} parent=0 // pred_check
    _
  $region15: #{residual_block_forward.17} parent=0 // pred_check_branch
    %17 = sbr.rel (0) target = $region17
  $region16: #{residual_block_forward.17} parent=0 // pred_region
    _
  $region17: #{residual_block_forward.17} parent=0 // pred_fallthru
    _
  %v18 = vld [vmem:[%s0] sm:$0xff]
  %v19 = vld [vmem:[%s0 + $0x8] sm:$0xff]
  %v20 = vld [vmem:[%s1] sm:$0xff]
  %v21 = vld [vmem:[%s1 + $0x8] sm:$0xff]
  %v22 = vld [vmem:[%s1 + $0x10] sm:$0xff]
  %v23 = vld [vmem:[%s1 + $0x18] sm:$0xff]
  %v24 = vld [vmem:[%s2] sm:$0xff]
  %v25 = vld [vmem:[%s2 + $0x8] sm:$0xff]
  %v26 = vld [vmem:[%s2 + $0x10] sm:$0xff]
  %v27 = vld [vmem:[%s2 + $0x18] sm:$0xff]
  %29 = vset.pattern.permute.xlu0 0
  %30 = vperm.xlu0 %29, %v24
  %v31 = vpop.permute.xlu0 %30
  %34 = vset.pattern.permute.xlu0 0
  %35 = vperm.xlu0 %34, %v25
  %v36 = vpop.permute.xlu0 %35
  %39 = vset.pattern.permute.xlu0 0
  %40 = vperm.xlu0 %39, %v26
  %v41 = vpop.permute.xlu0 %40
  %44 = vset.pattern.permute.xlu0 0
  %45 = vperm.xlu0 %44, %v27
  %v46 = vpop.permute.xlu0 %45
  %vm48 = vcmask 130048
  %v50 = vsel %vm48, %v20, 0
  %v53 = vsel %vm48, %v21, 0
  %v56 = vsel %vm48, %v22, 0
  %v59 = vsel %vm48, %v23, 0
  %61 = vmatpush.msra.mxu0 0.0
  %62 = vmatpush.msra.mxu0 0.0
  %63 = vmatpush.msra.mxu0 0.0
  %64 = vmatpush.msra.mxu0 0.0
  %65 = vmatpush.msra.mxu0 0.0
  %66 = vmatpush.msra.mxu0 0.0
  %67 = vmatpush.msra.mxu0 0.0
  %68 = vmatpush.msra.mxu0 0.0
  %69 = vmatpush.msra.mxu0 0.0
  %70 = vmatpush.msra.mxu0 0.0
  %71 = vmatpush.msra.mxu0 0.0
  %72 = vmatpush.msra.mxu0 0.0
  %73 = vmatpush.msra.mxu0 0.0
  %74 = vmatpush.msra.mxu0 0.0
  %75 = vmatpush.msra.mxu0 %v19
  %76 = vmatpush.msra.mxu0 %v18
  %77 = vmatmul.f32.gmra.mxu0 %v50
  %v78 = vpop.f32.mrf.mxu0
  %v79 = vadd.f32 %v31, %v78
  %80 = vmatmul.f32.gmra.mxu0 %v53
  %v81 = vpop.f32.mrf.mxu0
  %v82 = vadd.f32 %v36, %v81
  %83 = vmatmul.f32.gmra.mxu0 %v56
  %v84 = vpop.f32.mrf.mxu0
  %v85 = vadd.f32 %v41, %v84
  %86 = vmatmul.f32.gmra.mxu0 %v59
  %v87 = vpop.f32.mrf.mxu0
  %v88 = vadd.f32 %v46, %v87
  %89 = vdwg.mxu0
  %vm90 = vcmask 261120
  %91 = vst.msk [vmem:[%s4] sm:$0xff] %vm90, %v79
  %92 = vst.msk [vmem:[%s4 + $0x8] sm:$0xff] %vm90, %v82
  %93 = vst.msk [vmem:[%s4 + $0x10] sm:$0xff] %vm90, %v85
  %94 = vst.msk [vmem:[%s4 + $0x18] sm:$0xff] %vm90, %v88
  // Predicated region
  $region18: #{residual_block_forward.17} parent=0 // pred_check
    _
  $region19: #{residual_block_forward.17} parent=0 // pred_check_branch
    %96 = sbr.rel (0) target = $region21
  $region20: #{residual_block_forward.17} parent=0 // pred_region
    _
  $region21: #{residual_block_forward.17} parent=0 // pred_fallthru
    _
  // Predicated region
  $region22: #{residual_block_forward.17} parent=0 // pred_check
    _
  $region23: #{residual_block_forward.17} parent=0 // pred_check_branch
    %98 = sbr.rel (0) target = $region25
  $region24: #{residual_block_forward.17} parent=0 // pred_region
    _
  $region25: #{residual_block_forward.17} parent=0 // pred_fallthru
    _

// kernel: residual_block_forward.15
$region0: #{residual_block_forward.15}
  #allocation0 [shape = 'u32[]', space=smem, size = 0x4, offset = 0x4, fixed_abs, tag = 'smem constant byte address 0x4 - core index']
  #allocation1 [shape = 'u32[72,128]{1,0:T(1,128)}', space=vmem, size = 0x9000, scoped, tag = 'internal scratch']
  #allocation2 [shape = 'f32[1]{0:T(128)S(6)}', space=smem, size = 0x200, scoped, tag = 'scoped memory for residual_block_forward.15']
  %s0 = inlined_call_operand.vmem [shape: f32[32,32], index: 0, kind: input, shape index: {}]
  %s1 = inlined_call_operand.vmem [shape: f32[16,288], index: 1, kind: input, shape index: {}]
  %s2 = inlined_call_operand.vmem [shape: f32[16,1], index: 2, kind: input, shape index: {}]
  %s3 = inlined_call_operand.<no memory space> [shape: f32[1], index: 3, kind: input, shape index: {}]
  %s4 = inlined_call_operand.vmem [shape: f32[16,32], index: 4, kind: output, shape index: {}]
  %s5 = sld [smem:[#allocation0]]
  $region26: #{residual_block_forward.15} parent=0
    _
  %s7 = ssub.s32 1, %s5
  %s8 = scalar_select 0, %s7, %s5
  %9 = sst [smem:[#allocation2]] %s3
  // Predicated region
  $region2: #{residual_block_forward.15} parent=0 // pred_check
    _
  $region3: #{residual_block_forward.15} parent=0 // pred_check_branch
    %11 = sbr.rel (0) target = $region5
  $region4: #{residual_block_forward.15} parent=0 // pred_region
    _
  $region5: #{residual_block_forward.15} parent=0 // pred_fallthru
    _
  // Predicated region
  $region6: #{residual_block_forward.15} parent=0 // pred_check
    _
  $region7: #{residual_block_forward.15} parent=0 // pred_check_branch
    %13 = sbr.rel (0) target = $region9
  $region8: #{residual_block_forward.15} parent=0 // pred_region
    _
  $region9: #{residual_block_forward.15} parent=0 // pred_fallthru
    _
  // Predicated region
  $region10: #{residual_block_forward.15} parent=0 // pred_check
    _
  $region11: #{residual_block_forward.15} parent=0 // pred_check_branch
    %15 = sbr.rel (0) target = $region13
  $region12: #{residual_block_forward.15} parent=0 // pred_region
    _
  $region13: #{residual_block_forward.15} parent=0 // pred_fallthru
    _
  // Predicated region
  $region14: #{residual_block_forward.15} parent=0 // pred_check
    _
  $region15: #{residual_block_forward.15} parent=0 // pred_check_branch
    %17 = sbr.rel (0) target = $region17
  $region16: #{residual_block_forward.15} parent=0 // pred_region
    _
  $region17: #{residual_block_forward.15} parent=0 // pred_fallthru
    _
  %v18 = vld [vmem:[%s0] sm:$0xff]
  %v19 = vld [vmem:[%s0 + $0x8] sm:$0xff]
  %v20 = vld [vmem:[%s0 + $0x10] sm:$0xff]
  %v21 = vld [vmem:[%s0 + $0x18] sm:$0xff]
  %v22 = vlaneseq
  %v23 = vand.u32 %v22, 127
  %vm24 = vcmp.lt.s32.totalorder %v23, 0
  %v25 = vsub.s32 0, %v23
  %v26 = vsel %vm24, %v25, %v23
  %v27 = vshrl.u32 %v26, 4
  %v28 = vand.u32 %v26, 15
  %v29 = vsub.s32 0, %v28
  %v30 = vsel %vm24, %v29, %v28
  %vm31 = vcmp.ne.s32.totalorder %v30, 0
  %vm32 = vcmp.lt.s32.totalorder %v30, 0
  %vm33 = vmand %vm32, %vm31
  %v34 = vadd.s32 %v30, 16
  %v35 = vsel %vm33, %v34, %v30
  %vm36 = vcmp.lt.s32.totalorder %v23, 0
  %v37 = vsub.s32 0, %v23
  %v38 = vsel %vm36, %v37, %v23
  %v39 = vshrl.u32 %v38, 2
  %v40 = vand.u32 %v38, 3
  %v41 = vsub.s32 0, %v40
  %v42 = vsel %vm36, %v41, %v40
  %vm43 = vcmp.ne.s32.totalorder %v42, 0
  %vm44 = vcmp.lt.s32.totalorder %v42, 0
  %vm45 = vmand %vm44, %vm43
  %v46 = vadd.s32 %v42, 4
  %v47 = vsel %vm45, %v46, %v42
  %vm48 = vcmp.ge.s32.totalorder %v35, 4
  %vm49 = vcmp.lt.s32.totalorder %v35, 12
  %vm50 = vcmp.ne.s32.totalorder %v47, 0
  %vm51 = vcmp.ne.s32.totalorder %v47, 3
  %v52 = vld [vmem:[%s1] sm:$0xff]
  %v53 = vld [vmem:[%s1 + $0x8] sm:$0xff]
  %v54 = vld [vmem:[%s1 + $0x10] sm:$0xff]
  %v55 = vld [vmem:[%s1 + $0x18] sm:$0xff]
  %v56 = vld [vmem:[%s1 + $0x20] sm:$0xff]
  %v57 = vld [vmem:[%s1 + $0x28] sm:$0xff]
  %v58 = vld [vmem:[%s2] sm:$0xff]
  %v59 = vld [vmem:[%s2 + $0x8] sm:$0xff]
  %s60 = sld [smem:[#allocation2]]
  %65 = vrot.lane.b32.xlu0 %v18, 5
  %v66 = vpop.permute.xlu0 %65
  %67 = vrot.lane.b32.xlu0 %v19, 5
  %v68 = vpop.permute.xlu0 %67
  %69 = vrot.lane.b32.xlu0 %v20, 5
  %v70 = vpop.permute.xlu0 %69
  %71 = vrot.lane.b32.xlu0 %v21, 5
  %v72 = vpop.permute.xlu0 %71
  %vm77 = vcmask 39936
  %v78 = vsel %vm77, 0.0, %v66
  %v79 = vsel %vm77, 0.0, %v68
  %v80 = vsel %vm77, 0.0, %v70
  %v81 = vsel %vm77, 0.0, %v72
  %vm82 = vmand %vm48, %vm50
  %v83 = vsel %vm82, 1, 0
  %vm84 = vcmp.eq.s32.totalorder %v83, 1
  %v85 = vsel %vm84, %v78, 0.0
  %v86 = vsel %vm84, %v79, 0.0
  %v87 = vsel %vm84, %v80, 0.0
  %v88 = vsel %vm84, %v81, 0.0
  %89 = vrot.lane.b32.xlu0 %v18, 4
  %v90 = vpop.permute.xlu0 %89
  %91 = vrot.lane.b32.xlu0 %v19, 4
  %v92 = vpop.permute.xlu0 %91
  %93 = vrot.lane.b32.xlu0 %v20, 4
  %v94 = vpop.permute.xlu0 %93
  %95 = vrot.lane.b32.xlu0 %v21, 4
  %v96 = vpop.permute.xlu0 %95
  %vm101 = vcmask 31744
  %v102 = vsel %vm101, 0.0, %v90
  %v103 = vsel %vm101, 0.0, %v92
  %v104 = vsel %vm101, 0.0, %v94
  %v105 = vsel %vm101, 0.0, %v96
  %v106 = vsel %vm48, 1, 0
  %vm107 = vcmp.eq.s32.totalorder %v106, 1
  %v108 = vsel %vm107, %v102, 0.0
  %v109 = vsel %vm107, %v103, 0.0
  %v110 = vsel %vm107, %v104, 0.0
  %v111 = vsel %vm107, %v105, 0.0
  %112 = vrot.lane.b32.xlu0 %v18, 3
  %v113 = vpop.permute.xlu0 %112
  %114 = vrot.lane.b32.xlu0 %v19, 3
  %v115 = vpop.permute.xlu0 %114
  %116 = vrot.lane.b32.xlu0 %v20, 3
  %v117 = vpop.permute.xlu0 %116
  %118 = vrot.lane.b32.xlu0 %v21, 3
  %v119 = vpop.permute.xlu0 %118
  %vm124 = vcmask 23552
  %v125 = vsel %vm124, 0.0, %v113
  %v126 = vsel %vm124, 0.0, %v115
  %v127 = vsel %vm124, 0.0, %v117
  %v128 = vsel %vm124, 0.0, %v119
  %vm129 = vmand %vm48, %vm51
  %v130 = vsel %vm129, 1, 0
  %vm131 = vcmp.eq.s32.totalorder %v130, 1
  %v132 = vsel %vm131, %v125, 0.0
  %v133 = vsel %vm131, %v126, 0.0
  %v134 = vsel %vm131, %v127, 0.0
  %v135 = vsel %vm131, %v128, 0.0
  %136 = vrot.lane.b32.xlu0 %v18, 1
  %v137 = vpop.permute.xlu0 %136
  %138 = vrot.lane.b32.xlu0 %v19, 1
  %v139 = vpop.permute.xlu0 %138
  %140 = vrot.lane.b32.xlu0 %v20, 1
  %v141 = vpop.permute.xlu0 %140
  %142 = vrot.lane.b32.xlu0 %v21, 1
  %v143 = vpop.permute.xlu0 %142
  %vm148 = vcmask 7168
  %v149 = vsel %vm148, 0.0, %v137
  %v150 = vsel %vm148, 0.0, %v139
  %v151 = vsel %vm148, 0.0, %v141
  %v152 = vsel %vm148, 0.0, %v143
  %v153 = vsel %vm50, 1, 0
  %vm154 = vcmp.eq.s32.totalorder %v153, 1
  %v155 = vsel %vm154, %v149, 0.0
  %v156 = vsel %vm154, %v150, 0.0
  %v157 = vsel %vm154, %v151, 0.0
  %v158 = vsel %vm154, %v152, 0.0
  %159 = vrot.lane.b32.xlu0 %v18, 127
  %v160 = vpop.permute.xlu0 %159
  %161 = vrot.lane.b32.xlu0 %v19, 127
  %v162 = vpop.permute.xlu0 %161
  %163 = vrot.lane.b32.xlu0 %v20, 127
  %v164 = vpop.permute.xlu0 %163
  %165 = vrot.lane.b32.xlu0 %v21, 127
  %v166 = vpop.permute.xlu0 %165
  %vm171 = vcmask 252928
  %v172 = vsel %vm171, %v160, 0.0
  %v173 = vsel %vm171, %v162, 0.0
  %v174 = vsel %vm171, %v164, 0.0
  %v175 = vsel %vm171, %v166, 0.0
  %v176 = vsel %vm51, 1, 0
  %vm177 = vcmp.eq.s32.totalorder %v176, 1
  %v178 = vsel %vm177, %v172, 0.0
  %v179 = vsel %vm177, %v173, 0.0
  %v180 = vsel %vm177, %v174, 0.0
  %v181 = vsel %vm177, %v175, 0.0
  %182 = vrot.lane.b32.xlu0 %v18, 125
  %v183 = vpop.permute.xlu0 %182
  %184 = vrot.lane.b32.xlu0 %v19, 125
  %v185 = vpop.permute.xlu0 %184
  %186 = vrot.lane.b32.xlu0 %v20, 125
  %v187 = vpop.permute.xlu0 %186
  %188 = vrot.lane.b32.xlu0 %v21, 125
  %v189 = vpop.permute.xlu0 %188
  %vm194 = vcmask 236544
  %v195 = vsel %vm194, %v183, 0.0
  %v196 = vsel %vm194, %v185, 0.0
  %v197 = vsel %vm194, %v187, 0.0
  %v198 = vsel %vm194, %v189, 0.0
  %vm199 = vmand %vm49, %vm50
  %v200 = vsel %vm199, 1, 0
  %vm201 = vcmp.eq.s32.totalorder %v200, 1
  %v202 = vsel %vm201, %v195, 0.0
  %v203 = vsel %vm201, %v196, 0.0
  %v204 = vsel %vm201, %v197, 0.0
  %v205 = vsel %vm201, %v198, 0.0
  %206 = vrot.lane.b32.xlu0 %v18, 124
  %v207 = vpop.permute.xlu0 %206
  %208 = vrot.lane.b32.xlu0 %v19, 124
  %v209 = vpop.permute.xlu0 %208
  %210 = vrot.lane.b32.xlu0 %v20, 124
  %v211 = vpop.permute.xlu0 %210
  %212 = vrot.lane.b32.xlu0 %v21, 124
  %v213 = vpop.permute.xlu0 %212
  %vm218 = vcmask 228352
  %v219 = vsel %vm218, %v207, 0.0
  %v220 = vsel %vm218, %v209, 0.0
  %v221 = vsel %vm218, %v211, 0.0
  %v222 = vsel %vm218, %v213, 0.0
  %v223 = vsel %vm49, 1, 0
  %vm224 = vcmp.eq.s32.totalorder %v223, 1
  %v225 = vsel %vm224, %v219, 0.0
  %v226 = vsel %vm224, %v220, 0.0
  %v227 = vsel %vm224, %v221, 0.0
  %v228 = vsel %vm224, %v222, 0.0
  %229 = vrot.lane.b32.xlu0 %v18, 123
  %v230 = vpop.permute.xlu0 %229
  %231 = vrot.lane.b32.xlu0 %v19, 123
  %v232 = vpop.permute.xlu0 %231
  %233 = vrot.lane.b32.xlu0 %v20, 123
  %v234 = vpop.permute.xlu0 %233
  %235 = vrot.lane.b32.xlu0 %v21, 123
  %v236 = vpop.permute.xlu0 %235
  %vm241 = vcmask 220160
  %v242 = vsel %vm241, %v230, 0.0
  %v243 = vsel %vm241, %v232, 0.0
  %v244 = vsel %vm241, %v234, 0.0
  %v245 = vsel %vm241, %v236, 0.0
  %vm246 = vmand %vm49, %vm51
  %v247 = vsel %vm246, 1, 0
  %vm248 = vcmp.eq.s32.totalorder %v247, 1
  %v249 = vsel %vm248, %v242, 0.0
  %v250 = vsel %vm248, %v243, 0.0
  %v251 = vsel %vm248, %v244, 0.0
  %v252 = vsel %vm248, %v245, 0.0
  %254 = vset.pattern.permute.xlu0 0
  %255 = vperm.xlu0 %254, %v58
  %v256 = vpop.permute.xlu0 %255
  %259 = vset.pattern.permute.xlu0 0
  %260 = vperm.xlu0 %259, %v59
  %v261 = vpop.permute.xlu0 %260
  %vm263 = vcmask 261120
  %v265 = vsel %vm263, %v54, 0
  %v268 = vsel %vm263, %v57, 0
  %270 = vmatpush.msra.mxu0 %v158
  %271 = vmatpush.msra.mxu0 %v157
  %272 = vmatpush.msra.mxu0 %v156
  %273 = vmatpush.msra.mxu0 %v155
  %274 = vmatpush.msra.mxu0 %v135
  %275 = vmatpush.msra.mxu0 %v134
  %276 = vmatpush.msra.mxu0 %v133
  %277 = vmatpush.msra.mxu0 %v132
  %278 = vmatpush.msra.mxu0 %v111
  %279 = vmatpush.msra.mxu0 %v110
  %280 = vmatpush.msra.mxu0 %v109
  %281 = vmatpush.msra.mxu0 %v108
  %282 = vmatpush.msra.mxu0 %v88
  %283 = vmatpush.msra.mxu0 %v87
  %284 = vmatpush.msra.mxu0 %v86
  %285 = vmatpush.msra.mxu0 %v85
  %286 = vmatmul.f32.gmra.mxu0 %v52
  %v287 = vpop.f32.mrf.mxu0
  %v288 = vadd.f32 %v256, %v287
  %289 = vmatmul.f32.gmra.mxu0 %v55
  %v290 = vpop.f32.mrf.mxu0
  %v291 = vadd.f32 %v261, %v290
  %292 = vdwg.mxu0
  %293 = vmatpush.msra.mxu0 %v228
  %294 = vmatpush.msra.mxu0 %v227
  %295 = vmatpush.msra.mxu0 %v226
  %296 = vmatpush.msra.mxu0 %v225
  %297 = vmatpush.msra.mxu0 %v205
  %298 = vmatpush.msra.mxu0 %v204
  %299 = vmatpush.msra.mxu0 %v203
  %300 = vmatpush.msra.mxu0 %v202
  %301 = vmatpush.msra.mxu0 %v181
  %302 = vmatpush.msra.mxu0 %v180
  %303 = vmatpush.msra.mxu0 %v179
  %304 = vmatpush.msra.mxu0 %v178
  %305 = vmatpush.msra.mxu0 %v21
  %306 = vmatpush.msra.mxu0 %v20
  %307 = vmatpush.msra.mxu0 %v19
  %308 = vmatpush.msra.mxu0 %v18
  %309 = vmatmul.f32.gmra.mxu0 %v53
  %v310 = vpop.f32.mrf.mxu0
  %v311 = vadd.f32 %v288, %v310
  %312 = vmatmul.f32.gmra.mxu0 %v56
  %v313 = vpop.f32.mrf.mxu0
  %v314 = vadd.f32 %v291, %v313
  %315 = vdwg.mxu0
  %316 = vmatpush.msra.mxu0 0.0
  %317 = vmatpush.msra.mxu0 0.0
  %318 = vmatpush.msra.mxu0 0.0
  %319 = vmatpush.msra.mxu0 0.0
  %320 = vmatpush.msra.mxu0 0.0
  %321 = vmatpush.msra.mxu0 0.0
  %322 = vmatpush.msra.mxu0 0.0
  %323 = vmatpush.msra.mxu0 0.0
  %324 = vmatpush.msra.mxu0 0.0
  %325 = vmatpush.msra.mxu0 0.0
  %326 = vmatpush.msra.mxu0 0.0
  %327 = vmatpush.msra.mxu0 0.0
  %328 = vmatpush.msra.mxu0 %v252
  %329 = vmatpush.msra.mxu0 %v251
  %330 = vmatpush.msra.mxu0 %v250
  %331 = vmatpush.msra.mxu0 %v249
  %332 = vmatmul.f32.gmra.mxu0 %v265
  %v333 = vpop.f32.mrf.mxu0
  %v334 = vadd.f32 %v311, %v333
  %335 = vmatmul.f32.gmra.mxu0 %v268
  %v336 = vpop.f32.mrf.mxu0
  %v337 = vadd.f32 %v314, %v336
  %338 = vdwg.mxu0
  %vm339 = vcmp.ge.f32.partialorder %v334, 0.0
  %vm340 = vcmp.ge.f32.partialorder %v337, 0.0
  %v341 = vstv %s60
  %v342 = vmul.f32 %v341, %v334
  %v343 = vmul.f32 %v341, %v337
  %v344 = vsel %vm339, %v334, %v342
  %v345 = vsel %vm340, %v337, %v343
  %346 = vst.msk [vmem:[%s4] sm:$0xff] %vm263, %v344
  %347 = vst.msk [vmem:[%s4 + $0x8] sm:$0xff] %vm263, %v345
  // Predicated region
  $region18: #{residual_block_forward.15} parent=0 // pred_check
    _
  $region19: #{residual_block_forward.15} parent=0 // pred_check_branch
    %349 = sbr.rel (0) target = $region21
  $region20: #{residual_block_forward.15} parent=0 // pred_region
    _
  $region21: #{residual_block_forward.15} parent=0 // pred_fallthru
    _
  // Predicated region
  $region22: #{residual_block_forward.15} parent=0 // pred_check
    _
  $region23: #{residual_block_forward.15} parent=0 // pred_check_branch
    %351 = sbr.rel (0) target = $region25
  $region24: #{residual_block_forward.15} parent=0 // pred_region
    _
  $region25: #{residual_block_forward.15} parent=0 // pred_fallthru
    _

// kernel: residual_block_forward.16
$region0: #{residual_block_forward.16}
  #allocation0 [shape = 'u32[]', space=smem, size = 0x4, offset = 0x4, fixed_abs, tag = 'smem constant byte address 0x4 - core index']
  #allocation1 [shape = 'u32[72,128]{1,0:T(1,128)}', space=vmem, size = 0x9000, scoped, tag = 'internal scratch']
  #allocation2 [shape = 'f32[1]{0:T(128)S(6)}', space=smem, size = 0x200, scoped, tag = 'scoped memory for residual_block_forward.16']
  %s0 = inlined_call_operand.vmem [shape: f32[16,32], index: 0, kind: input, shape index: {}]
  %s1 = inlined_call_operand.vmem [shape: f32[16,144], index: 1, kind: input, shape index: {}]
  %s2 = inlined_call_operand.vmem [shape: f32[16,1], index: 2, kind: input, shape index: {}]
  %s3 = inlined_call_operand.<no memory space> [shape: f32[1], index: 3, kind: input, shape index: {}]
  %s4 = inlined_call_operand.vmem [shape: f32[16,32], index: 4, kind: output, shape index: {}]
  %s5 = sld [smem:[#allocation0]]
  $region26: #{residual_block_forward.16} parent=0
    _
  %s7 = ssub.s32 1, %s5
  %s8 = scalar_select 0, %s7, %s5
  %9 = sst [smem:[#allocation2]] %s3
  // Predicated region
  $region2: #{residual_block_forward.16} parent=0 // pred_check
    _
  $region3: #{residual_block_forward.16} parent=0 // pred_check_branch
    %11 = sbr.rel (0) target = $region5
  $region4: #{residual_block_forward.16} parent=0 // pred_region
    _
  $region5: #{residual_block_forward.16} parent=0 // pred_fallthru
    _
  // Predicated region
  $region6: #{residual_block_forward.16} parent=0 // pred_check
    _
  $region7: #{residual_block_forward.16} parent=0 // pred_check_branch
    %13 = sbr.rel (0) target = $region9
  $region8: #{residual_block_forward.16} parent=0 // pred_region
    _
  $region9: #{residual_block_forward.16} parent=0 // pred_fallthru
    _
  // Predicated region
  $region10: #{residual_block_forward.16} parent=0 // pred_check
    _
  $region11: #{residual_block_forward.16} parent=0 // pred_check_branch
    %15 = sbr.rel (0) target = $region13
  $region12: #{residual_block_forward.16} parent=0 // pred_region
    _
  $region13: #{residual_block_forward.16} parent=0 // pred_fallthru
    _
  // Predicated region
  $region14: #{residual_block_forward.16} parent=0 // pred_check
    _
  $region15: #{residual_block_forward.16} parent=0 // pred_check_branch
    %17 = sbr.rel (0) target = $region17
  $region16: #{residual_block_forward.16} parent=0 // pred_region
    _
  $region17: #{residual_block_forward.16} parent=0 // pred_fallthru
    _
  %v18 = vld [vmem:[%s0] sm:$0xff]
  %v19 = vld [vmem:[%s0 + $0x8] sm:$0xff]
  %v20 = vlaneseq
  %v21 = vand.u32 %v20, 127
  %vm22 = vcmp.lt.s32.totalorder %v21, 0
  %v23 = vsub.s32 0, %v21
  %v24 = vsel %vm22, %v23, %v21
  %v25 = vshrl.u32 %v24, 4
  %v26 = vand.u32 %v24, 15
  %v27 = vsub.s32 0, %v26
  %v28 = vsel %vm22, %v27, %v26
  %vm29 = vcmp.ne.s32.totalorder %v28, 0
  %vm30 = vcmp.lt.s32.totalorder %v28, 0
  %vm31 = vmand %vm30, %vm29
  %v32 = vadd.s32 %v28, 16
  %v33 = vsel %vm31, %v32, %v28
  %vm34 = vcmp.lt.s32.totalorder %v21, 0
  %v35 = vsub.s32 0, %v21
  %v36 = vsel %vm34, %v35, %v21
  %v37 = vshrl.u32 %v36, 2
  %v38 = vand.u32 %v36, 3
  %v39 = vsub.s32 0, %v38
  %v40 = vsel %vm34, %v39, %v38
  %vm41 = vcmp.ne.s32.totalorder %v40, 0
  %vm42 = vcmp.lt.s32.totalorder %v40, 0
  %vm43 = vmand %vm42, %vm41
  %v44 = vadd.s32 %v40, 4
  %v45 = vsel %vm43, %v44, %v40
  %vm46 = vcmp.ge.s32.totalorder %v33, 4
  %vm47 = vcmp.lt.s32.totalorder %v33, 12
  %vm48 = vcmp.ne.s32.totalorder %v45, 0
  %vm49 = vcmp.ne.s32.totalorder %v45, 3
  %v50 = vld [vmem:[%s1] sm:$0xff]
  %v51 = vld [vmem:[%s1 + $0x8] sm:$0xff]
  %v52 = vld [vmem:[%s1 + $0x10] sm:$0xff]
  %v53 = vld [vmem:[%s1 + $0x18] sm:$0xff]
  %v54 = vld [vmem:[%s2] sm:$0xff]
  %v55 = vld [vmem:[%s2 + $0x8] sm:$0xff]
  %s56 = sld [smem:[#allocation2]]
  %59 = vrot.lane.b32.xlu0 %v18, 5
  %v60 = vpop.permute.xlu0 %59
  %61 = vrot.lane.b32.xlu0 %v19, 5
  %v62 = vpop.permute.xlu0 %61
  %vm65 = vcmask 39936
  %v66 = vsel %vm65, 0.0, %v60
  %v67 = vsel %vm65, 0.0, %v62
  %vm68 = vmand %vm46, %vm48
  %v69 = vsel %vm68, 1, 0
  %vm70 = vcmp.eq.s32.totalorder %v69, 1
  %v71 = vsel %vm70, %v66, 0.0
  %v72 = vsel %vm70, %v67, 0.0
  %73 = vrot.lane.b32.xlu0 %v18, 4
  %v74 = vpop.permute.xlu0 %73
  %75 = vrot.lane.b32.xlu0 %v19, 4
  %v76 = vpop.permute.xlu0 %75
  %vm79 = vcmask 31744
  %v80 = vsel %vm79, 0.0, %v74
  %v81 = vsel %vm79, 0.0, %v76
  %v82 = vsel %vm46, 1, 0
  %vm83 = vcmp.eq.s32.totalorder %v82, 1
  %v84 = vsel %vm83, %v80, 0.0
  %v85 = vsel %vm83, %v81, 0.0
  %86 = vrot.lane.b32.xlu0 %v18, 3
  %v87 = vpop.permute.xlu0 %86
  %88 = vrot.lane.b32.xlu0 %v19, 3
  %v89 = vpop.permute.xlu0 %88
  %vm92 = vcmask 23552
  %v93 = vsel %vm92, 0.0, %v87
  %v94 = vsel %vm92, 0.0, %v89
  %vm95 = vmand %vm46, %vm49
  %v96 = vsel %vm95, 1, 0
  %vm97 = vcmp.eq.s32.totalorder %v96, 1
  %v98 = vsel %vm97, %v93, 0.0
  %v99 = vsel %vm97, %v94, 0.0
  %100 = vrot.lane.b32.xlu0 %v18, 1
  %v101 = vpop.permute.xlu0 %100
  %102 = vrot.lane.b32.xlu0 %v19, 1
  %v103 = vpop.permute.xlu0 %102
  %vm106 = vcmask 7168
  %v107 = vsel %vm106, 0.0, %v101
  %v108 = vsel %vm106, 0.0, %v103
  %v109 = vsel %vm48, 1, 0
  %vm110 = vcmp.eq.s32.totalorder %v109, 1
  %v111 = vsel %vm110, %v107, 0.0
  %v112 = vsel %vm110, %v108, 0.0
  %113 = vrot.lane.b32.xlu0 %v18, 127
  %v114 = vpop.permute.xlu0 %113
  %115 = vrot.lane.b32.xlu0 %v19, 127
  %v116 = vpop.permute.xlu0 %115
  %vm119 = vcmask 252928
  %v120 = vsel %vm119, %v114, 0.0
  %v121 = vsel %vm119, %v116, 0.0
  %v122 = vsel %vm49, 1, 0
  %vm123 = vcmp.eq.s32.totalorder %v122, 1
  %v124 = vsel %vm123, %v120, 0.0
  %v125 = vsel %vm123, %v121, 0.0
  %126 = vrot.lane.b32.xlu0 %v18, 125
  %v127 = vpop.permute.xlu0 %126
  %128 = vrot.lane.b32.xlu0 %v19, 125
  %v129 = vpop.permute.xlu0 %128
  %vm132 = vcmask 236544
  %v133 = vsel %vm132, %v127, 0.0
  %v134 = vsel %vm132, %v129, 0.0
  %vm135 = vmand %vm47, %vm48
  %v136 = vsel %vm135, 1, 0
  %vm137 = vcmp.eq.s32.totalorder %v136, 1
  %v138 = vsel %vm137, %v133, 0.0
  %v139 = vsel %vm137, %v134, 0.0
  %140 = vrot.lane.b32.xlu0 %v18, 124
  %v141 = vpop.permute.xlu0 %140
  %142 = vrot.lane.b32.xlu0 %v19, 124
  %v143 = vpop.permute.xlu0 %142
  %vm146 = vcmask 228352
  %v147 = vsel %vm146, %v141, 0.0
  %v148 = vsel %vm146, %v143, 0.0
  %v149 = vsel %vm47, 1, 0
  %vm150 = vcmp.eq.s32.totalorder %v149, 1
  %v151 = vsel %vm150, %v147, 0.0
  %v152 = vsel %vm150, %v148, 0.0
  %153 = vrot.lane.b32.xlu0 %v18, 123
  %v154 = vpop.permute.xlu0 %153
  %155 = vrot.lane.b32.xlu0 %v19, 123
  %v156 = vpop.permute.xlu0 %155
  %vm159 = vcmask 220160
  %v160 = vsel %vm159, %v154, 0.0
  %v161 = vsel %vm159, %v156, 0.0
  %vm162 = vmand %vm47, %vm49
  %v163 = vsel %vm162, 1, 0
  %vm164 = vcmp.eq.s32.totalorder %v163, 1
  %v165 = vsel %vm164, %v160, 0.0
  %v166 = vsel %vm164, %v161, 0.0
  %168 = vset.pattern.permute.xlu0 0
  %169 = vperm.xlu0 %168, %v54
  %v170 = vpop.permute.xlu0 %169
  %173 = vset.pattern.permute.xlu0 0
  %174 = vperm.xlu0 %173, %v55
  %v175 = vpop.permute.xlu0 %174
  %vm177 = vcmask 130048
  %v179 = vsel %vm177, %v51, 0
  %v182 = vsel %vm177, %v53, 0
  %184 = vmatpush.msra.mxu0 %v152
  %185 = vmatpush.msra.mxu0 %v151
  %186 = vmatpush.msra.mxu0 %v139
  %187 = vmatpush.msra.mxu0 %v138
  %188 = vmatpush.msra.mxu0 %v125
  %189 = vmatpush.msra.mxu0 %v124
  %190 = vmatpush.msra.mxu0 %v19
  %191 = vmatpush.msra.mxu0 %v18
  %192 = vmatpush.msra.mxu0 %v112
  %193 = vmatpush.msra.mxu0 %v111
  %194 = vmatpush.msra.mxu0 %v99
  %195 = vmatpush.msra.mxu0 %v98
  %196 = vmatpush.msra.mxu0 %v85
  %197 = vmatpush.msra.mxu0 %v84
  %198 = vmatpush.msra.mxu0 %v72
  %199 = vmatpush.msra.mxu0 %v71
  %200 = vmatmul.f32.gmra.mxu0 %v50
  %v201 = vpop.f32.mrf.mxu0
  %v202 = vadd.f32 %v170, %v201
  %203 = vmatmul.f32.gmra.mxu0 %v52
  %v204 = vpop.f32.mrf.mxu0
  %v205 = vadd.f32 %v175, %v204
  %206 = vdwg.mxu0
  %207 = vmatpush.msra.mxu0 0.0
  %208 = vmatpush.msra.mxu0 0.0
  %209 = vmatpush.msra.mxu0 0.0
  %210 = vmatpush.msra.mxu0 0.0
  %211 = vmatpush.msra.mxu0 0.0
  %212 = vmatpush.msra.mxu0 0.0
  %213 = vmatpush.msra.mxu0 0.0
  %214 = vmatpush.msra.mxu0 0.0
  %215 = vmatpush.msra.mxu0 0.0
  %216 = vmatpush.msra.mxu0 0.0
  %217 = vmatpush.msra.mxu0 0.0
  %218 = vmatpush.msra.mxu0 0.0
  %219 = vmatpush.msra.mxu0 0.0
  %220 = vmatpush.msra.mxu0 0.0
  %221 = vmatpush.msra.mxu0 %v166
  %222 = vmatpush.msra.mxu0 %v165
  %223 = vmatmul.f32.gmra.mxu0 %v179
  %v224 = vpop.f32.mrf.mxu0
  %v225 = vadd.f32 %v202, %v224
  %226 = vmatmul.f32.gmra.mxu0 %v182
  %v227 = vpop.f32.mrf.mxu0
  %v228 = vadd.f32 %v205, %v227
  %229 = vdwg.mxu0
  %vm230 = vcmp.ge.f32.partialorder %v225, 0.0
  %vm231 = vcmp.ge.f32.partialorder %v228, 0.0
  %v232 = vstv %s56
  %v233 = vmul.f32 %v232, %v225
  %v234 = vmul.f32 %v232, %v228
  %v235 = vsel %vm230, %v225, %v233
  %v236 = vsel %vm231, %v228, %v234
  %v237 = vadd.f32 %v235, %v18
  %v238 = vadd.f32 %v236, %v19
  %vm239 = vcmask 261120
  %240 = vst.msk [vmem:[%s4] sm:$0xff] %vm239, %v237
  %241 = vst.msk [vmem:[%s4 + $0x8] sm:$0xff] %vm239, %v238
  // Predicated region
  $region18: #{residual_block_forward.16} parent=0 // pred_check
    _
  $region19: #{residual_block_forward.16} parent=0 // pred_check_branch
    %243 = sbr.rel (0) target = $region21
  $region20: #{residual_block_forward.16} parent=0 // pred_region
    _
  $region21: #{residual_block_forward.16} parent=0 // pred_fallthru
    _
  // Predicated region
  $region22: #{residual_block_forward.16} parent=0 // pred_check
    _
  $region23: #{residual_block_forward.16} parent=0 // pred_check_branch
    %245 = sbr.rel (0) target = $region25
  $region24: #{residual_block_forward.16} parent=0 // pred_region
    _
  $region25: #{residual_block_forward.16} parent=0 // pred_fallthru
    _

// kernel: residual_block_forward.18
$region0: #{residual_block_forward.18}
  #allocation0 [shape = 'u32[]', space=smem, size = 0x4, offset = 0x4, fixed_abs, tag = 'smem constant byte address 0x4 - core index']
  #allocation1 [shape = 'u32[72,128]{1,0:T(1,128)}', space=vmem, size = 0x9000, scoped, tag = 'internal scratch']
  %s0 = inlined_call_operand.vmem [shape: f32[8,128], index: 0, kind: input, shape index: {}]
  %s1 = inlined_call_operand.vmem [shape: f32[8,128], index: 1, kind: input, shape index: {}]
  %s2 = inlined_call_operand.vmem [shape: f32[8,8], index: 2, kind: input, shape index: {}]
  %s3 = inlined_call_operand.vmem [shape: f32[8,8], index: 3, kind: input, shape index: {}]
  %s4 = inlined_call_operand.vmem [shape: f32[8,1], index: 4, kind: input, shape index: {}]
  %s5 = inlined_call_operand.vmem [shape: f32[8,128], index: 5, kind: output, shape index: {}]
  %s6 = sld [smem:[#allocation0]]
  $region30: #{residual_block_forward.18} parent=0
    _
  %s8 = ssub.s32 1, %s6
  %s9 = scalar_select 0, %s8, %s6
  // Predicated region
  $region2: #{residual_block_forward.18} parent=0 // pred_check
    _
  $region3: #{residual_block_forward.18} parent=0 // pred_check_branch
    %11 = sbr.rel (0) target = $region5
  $region4: #{residual_block_forward.18} parent=0 // pred_region
    _
  $region5: #{residual_block_forward.18} parent=0 // pred_fallthru
    _
  // Predicated region
  $region6: #{residual_block_forward.18} parent=0 // pred_check
    _
  $region7: #{residual_block_forward.18} parent=0 // pred_check_branch
    %13 = sbr.rel (0) target = $region9
  $region8: #{residual_block_forward.18} parent=0 // pred_region
    _
  $region9: #{residual_block_forward.18} parent=0 // pred_fallthru
    _
  // Predicated region
  $region10: #{residual_block_forward.18} parent=0 // pred_check
    _
  $region11: #{residual_block_forward.18} parent=0 // pred_check_branch
    %15 = sbr.rel (0) target = $region13
  $region12: #{residual_block_forward.18} parent=0 // pred_region
    _
  $region13: #{residual_block_forward.18} parent=0 // pred_fallthru
    _
  // Predicated region
  $region14: #{residual_block_forward.18} parent=0 // pred_check
    _
  $region15: #{residual_block_forward.18} parent=0 // pred_check_branch
    %17 = sbr.rel (0) target = $region17
  $region16: #{residual_block_forward.18} parent=0 // pred_region
    _
  $region17: #{residual_block_forward.18} parent=0 // pred_fallthru
    _
  // Predicated region
  $region18: #{residual_block_forward.18} parent=0 // pred_check
    _
  $region19: #{residual_block_forward.18} parent=0 // pred_check_branch
    %19 = sbr.rel (0) target = $region21
  $region20: #{residual_block_forward.18} parent=0 // pred_region
    _
  $region21: #{residual_block_forward.18} parent=0 // pred_fallthru
    _
  %v20 = vld [vmem:[%s2] sm:$0xff]
  %v21 = vld [vmem:[%s0] sm:$0xff]
  %v22 = vld [vmem:[%s3] sm:$0xff]
  %v23 = vld [vmem:[%s1] sm:$0xff]
  %vm24 = vcmask 64512
  %v26 = vsel %vm24, %v22, 0
  %28 = vmatpush.msra.mxu0 0.0
  %29 = vmatpush.msra.mxu0 0.0
  %30 = vmatpush.msra.mxu0 0.0
  %31 = vmatpush.msra.mxu0 0.0
  %32 = vmatpush.msra.mxu0 0.0
  %33 = vmatpush.msra.mxu0 0.0
  %34 = vmatpush.msra.mxu0 0.0
  %35 = vmatpush.msra.mxu0 0.0
  %36 = vmatpush.msra.mxu0 0.0
  %37 = vmatpush.msra.mxu0 0.0
  %38 = vmatpush.msra.mxu0 0.0
  %39 = vmatpush.msra.mxu0 0.0
  %40 = vmatpush.msra.mxu0 0.0
  %41 = vmatpush.msra.mxu0 0.0
  %42 = vmatpush.msra.mxu0 0.0
  %43 = vmatpush.msra.mxu0 %v23
  %44 = vmatmul.f32.gmra.mxu0 %v26
  %v45 = vpop.f32.mrf.mxu0
  %v46 = vadd.f32 0.0, %v45
  %47 = vdwg.mxu0
  %v49 = vsel %vm24, %v20, 0
  %51 = vmatpush.msra.mxu0 0.0
  %52 = vmatpush.msra.mxu0 0.0
  %53 = vmatpush.msra.mxu0 0.0
  %54 = vmatpush.msra.mxu0 0.0
  %55 = vmatpush.msra.mxu0 0.0
  %56 = vmatpush.msra.mxu0 0.0
  %57 = vmatpush.msra.mxu0 0.0
  %58 = vmatpush.msra.mxu0 0.0
  %59 = vmatpush.msra.mxu0 0.0
  %60 = vmatpush.msra.mxu0 0.0
  %61 = vmatpush.msra.mxu0 0.0
  %62 = vmatpush.msra.mxu0 0.0
  %63 = vmatpush.msra.mxu0 0.0
  %64 = vmatpush.msra.mxu0 0.0
  %65 = vmatpush.msra.mxu0 0.0
  %66 = vmatpush.msra.mxu0 %v21
  %67 = vmatmul.f32.gmra.mxu0 %v49
  %v68 = vpop.f32.mrf.mxu0
  %v69 = vadd.f32 %v46, %v68
  %70 = vdwg.mxu0
  %v71 = vld [vmem:[%s4] sm:$0xff]
  %73 = vset.pattern.permute.xlu0 0
  %74 = vperm.xlu0 %73, %v71
  %v75 = vpop.permute.xlu0 %74
  %v77 = vadd.f32 %v69, %v75
  %78 = vst [vmem:[%s5] sm:$0xff] %v77
  // Predicated region
  $region22: #{residual_block_forward.18} parent=0 // pred_check
    _
  $region23: #{residual_block_forward.18} parent=0 // pred_check_branch
    %80 = sbr.rel (0) target = $region25
  $region24: #{residual_block_forward.18} parent=0 // pred_region
    _
  $region25: #{residual_block_forward.18} parent=0 // pred_fallthru
    _
  // Predicated region
  $region26: #{residual_block_forward.18} parent=0 // pred_check
    _
  $region27: #{residual_block_forward.18} parent=0 // pred_check_branch
    %82 = sbr.rel (0) target = $region29
  $region28: #{residual_block_forward.18} parent=0 // pred_region
    _
  $region29: #{residual_block_forward.18} parent=0 // pred_fallthru
    _

// kernel: residual_block_forward.20
$region0: #{residual_block_forward.20}
  #allocation0 [shape = 'u32[]', space=smem, size = 0x4, offset = 0x4, fixed_abs, tag = 'smem constant byte address 0x4 - core index']
  #allocation1 [shape = 'u32[72,128]{1,0:T(1,128)}', space=vmem, size = 0x9000, scoped, tag = 'internal scratch']
  #allocation2 [shape = 'f32[1]{0:T(128)S(6)}', space=smem, size = 0x200, scoped, tag = 'scoped memory for residual_block_forward.20']
  %s0 = inlined_call_operand.vmem [shape: f32[8,128], index: 0, kind: input, shape index: {}]
  %s1 = inlined_call_operand.vmem [shape: f32[16,8], index: 1, kind: input, shape index: {}]
  %s2 = inlined_call_operand.vmem [shape: f32[16,1], index: 2, kind: input, shape index: {}]
  %s3 = inlined_call_operand.<no memory space> [shape: f32[1], index: 3, kind: input, shape index: {}]
  %s4 = inlined_call_operand.vmem [shape: f32[16,128], index: 4, kind: output, shape index: {}]
  %s5 = sld [smem:[#allocation0]]
  $region26: #{residual_block_forward.20} parent=0
    _
  %s7 = ssub.s32 1, %s5
  %s8 = scalar_select 0, %s7, %s5
  %9 = sst [smem:[#allocation2]] %s3
  // Predicated region
  $region2: #{residual_block_forward.20} parent=0 // pred_check
    _
  $region3: #{residual_block_forward.20} parent=0 // pred_check_branch
    %11 = sbr.rel (0) target = $region5
  $region4: #{residual_block_forward.20} parent=0 // pred_region
    _
  $region5: #{residual_block_forward.20} parent=0 // pred_fallthru
    _
  // Predicated region
  $region6: #{residual_block_forward.20} parent=0 // pred_check
    _
  $region7: #{residual_block_forward.20} parent=0 // pred_check_branch
    %13 = sbr.rel (0) target = $region9
  $region8: #{residual_block_forward.20} parent=0 // pred_region
    _
  $region9: #{residual_block_forward.20} parent=0 // pred_fallthru
    _
  // Predicated region
  $region10: #{residual_block_forward.20} parent=0 // pred_check
    _
  $region11: #{residual_block_forward.20} parent=0 // pred_check_branch
    %15 = sbr.rel (0) target = $region13
  $region12: #{residual_block_forward.20} parent=0 // pred_region
    _
  $region13: #{residual_block_forward.20} parent=0 // pred_fallthru
    _
  // Predicated region
  $region14: #{residual_block_forward.20} parent=0 // pred_check
    _
  $region15: #{residual_block_forward.20} parent=0 // pred_check_branch
    %17 = sbr.rel (0) target = $region17
  $region16: #{residual_block_forward.20} parent=0 // pred_region
    _
  $region17: #{residual_block_forward.20} parent=0 // pred_fallthru
    _
  %v18 = vld [vmem:[%s0] sm:$0xff]
  %v19 = vld [vmem:[%s1] sm:$0xff]
  %v20 = vld [vmem:[%s1 + $0x8] sm:$0xff]
  %v21 = vld [vmem:[%s2] sm:$0xff]
  %v22 = vld [vmem:[%s2 + $0x8] sm:$0xff]
  %24 = vset.pattern.permute.xlu0 0
  %25 = vperm.xlu0 %24, %v21
  %v26 = vpop.permute.xlu0 %25
  %29 = vset.pattern.permute.xlu0 0
  %30 = vperm.xlu0 %29, %v22
  %v31 = vpop.permute.xlu0 %30
  %vm33 = vcmask 64512
  %v35 = vsel %vm33, %v19, 0
  %v38 = vsel %vm33, %v20, 0
  %40 = vmatpush.msra.mxu0 0.0
  %41 = vmatpush.msra.mxu0 0.0
  %42 = vmatpush.msra.mxu0 0.0
  %43 = vmatpush.msra.mxu0 0.0
  %44 = vmatpush.msra.mxu0 0.0
  %45 = vmatpush.msra.mxu0 0.0
  %46 = vmatpush.msra.mxu0 0.0
  %47 = vmatpush.msra.mxu0 0.0
  %48 = vmatpush.msra.mxu0 0.0
  %49 = vmatpush.msra.mxu0 0.0
  %50 = vmatpush.msra.mxu0 0.0
  %51 = vmatpush.msra.mxu0 0.0
  %52 = vmatpush.msra.mxu0 0.0
  %53 = vmatpush.msra.mxu0 0.0
  %54 = vmatpush.msra.mxu0 0.0
  %55 = vmatpush.msra.mxu0 %v18
  %56 = vmatmul.f32.gmra.mxu0 %v35
  %v57 = vpop.f32.mrf.mxu0
  %v58 = vadd.f32 %v26, %v57
  %59 = vmatmul.f32.gmra.mxu0 %v38
  %v60 = vpop.f32.mrf.mxu0
  %v61 = vadd.f32 %v31, %v60
  %62 = vdwg.mxu0
  %63 = vst [vmem:[%s4] sm:$0xff] %v58
  %64 = vst [vmem:[%s4 + $0x8] sm:$0xff] %v61
  // Predicated region
  $region18: #{residual_block_forward.20} parent=0 // pred_check
    _
  $region19: #{residual_block_forward.20} parent=0 // pred_check_branch
    %66 = sbr.rel (0) target = $region21
  $region20: #{residual_block_forward.20} parent=0 // pred_region
    _
  $region21: #{residual_block_forward.20} parent=0 // pred_fallthru
    _
  // Predicated region
  $region22: #{residual_block_forward.20} parent=0 // pred_check
    _
  $region23: #{residual_block_forward.20} parent=0 // pred_check_branch
    %68 = sbr.rel (0) target = $region25
  $region24: #{residual_block_forward.20} parent=0 // pred_region
    _
  $region25: #{residual_block_forward.20} parent=0 // pred_fallthru
    _

// kernel: residual_block_forward.21
$region0: #{residual_block_forward.21}
  #allocation0 [shape = 'u32[]', space=smem, size = 0x4, offset = 0x4, fixed_abs, tag = 'smem constant byte address 0x4 - core index']
  #allocation1 [shape = 'u32[72,128]{1,0:T(1,128)}', space=vmem, size = 0x9000, scoped, tag = 'internal scratch']
  %s0 = inlined_call_operand.vmem [shape: f32[4,512], index: 0, kind: input, shape index: {}]
  %s1 = inlined_call_operand.vmem [shape: f32[4,512], index: 1, kind: input, shape index: {}]
  %s2 = inlined_call_operand.vmem [shape: f32[4,4], index: 2, kind: input, shape index: {}]
  %s3 = inlined_call_operand.vmem [shape: f32[4,4], index: 3, kind: input, shape index: {}]
  %s4 = inlined_call_operand.vmem [shape: f32[4,1], index: 4, kind: input, shape index: {}]
  %s5 = inlined_call_operand.vmem [shape: f32[4,512], index: 5, kind: output, shape index: {}]
  %s6 = sld [smem:[#allocation0]]
  $region30: #{residual_block_forward.21} parent=0
    _
  %s8 = ssub.s32 1, %s6
  %s9 = scalar_select 0, %s8, %s6
  // Predicated region
  $region2: #{residual_block_forward.21} parent=0 // pred_check
    _
  $region3: #{residual_block_forward.21} parent=0 // pred_check_branch
    %11 = sbr.rel (0) target = $region5
  $region4: #{residual_block_forward.21} parent=0 // pred_region
    _
  $region5: #{residual_block_forward.21} parent=0 // pred_fallthru
    _
  // Predicated region
  $region6: #{residual_block_forward.21} parent=0 // pred_check
    _
  $region7: #{residual_block_forward.21} parent=0 // pred_check_branch
    %13 = sbr.rel (0) target = $region9
  $region8: #{residual_block_forward.21} parent=0 // pred_region
    _
  $region9: #{residual_block_forward.21} parent=0 // pred_fallthru
    _
  // Predicated region
  $region10: #{residual_block_forward.21} parent=0 // pred_check
    _
  $region11: #{residual_block_forward.21} parent=0 // pred_check_branch
    %15 = sbr.rel (0) target = $region13
  $region12: #{residual_block_forward.21} parent=0 // pred_region
    _
  $region13: #{residual_block_forward.21} parent=0 // pred_fallthru
    _
  // Predicated region
  $region14: #{residual_block_forward.21} parent=0 // pred_check
    _
  $region15: #{residual_block_forward.21} parent=0 // pred_check_branch
    %17 = sbr.rel (0) target = $region17
  $region16: #{residual_block_forward.21} parent=0 // pred_region
    _
  $region17: #{residual_block_forward.21} parent=0 // pred_fallthru
    _
  // Predicated region
  $region18: #{residual_block_forward.21} parent=0 // pred_check
    _
  $region19: #{residual_block_forward.21} parent=0 // pred_check_branch
    %19 = sbr.rel (0) target = $region21
  $region20: #{residual_block_forward.21} parent=0 // pred_region
    _
  $region21: #{residual_block_forward.21} parent=0 // pred_fallthru
    _
  %v20 = vld [vmem:[%s2] sm:$0xf]
  %v21 = vld [vmem:[%s0] sm:$0xff]
  %v22 = vld [vmem:[%s0 + $0x8] sm:$0xff]
  %v23 = vld [vmem:[%s3] sm:$0xf]
  %v24 = vld [vmem:[%s1] sm:$0xff]
  %v25 = vld [vmem:[%s1 + $0x8] sm:$0xff]
  %28 = vst [vmem:[#allocation1] ss:$2 sm:$0xff] %v24
  %s29 = scalar_lea.vmem [#allocation1], 16
  %30 = vst [vmem:[%s29] ss:$2 sm:$0xff] %v25
  %v31 = vld.sshfl [vmem:[#allocation1] sm:$0xff pattern:$0x75316420]
  %v32 = vld.sshfl [vmem:[#allocation1 + $0x8] sm:$0xff pattern:$0x75316420]
  %v33 = vld.sshfl [vmem:[#allocation1 + $0x10] sm:$0xff pattern:$0x75316420]
  %v34 = vld.sshfl [vmem:[#allocation1 + $0x18] sm:$0xff pattern:$0x75316420]
  %vm35 = vcmask 31744
  %v37 = vsel %vm35, %v23, 0
  %vm39 = vcmask 1043456
  %v40 = vsel %vm39, %v31, 0
  %v42 = vsel %vm39, %v32, 0
  %v44 = vsel %vm39, %v33, 0
  %v46 = vsel %vm39, %v34, 0
  %48 = vmatpush.msra.mxu0 0.0
  %49 = vmatpush.msra.mxu0 0.0
  %50 = vmatpush.msra.mxu0 0.0
  %51 = vmatpush.msra.mxu0 0.0
  %52 = vmatpush.msra.mxu0 0.0
  %53 = vmatpush.msra.mxu0 0.0
  %54 = vmatpush.msra.mxu0 0.0
  %55 = vmatpush.msra.mxu0 0.0
  %56 = vmatpush.msra.mxu0 0.0
  %57 = vmatpush.msra.mxu0 0.0
  %58 = vmatpush.msra.mxu0 0.0
  %59 = vmatpush.msra.mxu0 0.0
  %60 = vmatpush.msra.mxu0 0.0
  %61 = vmatpush.msra.mxu0 0.0
  %62 = vmatpush.msra.mxu0 0.0
  %63 = vmatpush.msra.mxu0 %v40
  %64 = vmatmul.f32.gmra.mxu0 %v37
  %v65 = vpop.f32.mrf.mxu0
  %v66 = vadd.f32 0.0, %v65
  %67 = vdwg.mxu0
  %68 = vmatpush.msra.mxu0 0.0
  %69 = vmatpush.msra.mxu0 0.0
  %70 = vmatpush.msra.mxu0 0.0
  %71 = vmatpush.msra.mxu0 0.0
  %72 = vmatpush.msra.mxu0 0.0
  %73 = vmatpush.msra.mxu0 0.0
  %74 = vmatpush.msra.mxu0 0.0
  %75 = vmatpush.msra.mxu0 0.0
  %76 = vmatpush.msra.mxu0 0.0
  %77 = vmatpush.msra.mxu0 0.0
  %78 = vmatpush.msra.mxu0 0.0
  %79 = vmatpush.msra.mxu0 0.0
  %80 = vmatpush.msra.mxu0 0.0
  %81 = vmatpush.msra.mxu0 0.0
  %82 = vmatpush.msra.mxu0 0.0
  %83 = vmatpush.msra.mxu0 %v42
  %84 = vmatmul.f32.gmra.mxu0 %v37
  %v85 = vpop.f32.mrf.mxu0
  %v86 = vadd.f32 0.0, %v85
  %87 = vdwg.mxu0
  %88 = vmatpush.msra.mxu0 0.0
  %89 = vmatpush.msra.mxu0 0.0
  %90 = vmatpush.msra.mxu0 0.0
  %91 = vmatpush.msra.mxu0 0.0
  %92 = vmatpush.msra.mxu0 0.0
  %93 = vmatpush.msra.mxu0 0.0
  %94 = vmatpush.msra.mxu0 0.0
  %95 = vmatpush.msra.mxu0 0.0
  %96 = vmatpush.msra.mxu0 0.0
  %97 = vmatpush.msra.mxu0 0.0
  %98 = vmatpush.msra.mxu0 0.0
  %99 = vmatpush.msra.mxu0 0.0
  %100 = vmatpush.msra.mxu0 0.0
  %101 = vmatpush.msra.mxu0 0.0
  %102 = vmatpush.msra.mxu0 0.0
  %103 = vmatpush.msra.mxu0 %v44
  %104 = vmatmul.f32.gmra.mxu0 %v37
  %v105 = vpop.f32.mrf.mxu0
  %v106 = vadd.f32 0.0, %v105
  %107 = vdwg.mxu0
  %108 = vmatpush.msra.mxu0 0.0
  %109 = vmatpush.msra.mxu0 0.0
  %110 = vmatpush.msra.mxu0 0.0
  %111 = vmatpush.msra.mxu0 0.0
  %112 = vmatpush.msra.mxu0 0.0
  %113 = vmatpush.msra.mxu0 0.0
  %114 = vmatpush.msra.mxu0 0.0
  %115 = vmatpush.msra.mxu0 0.0
  %116 = vmatpush.msra.mxu0 0.0
  %117 = vmatpush.msra.mxu0 0.0
  %118 = vmatpush.msra.mxu0 0.0
  %119 = vmatpush.msra.mxu0 0.0
  %120 = vmatpush.msra.mxu0 0.0
  %121 = vmatpush.msra.mxu0 0.0
  %122 = vmatpush.msra.mxu0 0.0
  %123 = vmatpush.msra.mxu0 %v46
  %124 = vmatmul.f32.gmra.mxu0 %v37
  %v125 = vpop.f32.mrf.mxu0
  %v126 = vadd.f32 0.0, %v125
  %127 = vdwg.mxu0
  %130 = vst [vmem:[#allocation1] ss:$2 sm:$0xff] %v21
  %s131 = scalar_lea.vmem [#allocation1], 16
  %132 = vst [vmem:[%s131] ss:$2 sm:$0xff] %v22
  %v133 = vld.sshfl [vmem:[#allocation1] sm:$0xff pattern:$0x75316420]
  %v134 = vld.sshfl [vmem:[#allocation1 + $0x8] sm:$0xff pattern:$0x75316420]
  %v135 = vld.sshfl [vmem:[#allocation1 + $0x10] sm:$0xff pattern:$0x75316420]
  %v136 = vld.sshfl [vmem:[#allocation1 + $0x18] sm:$0xff pattern:$0x75316420]
  %v138 = vsel %vm35, %v20, 0
  %v140 = vsel %vm39, %v133, 0
  %v142 = vsel %vm39, %v134, 0
  %v144 = vsel %vm39, %v135, 0
  %v146 = vsel %vm39, %v136, 0
  %148 = vmatpush.msra.mxu0 0.0
  %149 = vmatpush.msra.mxu0 0.0
  %150 = vmatpush.msra.mxu0 0.0
  %151 = vmatpush.msra.mxu0 0.0
  %152 = vmatpush.msra.mxu0 0.0
  %153 = vmatpush.msra.mxu0 0.0
  %154 = vmatpush.msra.mxu0 0.0
  %155 = vmatpush.msra.mxu0 0.0
  %156 = vmatpush.msra.mxu0 0.0
  %157 = vmatpush.msra.mxu0 0.0
  %158 = vmatpush.msra.mxu0 0.0
  %159 = vmatpush.msra.mxu0 0.0
  %160 = vmatpush.msra.mxu0 0.0
  %161 = vmatpush.msra.mxu0 0.0
  %162 = vmatpush.msra.mxu0 0.0
  %163 = vmatpush.msra.mxu0 %v140
  %164 = vmatmul.f32.gmra.mxu0 %v138
  %v165 = vpop.f32.mrf.mxu0
  %v166 = vadd.f32 %v66, %v165
  %167 = vdwg.mxu0
  %168 = vmatpush.msra.mxu0 0.0
  %169 = vmatpush.msra.mxu0 0.0
  %170 = vmatpush.msra.mxu0 0.0
  %171 = vmatpush.msra.mxu0 0.0
  %172 = vmatpush.msra.mxu0 0.0
  %173 = vmatpush.msra.mxu0 0.0
  %174 = vmatpush.msra.mxu0 0.0
  %175 = vmatpush.msra.mxu0 0.0
  %176 = vmatpush.msra.mxu0 0.0
  %177 = vmatpush.msra.mxu0 0.0
  %178 = vmatpush.msra.mxu0 0.0
  %179 = vmatpush.msra.mxu0 0.0
  %180 = vmatpush.msra.mxu0 0.0
  %181 = vmatpush.msra.mxu0 0.0
  %182 = vmatpush.msra.mxu0 0.0
  %183 = vmatpush.msra.mxu0 %v142
  %184 = vmatmul.f32.gmra.mxu0 %v138
  %v185 = vpop.f32.mrf.mxu0
  %v186 = vadd.f32 %v86, %v185
  %187 = vdwg.mxu0
  %188 = vmatpush.msra.mxu0 0.0
  %189 = vmatpush.msra.mxu0 0.0
  %190 = vmatpush.msra.mxu0 0.0
  %191 = vmatpush.msra.mxu0 0.0
  %192 = vmatpush.msra.mxu0 0.0
  %193 = vmatpush.msra.mxu0 0.0
  %194 = vmatpush.msra.mxu0 0.0
  %195 = vmatpush.msra.mxu0 0.0
  %196 = vmatpush.msra.mxu0 0.0
  %197 = vmatpush.msra.mxu0 0.0
  %198 = vmatpush.msra.mxu0 0.0
  %199 = vmatpush.msra.mxu0 0.0
  %200 = vmatpush.msra.mxu0 0.0
  %201 = vmatpush.msra.mxu0 0.0
  %202 = vmatpush.msra.mxu0 0.0
  %203 = vmatpush.msra.mxu0 %v144
  %204 = vmatmul.f32.gmra.mxu0 %v138
  %v205 = vpop.f32.mrf.mxu0
  %v206 = vadd.f32 %v106, %v205
  %207 = vdwg.mxu0
  %208 = vmatpush.msra.mxu0 0.0
  %209 = vmatpush.msra.mxu0 0.0
  %210 = vmatpush.msra.mxu0 0.0
  %211 = vmatpush.msra.mxu0 0.0
  %212 = vmatpush.msra.mxu0 0.0
  %213 = vmatpush.msra.mxu0 0.0
  %214 = vmatpush.msra.mxu0 0.0
  %215 = vmatpush.msra.mxu0 0.0
  %216 = vmatpush.msra.mxu0 0.0
  %217 = vmatpush.msra.mxu0 0.0
  %218 = vmatpush.msra.mxu0 0.0
  %219 = vmatpush.msra.mxu0 0.0
  %220 = vmatpush.msra.mxu0 0.0
  %221 = vmatpush.msra.mxu0 0.0
  %222 = vmatpush.msra.mxu0 0.0
  %223 = vmatpush.msra.mxu0 %v146
  %224 = vmatmul.f32.gmra.mxu0 %v138
  %v225 = vpop.f32.mrf.mxu0
  %v226 = vadd.f32 %v126, %v225
  %227 = vdwg.mxu0
  %v228 = vld [vmem:[%s4] sm:$0xf]
  %230 = vset.pattern.permute.xlu0 0
  %231 = vperm.xlu0 %230, %v228
  %v232 = vpop.permute.xlu0 %231
  %v234 = vadd.f32 %v166, %v232
  %v235 = vadd.f32 %v186, %v232
  %v236 = vadd.f32 %v206, %v232
  %v237 = vadd.f32 %v226, %v232
  %v242 = vrot.slane %v235, 4
  %v243 = vrot.slane %v237, 4
  %v244 = vsel %vm39, %v234, %v242
  %v245 = vsel %vm39, %v236, %v243
  %248 = vst [vmem:[%s5] sm:$0xff] %v244
  %249 = vst [vmem:[%s5 + $0x8] sm:$0xff] %v245
  // Predicated region
  $region22: #{residual_block_forward.21} parent=0 // pred_check
    _
  $region23: #{residual_block_forward.21} parent=0 // pred_check_branch
    %251 = sbr.rel (0) target = $region25
  $region24: #{residual_block_forward.21} parent=0 // pred_region
    _
  $region25: #{residual_block_forward.21} parent=0 // pred_fallthru
    _
  // Predicated region
  $region26: #{residual_block_forward.21} parent=0 // pred_check
    _
  $region27: #{residual_block_forward.21} parent=0 // pred_check_branch
    %253 = sbr.rel (0) target = $region29
  $region28: #{residual_block_forward.21} parent=0 // pred_region
    _
  $region29: #{residual_block_forward.21} parent=0 // pred_fallthru
    _

// kernel: residual_block_forward.23
$region0: #{residual_block_forward.23}
  #allocation0 [shape = 'u32[]', space=smem, size = 0x4, offset = 0x4, fixed_abs, tag = 'smem constant byte address 0x4 - core index']
  #allocation1 [shape = 'u32[72,128]{1,0:T(1,128)}', space=vmem, size = 0x9000, scoped, tag = 'internal scratch']
  #allocation2 [shape = 'f32[1]{0:T(128)S(6)}', space=smem, size = 0x200, scoped, tag = 'scoped memory for residual_block_forward.23']
  %s0 = inlined_call_operand.vmem [shape: f32[4,512], index: 0, kind: input, shape index: {}]
  %s1 = inlined_call_operand.vmem [shape: f32[4,36], index: 1, kind: input, shape index: {}]
  %s2 = inlined_call_operand.vmem [shape: f32[4,1], index: 2, kind: input, shape index: {}]
  %s3 = inlined_call_operand.<no memory space> [shape: f32[1], index: 3, kind: input, shape index: {}]
  %s4 = inlined_call_operand.vmem [shape: f32[4,512], index: 4, kind: input, shape index: {}]
  %s5 = inlined_call_operand.vmem [shape: f32[4,512], index: 5, kind: output, shape index: {}]
  %s6 = sld [smem:[#allocation0]]
  $region30: #{residual_block_forward.23} parent=0
    _
  %s8 = ssub.s32 1, %s6
  %s9 = scalar_select 0, %s8, %s6
  %10 = sst [smem:[#allocation2]] %s3
  // Predicated region
  $region2: #{residual_block_forward.23} parent=0 // pred_check
    _
  $region3: #{residual_block_forward.23} parent=0 // pred_check_branch
    %12 = sbr.rel (0) target = $region5
  $region4: #{residual_block_forward.23} parent=0 // pred_region
    _
  $region5: #{residual_block_forward.23} parent=0 // pred_fallthru
    _
  // Predicated region
  $region6: #{residual_block_forward.23} parent=0 // pred_check
    _
  $region7: #{residual_block_forward.23} parent=0 // pred_check_branch
    %14 = sbr.rel (0) target = $region9
  $region8: #{residual_block_forward.23} parent=0 // pred_region
    _
  $region9: #{residual_block_forward.23} parent=0 // pred_fallthru
    _
  // Predicated region
  $region10: #{residual_block_forward.23} parent=0 // pred_check
    _
  $region11: #{residual_block_forward.23} parent=0 // pred_check_branch
    %16 = sbr.rel (0) target = $region13
  $region12: #{residual_block_forward.23} parent=0 // pred_region
    _
  $region13: #{residual_block_forward.23} parent=0 // pred_fallthru
    _
  // Predicated region
  $region14: #{residual_block_forward.23} parent=0 // pred_check
    _
  $region15: #{residual_block_forward.23} parent=0 // pred_check_branch
    %18 = sbr.rel (0) target = $region17
  $region16: #{residual_block_forward.23} parent=0 // pred_region
    _
  $region17: #{residual_block_forward.23} parent=0 // pred_fallthru
    _
  // Predicated region
  $region18: #{residual_block_forward.23} parent=0 // pred_check
    _
  $region19: #{residual_block_forward.23} parent=0 // pred_check_branch
    %20 = sbr.rel (0) target = $region21
  $region20: #{residual_block_forward.23} parent=0 // pred_region
    _
  $region21: #{residual_block_forward.23} parent=0 // pred_fallthru
    _
  %v21 = vld [vmem:[%s0] sm:$0xff]
  %v22 = vld [vmem:[%s0 + $0x8] sm:$0xff]
  %v23 = vlaneseq
  %v24 = vand.u32 %v23, 127
  %v25 = vadd.s32 %v24, 128
  %v26 = vadd.s32 %v24, 256
  %v27 = vadd.s32 %v24, 384
  %vm28 = vcmp.lt.s32.totalorder %v24, 0
  %v29 = vsub.s32 0, %v24
  %v30 = vsel %vm28, %v29, %v24
  %v31 = vshrl.u32 %v30, 8
  %v32 = vand.u32 %v30, 255
  %v33 = vsub.s32 0, %v32
  %v34 = vsel %vm28, %v33, %v32
  %vm35 = vcmp.lt.s32.totalorder %v25, 0
  %v36 = vsub.s32 0, %v25
  %v37 = vsel %vm35, %v36, %v25
  %v38 = vshrl.u32 %v37, 8
  %v39 = vand.u32 %v37, 255
  %v40 = vsub.s32 0, %v39
  %v41 = vsel %vm35, %v40, %v39
  %vm42 = vcmp.lt.s32.totalorder %v26, 0
  %v43 = vsub.s32 0, %v26
  %v44 = vsel %vm42, %v43, %v26
  %v45 = vshrl.u32 %v44, 8
  %v46 = vand.u32 %v44, 255
  %v47 = vsub.s32 0, %v46
  %v48 = vsel %vm42, %v47, %v46
  %vm49 = vcmp.lt.s32.totalorder %v27, 0
  %v50 = vsub.s32 0, %v27
  %v51 = vsel %vm49, %v50, %v27
  %v52 = vshrl.u32 %v51, 8
  %v53 = vand.u32 %v51, 255
  %v54 = vsub.s32 0, %v53
  %v55 = vsel %vm49, %v54, %v53
  %vm56 = vcmp.ne.s32.totalorder %v34, 0
  %vm57 = vcmp.ne.s32.totalorder %v41, 0
  %vm58 = vcmp.ne.s32.totalorder %v48, 0
  %vm59 = vcmp.ne.s32.totalorder %v55, 0
  %vm60 = vcmp.lt.s32.totalorder %v34, 0
  %vm61 = vcmp.lt.s32.totalorder %v41, 0
  %vm62 = vcmp.lt.s32.totalorder %v48, 0
  %vm63 = vcmp.lt.s32.totalorder %v55, 0
  %vm64 = vmand %vm60, %vm56
  %vm65 = vmand %vm61, %vm57
  %vm66 = vmand %vm62, %vm58
  %vm67 = vmand %vm63, %vm59
  %v68 = vadd.s32 %v34, 256
  %v69 = vadd.s32 %v41, 256
  %v70 = vadd.s32 %v48, 256
  %v71 = vadd.s32 %v55, 256
  %v72 = vsel %vm64, %v68, %v34
  %v73 = vsel %vm65, %v69, %v41
  %v74 = vsel %vm66, %v70, %v48
  %v75 = vsel %vm67, %v71, %v55
  %vm76 = vcmp.lt.s32.totalorder %v24, 0
  %v77 = vsub.s32 0, %v24
  %v78 = vsel %vm76, %v77, %v24
  %v79 = vshrl.u32 %v78, 4
  %v80 = vand.u32 %v78, 15
  %v81 = vsub.s32 0, %v80
  %v82 = vsel %vm76, %v81, %v80
  %vm83 = vcmp.lt.s32.totalorder %v25, 0
  %v84 = vsub.s32 0, %v25
  %v85 = vsel %vm83, %v84, %v25
  %v86 = vshrl.u32 %v85, 4
  %v87 = vand.u32 %v85, 15
  %v88 = vsub.s32 0, %v87
  %v89 = vsel %vm83, %v88, %v87
  %vm90 = vcmp.lt.s32.totalorder %v26, 0
  %v91 = vsub.s32 0, %v26
  %v92 = vsel %vm90, %v91, %v26
  %v93 = vshrl.u32 %v92, 4
  %v94 = vand.u32 %v92, 15
  %v95 = vsub.s32 0, %v94
  %v96 = vsel %vm90, %v95, %v94
  %vm97 = vcmp.lt.s32.totalorder %v27, 0
  %v98 = vsub.s32 0, %v27
  %v99 = vsel %vm97, %v98, %v27
  %v100 = vshrl.u32 %v99, 4
  %v101 = vand.u32 %v99, 15
  %v102 = vsub.s32 0, %v101
  %v103 = vsel %vm97, %v102, %v101
  %vm104 = vcmp.ne.s32.totalorder %v82, 0
  %vm105 = vcmp.ne.s32.totalorder %v89, 0
  %vm106 = vcmp.ne.s32.totalorder %v96, 0
  %vm107 = vcmp.ne.s32.totalorder %v103, 0
  %vm108 = vcmp.lt.s32.totalorder %v82, 0
  %vm109 = vcmp.lt.s32.totalorder %v89, 0
  %vm110 = vcmp.lt.s32.totalorder %v96, 0
  %vm111 = vcmp.lt.s32.totalorder %v103, 0
  %vm112 = vmand %vm108, %vm104
  %vm113 = vmand %vm109, %vm105
  %vm114 = vmand %vm110, %vm106
  %vm115 = vmand %vm111, %vm107
  %v116 = vadd.s32 %v82, 16
  %v117 = vadd.s32 %v89, 16
  %v118 = vadd.s32 %v96, 16
  %v119 = vadd.s32 %v103, 16
  %v120 = vsel %vm112, %v116, %v82
  %v121 = vsel %vm113, %v117, %v89
  %v122 = vsel %vm114, %v118, %v96
  %v123 = vsel %vm115, %v119, %v103
  %vm124 = vcmp.ge.s32.totalorder %v72, 16
  %vm125 = vcmp.ge.s32.totalorder %v73, 16
  %vm126 = vcmp.ge.s32.totalorder %v74, 16
  %vm127 = vcmp.ge.s32.totalorder %v75, 16
  %vm128 = vcmp.lt.s32.totalorder %v72, 240
  %vm129 = vcmp.lt.s32.totalorder %v73, 240
  %vm130 = vcmp.lt.s32.totalorder %v74, 240
  %vm131 = vcmp.lt.s32.totalorder %v75, 240
  %vm132 = vcmp.ne.s32.totalorder %v120, 0
  %vm133 = vcmp.ne.s32.totalorder %v121, 0
  %vm134 = vcmp.ne.s32.totalorder %v122, 0
  %vm135 = vcmp.ne.s32.totalorder %v123, 0
  %vm136 = vcmp.ne.s32.totalorder %v120, 15
  %vm137 = vcmp.ne.s32.totalorder %v121, 15
  %vm138 = vcmp.ne.s32.totalorder %v122, 15
  %vm139 = vcmp.ne.s32.totalorder %v123, 15
  %v140 = vld [vmem:[%s1] sm:$0xf]
  %v141 = vld [vmem:[%s2] sm:$0xf]
  %144 = vst [vmem:[#allocation1] ss:$2 sm:$0xff] %v21
  %s145 = scalar_lea.vmem [#allocation1], 16
  %146 = vst [vmem:[%s145] ss:$2 sm:$0xff] %v22
  %v147 = vld.sshfl [vmem:[#allocation1] sm:$0xff pattern:$0x75316420]
  %v148 = vld.sshfl [vmem:[#allocation1 + $0x8] sm:$0xff pattern:$0x75316420]
  %v149 = vld.sshfl [vmem:[#allocation1 + $0x10] sm:$0xff pattern:$0x75316420]
  %v150 = vld.sshfl [vmem:[#allocation1 + $0x18] sm:$0xff pattern:$0x75316420]
  %155 = vrot.lane.b32.xlu0 %v147, 17
  %v156 = vpop.permute.xlu0 %155
  %157 = vrot.lane.b32.xlu0 %v148, 17
  %v158 = vpop.permute.xlu0 %157
  %159 = vrot.lane.b32.xlu0 %v149, 17
  %v160 = vpop.permute.xlu0 %159
  %161 = vrot.lane.b32.xlu0 %v150, 17
  %v162 = vpop.permute.xlu0 %161
  %vm163 = vcmp.lt.s32.totalorder %v24, 17
  %v164 = vsel %vm163, %v160, %v162
  %v165 = vsel %vm163, %v158, %v160
  %v166 = vsel %vm163, %v156, %v158
  %v167 = vsel %vm163, %v162, %v156
  %vm168 = vmand %vm124, %vm132
  %vm169 = vmand %vm125, %vm133
  %vm170 = vmand %vm126, %vm134
  %vm171 = vmand %vm127, %vm135
  %v172 = vsel %vm168, 1, 0
  %v173 = vsel %vm169, 1, 0
  %v174 = vsel %vm170, 1, 0
  %v175 = vsel %vm171, 1, 0
  %vm176 = vcmp.eq.s32.totalorder %v172, 1
  %vm177 = vcmp.eq.s32.totalorder %v173, 1
  %vm178 = vcmp.eq.s32.totalorder %v174, 1
  %vm179 = vcmp.eq.s32.totalorder %v175, 1
  %v180 = vsel %vm176, %v167, 0.0
  %v181 = vsel %vm177, %v166, 0.0
  %v182 = vsel %vm178, %v165, 0.0
  %v183 = vsel %vm179, %v164, 0.0
  %184 = vst [vmem:[#allocation1] ss:$2 sm:$0xff] %v21
  %s185 = scalar_lea.vmem [#allocation1], 16
  %186 = vst [vmem:[%s185] ss:$2 sm:$0xff] %v22
  %v187 = vld.sshfl [vmem:[#allocation1] sm:$0xff pattern:$0x75316420]
  %v188 = vld.sshfl [vmem:[#allocation1 + $0x8] sm:$0xff pattern:$0x75316420]
  %v189 = vld.sshfl [vmem:[#allocation1 + $0x10] sm:$0xff pattern:$0x75316420]
  %v190 = vld.sshfl [vmem:[#allocation1 + $0x18] sm:$0xff pattern:$0x75316420]
  %195 = vrot.lane.b32.xlu0 %v187, 16
  %v196 = vpop.permute.xlu0 %195
  %197 = vrot.lane.b32.xlu0 %v188, 16
  %v198 = vpop.permute.xlu0 %197
  %199 = vrot.lane.b32.xlu0 %v189, 16
  %v200 = vpop.permute.xlu0 %199
  %201 = vrot.lane.b32.xlu0 %v190, 16
  %v202 = vpop.permute.xlu0 %201
  %vm203 = vcmp.lt.s32.totalorder %v24, 16
  %v204 = vsel %vm203, %v200, %v202
  %v205 = vsel %vm203, %v198, %v200
  %v206 = vsel %vm203, %v196, %v198
  %v207 = vsel %vm203, %v202, %v196
  %v208 = vsel %vm124, 1, 0
  %v209 = vsel %vm125, 1, 0
  %v210 = vsel %vm126, 1, 0
  %v211 = vsel %vm127, 1, 0
  %vm212 = vcmp.eq.s32.totalorder %v208, 1
  %vm213 = vcmp.eq.s32.totalorder %v209, 1
  %vm214 = vcmp.eq.s32.totalorder %v210, 1
  %vm215 = vcmp.eq.s32.totalorder %v211, 1
  %v216 = vsel %vm212, %v207, 0.0
  %v217 = vsel %vm213, %v206, 0.0
  %v218 = vsel %vm214, %v205, 0.0
  %v219 = vsel %vm215, %v204, 0.0
  %220 = vst [vmem:[#allocation1] ss:$2 sm:$0xff] %v21
  %s221 = scalar_lea.vmem [#allocation1], 16
  %222 = vst [vmem:[%s221] ss:$2 sm:$0xff] %v22
  %v223 = vld.sshfl [vmem:[#allocation1] sm:$0xff pattern:$0x75316420]
  %v224 = vld.sshfl [vmem:[#allocation1 + $0x8] sm:$0xff pattern:$0x75316420]
  %v225 = vld.sshfl [vmem:[#allocation1 + $0x10] sm:$0xff pattern:$0x75316420]
  %v226 = vld.sshfl [vmem:[#allocation1 + $0x18] sm:$0xff pattern:$0x75316420]
  %231 = vrot.lane.b32.xlu0 %v223, 15
  %v232 = vpop.permute.xlu0 %231
  %233 = vrot.lane.b32.xlu0 %v224, 15
  %v234 = vpop.permute.xlu0 %233
  %235 = vrot.lane.b32.xlu0 %v225, 15
  %v236 = vpop.permute.xlu0 %235
  %237 = vrot.lane.b32.xlu0 %v226, 15
  %v238 = vpop.permute.xlu0 %237
  %vm239 = vcmp.lt.s32.totalorder %v24, 15
  %v240 = vsel %vm239, %v236, %v238
  %v241 = vsel %vm239, %v234, %v236
  %v242 = vsel %vm239, %v232, %v234
  %v243 = vsel %vm239, %v238, %v232
  %vm244 = vmand %vm124, %vm136
  %vm245 = vmand %vm125, %vm137
  %vm246 = vmand %vm126, %vm138
  %vm247 = vmand %vm127, %vm139
  %v248 = vsel %vm244, 1, 0
  %v249 = vsel %vm245, 1, 0
  %v250 = vsel %vm246, 1, 0
  %v251 = vsel %vm247, 1, 0
  %vm252 = vcmp.eq.s32.totalorder %v248, 1
  %vm253 = vcmp.eq.s32.totalorder %v249, 1
  %vm254 = vcmp.eq.s32.totalorder %v250, 1
  %vm255 = vcmp.eq.s32.totalorder %v251, 1
  %v256 = vsel %vm252, %v243, 0.0
  %v257 = vsel %vm253, %v242, 0.0
  %v258 = vsel %vm254, %v241, 0.0
  %v259 = vsel %vm255, %v240, 0.0
  %260 = vst [vmem:[#allocation1] ss:$2 sm:$0xff] %v21
  %s261 = scalar_lea.vmem [#allocation1], 16
  %262 = vst [vmem:[%s261] ss:$2 sm:$0xff] %v22
  %v263 = vld.sshfl [vmem:[#allocation1] sm:$0xff pattern:$0x75316420]
  %v264 = vld.sshfl [vmem:[#allocation1 + $0x8] sm:$0xff pattern:$0x75316420]
  %v265 = vld.sshfl [vmem:[#allocation1 + $0x10] sm:$0xff pattern:$0x75316420]
  %v266 = vld.sshfl [vmem:[#allocation1 + $0x18] sm:$0xff pattern:$0x75316420]
  %271 = vrot.lane.b32.xlu0 %v263, 1
  %v272 = vpop.permute.xlu0 %271
  %273 = vrot.lane.b32.xlu0 %v264, 1
  %v274 = vpop.permute.xlu0 %273
  %275 = vrot.lane.b32.xlu0 %v265, 1
  %v276 = vpop.permute.xlu0 %275
  %277 = vrot.lane.b32.xlu0 %v266, 1
  %v278 = vpop.permute.xlu0 %277
  %vm279 = vcmp.lt.s32.totalorder %v24, 1
  %v280 = vsel %vm279, %v276, %v278
  %v281 = vsel %vm279, %v274, %v276
  %v282 = vsel %vm279, %v272, %v274
  %v283 = vsel %vm279, %v278, %v272
  %v284 = vsel %vm132, 1, 0
  %v285 = vsel %vm133, 1, 0
  %v286 = vsel %vm134, 1, 0
  %v287 = vsel %vm135, 1, 0
  %vm288 = vcmp.eq.s32.totalorder %v284, 1
  %vm289 = vcmp.eq.s32.totalorder %v285, 1
  %vm290 = vcmp.eq.s32.totalorder %v286, 1
  %vm291 = vcmp.eq.s32.totalorder %v287, 1
  %v292 = vsel %vm288, %v283, 0.0
  %v293 = vsel %vm289, %v282, 0.0
  %v294 = vsel %vm290, %v281, 0.0
  %v295 = vsel %vm291, %v280, 0.0
  %296 = vst [vmem:[#allocation1] ss:$2 sm:$0xff] %v21
  %s297 = scalar_lea.vmem [#allocation1], 16
  %298 = vst [vmem:[%s297] ss:$2 sm:$0xff] %v22
  %v299 = vld.sshfl [vmem:[#allocation1] sm:$0xff pattern:$0x75316420]
  %v300 = vld.sshfl [vmem:[#allocation1 + $0x8] sm:$0xff pattern:$0x75316420]
  %v301 = vld.sshfl [vmem:[#allocation1 + $0x10] sm:$0xff pattern:$0x75316420]
  %v302 = vld.sshfl [vmem:[#allocation1 + $0x18] sm:$0xff pattern:$0x75316420]
  %307 = vrot.lane.b32.xlu0 %v299, 127
  %v308 = vpop.permute.xlu0 %307
  %309 = vrot.lane.b32.xlu0 %v300, 127
  %v310 = vpop.permute.xlu0 %309
  %311 = vrot.lane.b32.xlu0 %v301, 127
  %v312 = vpop.permute.xlu0 %311
  %313 = vrot.lane.b32.xlu0 %v302, 127
  %v314 = vpop.permute.xlu0 %313
  %vm315 = vcmp.lt.s32.totalorder %v24, 127
  %v316 = vsel %vm315, %v312, %v314
  %v317 = vsel %vm315, %v310, %v312
  %v318 = vsel %vm315, %v308, %v310
  %v319 = vsel %vm315, %v314, %v308
  %v320 = vsel %vm136, 1, 0
  %v321 = vsel %vm137, 1, 0
  %v322 = vsel %vm138, 1, 0
  %v323 = vsel %vm139, 1, 0
  %vm324 = vcmp.eq.s32.totalorder %v320, 1
  %vm325 = vcmp.eq.s32.totalorder %v321, 1
  %vm326 = vcmp.eq.s32.totalorder %v322, 1
  %vm327 = vcmp.eq.s32.totalorder %v323, 1
  %v328 = vsel %vm324, %v318, 0.0
  %v329 = vsel %vm325, %v317, 0.0
  %v330 = vsel %vm326, %v316, 0.0
  %v331 = vsel %vm327, %v319, 0.0
  %332 = vst [vmem:[#allocation1] ss:$2 sm:$0xff] %v21
  %s333 = scalar_lea.vmem [#allocation1], 16
  %334 = vst [vmem:[%s333] ss:$2 sm:$0xff] %v22
  %v335 = vld.sshfl [vmem:[#allocation1] sm:$0xff pattern:$0x75316420]
  %v336 = vld.sshfl [vmem:[#allocation1 + $0x8] sm:$0xff pattern:$0x75316420]
  %v337 = vld.sshfl [vmem:[#allocation1 + $0x10] sm:$0xff pattern:$0x75316420]
  %v338 = vld.sshfl [vmem:[#allocation1 + $0x18] sm:$0xff pattern:$0x75316420]
  %343 = vrot.lane.b32.xlu0 %v335, 113
  %v344 = vpop.permute.xlu0 %343
  %345 = vrot.lane.b32.xlu0 %v336, 113
  %v346 = vpop.permute.xlu0 %345
  %347 = vrot.lane.b32.xlu0 %v337, 113
  %v348 = vpop.permute.xlu0 %347
  %349 = vrot.lane.b32.xlu0 %v338, 113
  %v350 = vpop.permute.xlu0 %349
  %vm351 = vcmp.lt.s32.totalorder %v24, 113
  %v352 = vsel %vm351, %v348, %v350
  %v353 = vsel %vm351, %v346, %v348
  %v354 = vsel %vm351, %v344, %v346
  %v355 = vsel %vm351, %v350, %v344
  %vm356 = vmand %vm128, %vm132
  %vm357 = vmand %vm129, %vm133
  %vm358 = vmand %vm130, %vm134
  %vm359 = vmand %vm131, %vm135
  %v360 = vsel %vm356, 1, 0
  %v361 = vsel %vm357, 1, 0
  %v362 = vsel %vm358, 1, 0
  %v363 = vsel %vm359, 1, 0
  %vm364 = vcmp.eq.s32.totalorder %v360, 1
  %vm365 = vcmp.eq.s32.totalorder %v361, 1
  %vm366 = vcmp.eq.s32.totalorder %v362, 1
  %vm367 = vcmp.eq.s32.totalorder %v363, 1
  %v368 = vsel %vm364, %v354, 0.0
  %v369 = vsel %vm365, %v353, 0.0
  %v370 = vsel %vm366, %v352, 0.0
  %v371 = vsel %vm367, %v355, 0.0
  %372 = vst [vmem:[#allocation1] ss:$2 sm:$0xff] %v21
  %s373 = scalar_lea.vmem [#allocation1], 16
  %374 = vst [vmem:[%s373] ss:$2 sm:$0xff] %v22
  %v375 = vld.sshfl [vmem:[#allocation1] sm:$0xff pattern:$0x75316420]
  %v376 = vld.sshfl [vmem:[#allocation1 + $0x8] sm:$0xff pattern:$0x75316420]
  %v377 = vld.sshfl [vmem:[#allocation1 + $0x10] sm:$0xff pattern:$0x75316420]
  %v378 = vld.sshfl [vmem:[#allocation1 + $0x18] sm:$0xff pattern:$0x75316420]
  %383 = vrot.lane.b32.xlu0 %v375, 112
  %v384 = vpop.permute.xlu0 %383
  %385 = vrot.lane.b32.xlu0 %v376, 112
  %v386 = vpop.permute.xlu0 %385
  %387 = vrot.lane.b32.xlu0 %v377, 112
  %v388 = vpop.permute.xlu0 %387
  %389 = vrot.lane.b32.xlu0 %v378, 112
  %v390 = vpop.permute.xlu0 %389
  %vm391 = vcmp.lt.s32.totalorder %v24, 112
  %v392 = vsel %vm391, %v388, %v390
  %v393 = vsel %vm391, %v386, %v388
  %v394 = vsel %vm391, %v384, %v386
  %v395 = vsel %vm391, %v390, %v384
  %v396 = vsel %vm128, 1, 0
  %v397 = vsel %vm129, 1, 0
  %v398 = vsel %vm130, 1, 0
  %v399 = vsel %vm131, 1, 0
  %vm400 = vcmp.eq.s32.totalorder %v396, 1
  %vm401 = vcmp.eq.s32.totalorder %v397, 1
  %vm402 = vcmp.eq.s32.totalorder %v398, 1
  %vm403 = vcmp.eq.s32.totalorder %v399, 1
  %v404 = vsel %vm400, %v394, 0.0
  %v405 = vsel %vm401, %v393, 0.0
  %v406 = vsel %vm402, %v392, 0.0
  %v407 = vsel %vm403, %v395, 0.0
  %408 = vst [vmem:[#allocation1] ss:$2 sm:$0xff] %v21
  %s409 = scalar_lea.vmem [#allocation1], 16
  %410 = vst [vmem:[%s409] ss:$2 sm:$0xff] %v22
  %v411 = vld.sshfl [vmem:[#allocation1] sm:$0xff pattern:$0x75316420]
  %v412 = vld.sshfl [vmem:[#allocation1 + $0x8] sm:$0xff pattern:$0x75316420]
  %v413 = vld.sshfl [vmem:[#allocation1 + $0x10] sm:$0xff pattern:$0x75316420]
  %v414 = vld.sshfl [vmem:[#allocation1 + $0x18] sm:$0xff pattern:$0x75316420]
  %419 = vrot.lane.b32.xlu0 %v411, 111
  %v420 = vpop.permute.xlu0 %419
  %421 = vrot.lane.b32.xlu0 %v412, 111
  %v422 = vpop.permute.xlu0 %421
  %423 = vrot.lane.b32.xlu0 %v413, 111
  %v424 = vpop.permute.xlu0 %423
  %425 = vrot.lane.b32.xlu0 %v414, 111
  %v426 = vpop.permute.xlu0 %425
  %vm427 = vcmp.lt.s32.totalorder %v24, 111
  %v428 = vsel %vm427, %v424, %v426
  %v429 = vsel %vm427, %v422, %v424
  %v430 = vsel %vm427, %v420, %v422
  %v431 = vsel %vm427, %v426, %v420
  %vm432 = vmand %vm128, %vm136
  %vm433 = vmand %vm129, %vm137
  %vm434 = vmand %vm130, %vm138
  %vm435 = vmand %vm131, %vm139
  %v436 = vsel %vm432, 1, 0
  %v437 = vsel %vm433, 1, 0
  %v438 = vsel %vm434, 1, 0
  %v439 = vsel %vm435, 1, 0
  %vm440 = vcmp.eq.s32.totalorder %v436, 1
  %vm441 = vcmp.eq.s32.totalorder %v437, 1
  %vm442 = vcmp.eq.s32.totalorder %v438, 1
  %vm443 = vcmp.eq.s32.totalorder %v439, 1
  %v444 = vsel %vm440, %v430, 0.0
  %v445 = vsel %vm441, %v429, 0.0
  %v446 = vsel %vm442, %v428, 0.0
  %v447 = vsel %vm443, %v431, 0.0
  %v452 = vrot.slane %v216, 4
  %v453 = vrot.slane %v217, 4
  %v454 = vrot.slane %v218, 4
  %v455 = vrot.slane %v219, 4
  %v464 = vrot.slane %v292, 4
  %v465 = vrot.slane %v293, 4
  %v466 = vrot.slane %v294, 4
  %v467 = vrot.slane %v295, 4
  %472 = vst [vmem:[#allocation1] ss:$2 sm:$0xff] %v21
  %s473 = scalar_lea.vmem [#allocation1], 16
  %474 = vst [vmem:[%s473] ss:$2 sm:$0xff] %v22
  %v475 = vld.sshfl [vmem:[#allocation1] sm:$0xff pattern:$0x75316420]
  %v476 = vld.sshfl [vmem:[#allocation1 + $0x8] sm:$0xff pattern:$0x75316420]
  %v477 = vld.sshfl [vmem:[#allocation1 + $0x10] sm:$0xff pattern:$0x75316420]
  %v478 = vld.sshfl [vmem:[#allocation1 + $0x18] sm:$0xff pattern:$0x75316420]
  %v487 = vrot.slane %v328, 4
  %v488 = vrot.slane %v329, 4
  %v489 = vrot.slane %v330, 4
  %v490 = vrot.slane %v331, 4
  %v499 = vrot.slane %v404, 4
  %v500 = vrot.slane %v405, 4
  %v501 = vrot.slane %v406, 4
  %v502 = vrot.slane %v407, 4
  %vm507 = vcmask 1043456
  %v508 = vsel %vm507, %v180, %v452
  %v509 = vsel %vm507, %v181, %v453
  %v510 = vsel %vm507, %v182, %v454
  %v511 = vsel %vm507, %v183, %v455
  %v512 = vsel %vm507, %v256, %v464
  %v513 = vsel %vm507, %v257, %v465
  %v514 = vsel %vm507, %v258, %v466
  %v515 = vsel %vm507, %v259, %v467
  %v516 = vsel %vm507, %v475, %v487
  %v517 = vsel %vm507, %v476, %v488
  %v518 = vsel %vm507, %v477, %v489
  %v519 = vsel %vm507, %v478, %v490
  %v520 = vsel %vm507, %v368, %v499
  %v521 = vsel %vm507, %v369, %v500
  %v522 = vsel %vm507, %v370, %v501
  %v523 = vsel %vm507, %v371, %v502
  %525 = vset.pattern.permute.xlu0 0
  %526 = vperm.xlu0 %525, %v141
  %v527 = vpop.permute.xlu0 %526
  %vm529 = vcmask 293888
  %v531 = vsel %vm529, %v140, 0
  %v534 = vsel %vm507, %v444, 0
  %v537 = vsel %vm507, %v445, 0
  %v540 = vsel %vm507, %v446, 0
  %v543 = vsel %vm507, %v447, 0
  %545 = vmatpush.msra.mxu0 0.0
  %546 = vmatpush.msra.mxu0 0.0
  %547 = vmatpush.msra.mxu0 0.0
  %548 = vmatpush.msra.mxu0 0.0
  %549 = vmatpush.msra.mxu0 0.0
  %550 = vmatpush.msra.mxu0 0.0
  %551 = vmatpush.msra.mxu0 0.0
  %552 = vmatpush.msra.mxu0 0.0
  %553 = vmatpush.msra.mxu0 0.0
  %554 = vmatpush.msra.mxu0 0.0
  %555 = vmatpush.msra.mxu0 0.0
  %556 = vmatpush.msra.mxu0 %v534
  %557 = vmatpush.msra.mxu0 %v520
  %558 = vmatpush.msra.mxu0 %v516
  %559 = vmatpush.msra.mxu0 %v512
  %560 = vmatpush.msra.mxu0 %v508
  %561 = vmatmul.f32.gmra.mxu0 %v531
  %v562 = vpop.f32.mrf.mxu0
  %v563 = vadd.f32 %v527, %v562
  %564 = vdwg.mxu0
  %565 = vmatpush.msra.mxu0 0.0
  %566 = vmatpush.msra.mxu0 0.0
  %567 = vmatpush.msra.mxu0 0.0
  %568 = vmatpush.msra.mxu0 0.0
  %569 = vmatpush.msra.mxu0 0.0
  %570 = vmatpush.msra.mxu0 0.0
  %571 = vmatpush.msra.mxu0 0.0
  %572 = vmatpush.msra.mxu0 0.0
  %573 = vmatpush.msra.mxu0 0.0
  %574 = vmatpush.msra.mxu0 0.0
  %575 = vmatpush.msra.mxu0 0.0
  %576 = vmatpush.msra.mxu0 %v537
  %577 = vmatpush.msra.mxu0 %v521
  %578 = vmatpush.msra.mxu0 %v517
  %579 = vmatpush.msra.mxu0 %v513
  %580 = vmatpush.msra.mxu0 %v509
  %581 = vmatmul.f32.gmra.mxu0 %v531
  %v582 = vpop.f32.mrf.mxu0
  %v583 = vadd.f32 %v527, %v582
  %584 = vdwg.mxu0
  %585 = vmatpush.msra.mxu0 0.0
  %586 = vmatpush.msra.mxu0 0.0
  %587 = vmatpush.msra.mxu0 0.0
  %588 = vmatpush.msra.mxu0 0.0
  %589 = vmatpush.msra.mxu0 0.0
  %590 = vmatpush.msra.mxu0 0.0
  %591 = vmatpush.msra.mxu0 0.0
  %592 = vmatpush.msra.mxu0 0.0
  %593 = vmatpush.msra.mxu0 0.0
  %594 = vmatpush.msra.mxu0 0.0
  %595 = vmatpush.msra.mxu0 0.0
  %596 = vmatpush.msra.mxu0 %v540
  %597 = vmatpush.msra.mxu0 %v522
  %598 = vmatpush.msra.mxu0 %v518
  %599 = vmatpush.msra.mxu0 %v514
  %600 = vmatpush.msra.mxu0 %v510
  %601 = vmatmul.f32.gmra.mxu0 %v531
  %v602 = vpop.f32.mrf.mxu0
  %v603 = vadd.f32 %v527, %v602
  %604 = vdwg.mxu0
  %605 = vmatpush.msra.mxu0 0.0
  %606 = vmatpush.msra.mxu0 0.0
  %607 = vmatpush.msra.mxu0 0.0
  %608 = vmatpush.msra.mxu0 0.0
  %609 = vmatpush.msra.mxu0 0.0
  %610 = vmatpush.msra.mxu0 0.0
  %611 = vmatpush.msra.mxu0 0.0
  %612 = vmatpush.msra.mxu0 0.0
  %613 = vmatpush.msra.mxu0 0.0
  %614 = vmatpush.msra.mxu0 0.0
  %615 = vmatpush.msra.mxu0 0.0
  %616 = vmatpush.msra.mxu0 %v543
  %617 = vmatpush.msra.mxu0 %v523
  %618 = vmatpush.msra.mxu0 %v519
  %619 = vmatpush.msra.mxu0 %v515
  %620 = vmatpush.msra.mxu0 %v511
  %621 = vmatmul.f32.gmra.mxu0 %v531
  %v622 = vpop.f32.mrf.mxu0
  %v623 = vadd.f32 %v527, %v622
  %624 = vdwg.mxu0
  %v625 = vld [vmem:[%s4] sm:$0xff]
  %v626 = vld [vmem:[%s4 + $0x8] sm:$0xff]
  %629 = vst [vmem:[#allocation1] ss:$2 sm:$0xff] %v625
  %s630 = scalar_lea.vmem [#allocation1], 16
  %631 = vst [vmem:[%s630] ss:$2 sm:$0xff] %v626
  %v632 = vld.sshfl [vmem:[#allocation1] sm:$0xff pattern:$0x75316420]
  %v633 = vld.sshfl [vmem:[#allocation1 + $0x8] sm:$0xff pattern:$0x75316420]
  %v634 = vld.sshfl [vmem:[#allocation1 + $0x10] sm:$0xff pattern:$0x75316420]
  %v635 = vld.sshfl [vmem:[#allocation1 + $0x18] sm:$0xff pattern:$0x75316420]
  %v640 = vadd.f32 %v563, %v632
  %v641 = vadd.f32 %v583, %v633
  %v642 = vadd.f32 %v603, %v634
  %v643 = vadd.f32 %v623, %v635
  %v648 = vrot.slane %v641, 4
  %v649 = vrot.slane %v643, 4
  %v650 = vsel %vm507, %v640, %v648
  %v651 = vsel %vm507, %v642, %v649
  %654 = vst [vmem:[%s5] sm:$0xff] %v650
  %655 = vst [vmem:[%s5 + $0x8] sm:$0xff] %v651
  // Predicated region
  $region22: #{residual_block_forward.23} parent=0 // pred_check
    _
  $region23: #{residual_block_forward.23} parent=0 // pred_check_branch
    %657 = sbr.rel (0) target = $region25
  $region24: #{residual_block_forward.23} parent=0 // pred_region
    _
  $region25: #{residual_block_forward.23} parent=0 // pred_fallthru
    _
  // Predicated region
  $region26: #{residual_block_forward.23} parent=0 // pred_check
    _
  $region27: #{residual_block_forward.23} parent=0 // pred_check_branch
    %659 = sbr.rel (0) target = $region29
  $region28: #{residual_block_forward.23} parent=0 // pred_region
    _
  $region29: #{residual_block_forward.23} parent=0 // pred_fallthru
    _

</llo_original>
